<compile_context>
chip_gen: v7x
topology: tpu7x:2x2x1
jax: 0.10.0
libtpu: 0.0.40
codegen_flags: <defaults>
</compile_context>

<pallas_src>
import functools

import jax
import jax.numpy as jnp
from jax import lax
from jax.experimental import pallas as pl
from jax.experimental.pallas import tpu as pltpu


_VMEM_LIMIT_BYTES = 48 * 1024 * 1024   # > v5e 16 MiB default scoped, < v7x 64 MiB physical
_GRU_VMEM_BUDGET = 32 * 1024 * 1024    # tile-selection budget (leaves compiler headroom)


# ----------------------------------------------------------------------------
# Tile-size helpers (cdiv grids + masking; no divisor searches).
# ----------------------------------------------------------------------------
def _gru_vmem_bytes(B, t, D, H):
    """Rough VMEM working-set estimate for one GRU time-tile."""
    G = 3 * H
    x_io = 2 * B * t * D * 4           # input tile, double-buffered
    o_io = 2 * B * t * H * 4           # output tile, double-buffered
    gi = B * t * G * 4                 # per-tile input-projection scratch
    w = 2 * (D * G + H * G) * 2        # bf16 weights (default double-buffered)
    misc = 4 * G * 4 + B * H * 4 + (256 << 10)
    return x_io + o_io + gi + w + misc


def _pick_time_tile(L, B, D, H, cap):
    """Largest time tile (multiple of 8, <= cap) fitting the VMEM budget."""
    if L <= cap:
        return L                       # full extent -> always a legal block dim
    t = max(8, (cap // 8) * 8)
    while t > 8 and _gru_vmem_bytes(B, t, D, H) > _GRU_VMEM_BUDGET:
        t -= 8
    return t


# ----------------------------------------------------------------------------
# Row-tiled matmul + bias kernel (bf16 MXU operands, f32 accumulate).
# Used for the postnet.  Fixed MXU-height row tile, cdiv grid, masked tail.
# ----------------------------------------------------------------------------
def _matmul_bias_kernel(x_ref, w_ref, b_ref, o_ref):
    o_ref[...] = (jnp.dot(x_ref[...].astype(jnp.bfloat16), w_ref[...],
                          preferred_element_type=jnp.float32)
                  + b_ref[...]).astype(o_ref.dtype)


def matmul_bias(x2d, w, b, *, row_tile=256):
    """x2d: (N, D) f32, w: (D, M), b: (M,) -> (N, M) f32."""
    N, D = x2d.shape
    M = w.shape[1]
    # Fixed 256-row tile (128 would match the v5e MXU height); partial tail
    # blocks are padded/masked by Pallas.
    rt = N if N <= row_tile else row_tile
    return pl.pallas_call(
        _matmul_bias_kernel,
        out_shape=jax.ShapeDtypeStruct((N, M), jnp.float32),
        grid_spec=pltpu.PrefetchScalarGridSpec(
            num_scalar_prefetch=0,
            grid=(pl.cdiv(N, rt),),
            in_specs=[
                pl.BlockSpec((rt, D), lambda i: (i, 0)),        # activation rows
                pl.BlockSpec((D, M), lambda i: (0, 0)),         # weight (bf16), VMEM-resident
                pl.BlockSpec((1, M), lambda i: (0, 0)),         # bias
            ],
            out_specs=pl.BlockSpec((rt, M), lambda i: (i, 0)),
        ),
        compiler_params=pltpu.CompilerParams(
            dimension_semantics=("parallel",),
            vmem_limit_bytes=_VMEM_LIMIT_BYTES),
    )(x2d.astype(jnp.float32), w.astype(jnp.bfloat16),
      jnp.reshape(b, (1, M)).astype(jnp.float32))


# ----------------------------------------------------------------------------
# GRU recurrence kernel (batch-major blocks, fused input projection).
# Grid = time tiles; h carried in VMEM scratch across grid steps.
# ----------------------------------------------------------------------------
def _gru_kernel(maxlen_ref, x_ref, wih_ref, bih_ref, whh_ref, bhh_ref, len_ref,
                o_ref, *scratch, hidden_size, t_tile, residual, tile_matmul):
    if tile_matmul:
        gi_ref, h_ref = scratch
    else:
        (h_ref,) = scratch

    H = hidden_size
    B = x_ref.shape[0]
    D = x_ref.shape[2]
    tile = pl.program_id(0)
    t0 = tile * t_tile
    max_len = maxlen_ref[0]            # scalar-prefetched max(seq_lengths) in SMEM

    @pl.when(tile == 0)
    def _init():
        h_ref[...] = jnp.zeros_like(h_ref)

    @pl.when(t0 >= max_len)            # fully padded tile: skip all compute
    def _skip():
        o_ref[...] = jnp.zeros_like(o_ref)

    @pl.when(t0 < max_len)
    def _compute():
        wih = wih_ref[...]             # (D, 3H) bf16, VMEM-resident across the grid
        bih = bih_ref[...]             # (1, 3H) f32
        whh = whh_ref[...]             # (H, 3H) bf16
        bhh = bhh_ref[...]             # (1, 3H) f32
        lens = len_ref[...]            # (B, 1) int32

        if tile_matmul:
            # Fused input projection for the whole tile:
            # (B*t_tile, D) @ (D, 3H) on the MXU -> VMEM scratch.
            x2 = x_ref[...].reshape(B * t_tile, D).astype(jnp.bfloat16)
            gi_ref[...] = (jnp.dot(x2, wih, preferred_element_type=jnp.float32)
                           + bih).reshape(B, t_tile, 3 * H)

        def step(lt, h):
            if tile_matmul:
                gi_t = gi_ref[:, lt, :]                       # (B, 3H)
            else:
                gi_t = jnp.dot(x_ref[:, lt, :].astype(jnp.bfloat16), wih,
                               preferred_element_type=jnp.float32) + bih
            # gh must stay separate from gi: the "n" gate needs r*(W_hn h + b_hn).
            # TODO(synk): weight-stationary MXU (matmul_push_rhs/acc_lhs) for whh.
            gh = jnp.dot(h.astype(jnp.bfloat16), whh,
                         preferred_element_type=jnp.float32) + bhh
            r = jax.nn.sigmoid(gi_t[:, 0:H] + gh[:, 0:H])
            z = jax.nn.sigmoid(gi_t[:, H:2 * H] + gh[:, H:2 * H])
            n = jnp.tanh(gi_t[:, 2 * H:3 * H] + r * gh[:, 2 * H:3 * H])
            h_cand = (1.0 - z) * n + z * h
            valid = (t0 + lt) < lens                          # (B, 1) bool
            h_new = jnp.where(valid, h_cand, h)               # freeze h at padded steps
            out = h_new + x_ref[:, lt, :] if residual else h_new
            o_ref[:, lt, :] = jnp.where(valid, out, 0.0).astype(o_ref.dtype)
            return h_new

        unroll = True if t_tile <= 16 else 8
        h_ref[...] = lax.fori_loop(0, t_tile, step, h_ref[...], unroll=unroll)


def gru_layer(x_BLD, w_ih, b_ih, w_hh, b_hh, lens_B1, max_len_1, *,
              residual, time_tile_cap=64):
    """One GRU layer over time. x: (B, L, D) f32 -> (B, L, H) f32 (padded zeros)."""
    B, L, D = x_BLD.shape
    H = w_hh.shape[0]
    G = 3 * H
    t_tile = _pick_time_tile(L, B, D, H, time_tile_cap)
    # The tile-wide gi matmul needs a cheap (B, t, D)->(B*t, D) collapse;
    # fall back to per-step gi matmuls for odd tiny tiles.
    tile_matmul = (t_tile % 8 == 0) or (B == 1)
    n_tiles = pl.cdiv(L, t_tile)

    kernel = functools.partial(_gru_kernel, hidden_size=H, t_tile=t_tile,
                               residual=residual, tile_matmul=tile_matmul)

    scratch = []
    if tile_matmul:
        scratch.append(pltpu.VMEM((B, t_tile, G), jnp.float32))   # per-tile gi
    scratch.append(pltpu.VMEM((B, H), jnp.float32))               # carried h

    # NOTE: the constant-index weight/bias/length specs would ideally be
    # single-buffered (pipeline_mode=pl.Buffered(1)); the VMEM budget above
    # conservatively accounts for the default double-buffering instead.
    in_specs = [
        pl.BlockSpec((B, t_tile, D), lambda t, m: (0, t, 0)),     # x tile
        pl.BlockSpec((D, G), lambda t, m: (0, 0)),                # W_ih (bf16)
        pl.BlockSpec((1, G), lambda t, m: (0, 0)),                # b_ih
        pl.BlockSpec((H, G), lambda t, m: (0, 0)),                # W_hh (bf16)
        pl.BlockSpec((1, G), lambda t, m: (0, 0)),                # b_hh
        pl.BlockSpec((B, 1), lambda t, m: (0, 0)),                # seq lengths
    ]

    return pl.pallas_call(
        kernel,
        out_shape=jax.ShapeDtypeStruct((B, L, H), jnp.float32),
        grid_spec=pltpu.PrefetchScalarGridSpec(
            num_scalar_prefetch=1,                                # max_len -> SMEM
            grid=(n_tiles,),
            in_specs=in_specs,
            out_specs=pl.BlockSpec((B, t_tile, H), lambda t, m: (0, t, 0)),
            scratch_shapes=scratch,
        ),
        compiler_params=pltpu.CompilerParams(
            dimension_semantics=("arbitrary",),                   # sequential recurrence
            vmem_limit_bytes=_VMEM_LIMIT_BYTES),
    )(max_len_1, x_BLD, w_ih.astype(jnp.bfloat16), b_ih.astype(jnp.float32),
      w_hh.astype(jnp.bfloat16), b_hh.astype(jnp.float32), lens_B1)


# ----------------------------------------------------------------------------
# Full RnnApc forward (no VQ).  Batch-major throughout, no transposes.
# ----------------------------------------------------------------------------
@functools.partial(jax.jit, static_argnames=("residual", "time_tile_cap"))
def rnn_apc_forward(frames_BxLxM, seq_lengths_B, params, *, residual=True,
                    time_tile_cap=64):
    B, L, M = frames_BxLxM.shape
    lens_B1 = jnp.asarray(seq_lengths_B, jnp.int32).reshape(B, 1)
    max_len_1 = jnp.max(lens_B1).astype(jnp.int32).reshape(1)
    x = frames_BxLxM.astype(jnp.float32)                          # (B, L, M)

    for i, layer in enumerate(params["gru_layers"]):
        x = gru_layer(x, layer["w_ih"], layer["b_ih"], layer["w_hh"],
                      layer["b_hh"], lens_B1, max_len_1,
                      residual=(residual and i > 0),
                      time_tile_cap=time_tile_cap)
        # rnn_dropout -> identity (eval).  # TODO(synk): training-mode dropout omitted.

    feature_BxLxH = x                                             # last-layer hidden states
    H = feature_BxLxH.shape[-1]
    pred2d = matmul_bias(feature_BxLxH.reshape(B * L, H),
                         params["postnet_w"], params["postnet_b"])
    predicted_BxLxM = pred2d.reshape(B, L, M)
    return feature_BxLxH, predicted_BxLxM


# ----------------------------------------------------------------------------
# Pure-JAX reference (mirrors the kernel's bf16 MXU operands / f32 gates).
# ----------------------------------------------------------------------------
def _ref_forward(frames_BxLxM, seq_lengths_B, params, *, residual=True):
    B, L, M = frames_BxLxM.shape
    lens = jnp.asarray(seq_lengths_B, jnp.int32)
    x = jnp.transpose(frames_BxLxM.astype(jnp.float32), (1, 0, 2))   # (L, B, M)
    t_idx = jnp.arange(L, dtype=jnp.int32)

    for i, layer in enumerate(params["gru_layers"]):
        D = x.shape[-1]
        H = layer["w_hh"].shape[0]
        w_ih = layer["w_ih"].astype(jnp.bfloat16)
        w_hh = layer["w_hh"].astype(jnp.bfloat16)
        b_ih, b_hh = layer["b_ih"], layer["b_hh"]

        gi = (jnp.dot(x.reshape(L * B, D).astype(jnp.bfloat16), w_ih,
                      preferred_element_type=jnp.float32)
              + b_ih).reshape(L, B, 3 * H)

        def step(h, inp, w_hh=w_hh, b_hh=b_hh, H=H):
            gi_t, t = inp
            gh = jnp.dot(h.astype(jnp.bfloat16), w_hh,
                         preferred_element_type=jnp.float32) + b_hh
            r = jax.nn.sigmoid(gi_t[:, :H] + gh[:, :H])
            z = jax.nn.sigmoid(gi_t[:, H:2 * H] + gh[:, H:2 * H])
            n = jnp.tanh(gi_t[:, 2 * H:] + r * gh[:, 2 * H:])
            h_cand = (1.0 - z) * n + z * h
            valid = (t < lens)[:, None]
            h_new = jnp.where(valid, h_cand, h)
            return h_new, jnp.where(valid, h_new, 0.0)

        _, outs = lax.scan(step, jnp.zeros((B, H), jnp.float32), (gi, t_idx))
        if residual and i > 0:
            outs = outs + x
        x = outs

    feat = jnp.transpose(x, (1, 0, 2))
    H = feat.shape[-1]
    pred = (jnp.dot(feat.reshape(B * L, H).astype(jnp.bfloat16),
                    params["postnet_w"].astype(jnp.bfloat16),
                    preferred_element_type=jnp.float32)
            + params["postnet_b"]).reshape(B, L, M)
    return feat, pred


# ----------------------------------------------------------------------------
# Deterministic parameter init (PyTorch-style uniform(-1/sqrt(H), 1/sqrt(H))).
# ----------------------------------------------------------------------------
def init_params(key, input_size, hidden_size, num_layers):
    k = 1.0 / jnp.sqrt(hidden_size)
    in_sizes = [input_size] + [hidden_size] * (num_layers - 1)
    layers = []
    for d_in in in_sizes:
        key, k1, k2, k3, k4 = jax.random.split(key, 5)
        layers.append(dict(
            w_ih=jax.random.uniform(k1, (d_in, 3 * hidden_size), jnp.float32, -k, k),
            w_hh=jax.random.uniform(k2, (hidden_size, 3 * hidden_size), jnp.float32, -k, k),
            b_ih=jax.random.uniform(k3, (1, 3 * hidden_size), jnp.float32, -k, k),
            b_hh=jax.random.uniform(k4, (1, 3 * hidden_size), jnp.float32, -k, k),
        ))
    key, k1, k2 = jax.random.split(key, 3)
    return dict(
        gru_layers=layers,
        postnet_w=jax.random.uniform(k1, (hidden_size, input_size), jnp.float32, -k, k),
        postnet_b=jax.random.uniform(k2, (input_size,), jnp.float32, -k, k),
    )


if __name__ == "__main__":
    # Small shapes consistent with the module: Mel-like frames (B, L, M).
    B, L, M, H, N_LAYERS = 2, 8, 16, 32, 3

    key = jax.random.PRNGKey(0)
    key, kx = jax.random.split(key)
    frames_BxLxM = jax.random.normal(kx, (B, L, M), jnp.float32)
    seq_lengths_B = jnp.array([8, 5], dtype=jnp.int32)

    params = init_params(key, input_size=M, hidden_size=H, num_layers=N_LAYERS)

    feat, pred = rnn_apc_forward(frames_BxLxM, seq_lengths_B, params, residual=True)
    feat = jax.block_until_ready(feat)
    pred = jax.block_until_ready(pred)

    feat_ref, pred_ref = _ref_forward(frames_BxLxM, seq_lengths_B, params,
                                      residual=True)
    assert feat.shape == (B, L, H) and pred.shape == (B, L, M)
    assert jnp.allclose(feat, feat_ref, rtol=5e-3, atol=5e-3)
    assert jnp.allclose(pred, pred_ref, rtol=5e-3, atol=5e-3)
    # Padding semantics: last-layer outputs are exactly zero for t >= length.
    assert jnp.all(feat[1, int(seq_lengths_B[1]):, :] == 0.0)

    # Second check: multiple time tiles (recurrence carried across grid steps)
    # and the fully-padded-tile skip path, by forcing a small time tile.
    L2 = 16
    key, kx2 = jax.random.split(key)
    frames2 = jax.random.normal(kx2, (B, L2, M), jnp.float32)
    for lens2 in (jnp.array([16, 5], jnp.int32), jnp.array([6, 5], jnp.int32)):
        f2, p2 = rnn_apc_forward(frames2, lens2, params, residual=True,
                                 time_tile_cap=8)
        f2 = jax.block_until_ready(f2)
        f2_ref, p2_ref = _ref_forward(frames2, lens2, params, residual=True)
        assert jnp.allclose(f2, f2_ref, rtol=5e-3, atol=5e-3)
        assert jnp.allclose(p2, p2_ref, rtol=5e-3, atol=5e-3)
        assert jnp.all(f2[1, int(lens2[1]):, :] == 0.0)

    print("KERNEL_OK")
</pallas_src>

<mosaic_0001>
module attributes {stable_mosaic.version = 11 : i64} {
  func.func @_matmul_bias_kernel(%arg0: i32, %arg1: memref<16x32xf32, #tpu.memory_space<vmem>>, %arg2: memref<32x16xbf16, #tpu.memory_space<vmem>>, %arg3: memref<1x16xf32, #tpu.memory_space<vmem>>, %arg4: memref<16x16xf32, #tpu.memory_space<vmem>>) attributes {dimension_semantics = [#tpu.dimension_semantics<parallel>], iteration_bounds = array<i64: 1>, scalar_prefetch = 0 : i64, scratch_operands = 0 : i64, tpu.core_type = #tpu.core_type<tc>, window_params = [{transform_indices = @transform_0, window_bounds = array<i64: 16, 32>}, {pipeline_mode = #tpu.pipeline_mode<synchronous>, transform_indices = @transform_1, window_bounds = array<i64: 32, 16>}, {pipeline_mode = #tpu.pipeline_mode<synchronous>, transform_indices = @transform_2, window_bounds = array<i64: 1, 16>}, {transform_indices = @transform_3, window_bounds = array<i64: 16, 16>}]} {
    %c0 = arith.constant 0 : index
    %c0_0 = arith.constant 0 : index
    %0 = vector.load %arg1[%c0, %c0_0] : memref<16x32xf32, #tpu.memory_space<vmem>>, vector<16x32xf32>
    %1 = arith.truncf %0 : vector<16x32xf32> to vector<16x32xbf16>
    %c0_1 = arith.constant 0 : index
    %c0_2 = arith.constant 0 : index
    %2 = vector.load %arg2[%c0_1, %c0_2] : memref<32x16xbf16, #tpu.memory_space<vmem>>, vector<32x16xbf16>
    %cst = arith.constant dense<0.000000e+00> : vector<16x16xf32>
    %3 = tpu.matmul %1, %2, %cst {dimension_numbers = #tpu.dot_dimension_numbers<[1], [0], [0], [1], [0, 0, 1, 1], [], []>} : vector<16x32xbf16>, vector<32x16xbf16>, vector<16x16xf32> -> vector<16x16xf32>
    %c0_3 = arith.constant 0 : index
    %c0_4 = arith.constant 0 : index
    %4 = vector.load %arg3[%c0_3, %c0_4] : memref<1x16xf32, #tpu.memory_space<vmem>>, vector<1x16xf32>
    %5 = vector.broadcast %4 : vector<1x16xf32> to vector<16x16xf32>
    %6 = arith.addf %3, %5 : vector<16x16xf32>
    %c0_5 = arith.constant 0 : index
    %c0_6 = arith.constant 0 : index
    %7 = vector.load %arg4[%c0_5, %c0_6] : memref<16x16xf32, #tpu.memory_space<vmem>>, vector<16x16xf32>
    tpu.vector_store %arg4[%c0_5, %c0_6], %6 {strides = array<i32>} : memref<16x16xf32, #tpu.memory_space<vmem>>, vector<16x16xf32>,
    return
  }
  func.func @transform_0(%arg0: i32) -> (i32, i32) {
    %c0_i32 = arith.constant 0 : i32
    %c0_i32_0 = arith.constant 0 : i32
    return %arg0, %c0_i32 : i32, i32
  }
  func.func @transform_1(%arg0: i32) -> (i32, i32) {
    %c0_i32 = arith.constant 0 : i32
    %c0_i32_0 = arith.constant 0 : i32
    %c0_i32_1 = arith.constant 0 : i32
    return %c0_i32, %c0_i32_0 : i32, i32
  }
  func.func @transform_2(%arg0: i32) -> (i32, i32) {
    %c0_i32 = arith.constant 0 : i32
    %c0_i32_0 = arith.constant 0 : i32
    %c0_i32_1 = arith.constant 0 : i32
    return %c0_i32, %c0_i32_0 : i32, i32
  }
  func.func @transform_3(%arg0: i32) -> (i32, i32) {
    %c0_i32 = arith.constant 0 : i32
    %c0_i32_0 = arith.constant 0 : i32
    return %arg0, %c0_i32 : i32, i32
  }
}

module attributes {stable_mosaic.version = 11 : i64} {
  func.func @_gru_kernel(%arg0: i32, %arg1: memref<1xi32, #tpu.memory_space<smem>>, %arg2: memref<2x8x16xf32, #tpu.memory_space<vmem>>, %arg3: memref<16x96xbf16, #tpu.memory_space<vmem>>, %arg4: memref<1x96xf32, #tpu.memory_space<vmem>>, %arg5: memref<32x96xbf16, #tpu.memory_space<vmem>>, %arg6: memref<1x96xf32, #tpu.memory_space<vmem>>, %arg7: memref<2x1xi32, #tpu.memory_space<vmem>>, %arg8: memref<2x8x32xf32, #tpu.memory_space<vmem>>, %arg9: memref<2x8x96xf32, #tpu.memory_space<vmem>>, %arg10: memref<2x32xf32, #tpu.memory_space<vmem>>) attributes {dimension_semantics = [#tpu.dimension_semantics<arbitrary>], iteration_bounds = array<i64: 1>, scalar_prefetch = 1 : i64, scratch_operands = 2 : i64, tpu.core_type = #tpu.core_type<tc>, window_params = [{transform_indices = @transform_0, window_bounds = array<i64: 2, 8, 16>}, {pipeline_mode = #tpu.pipeline_mode<synchronous>, transform_indices = @transform_1, window_bounds = array<i64: 16, 96>}, {pipeline_mode = #tpu.pipeline_mode<synchronous>, transform_indices = @transform_2, window_bounds = array<i64: 1, 96>}, {pipeline_mode = #tpu.pipeline_mode<synchronous>, transform_indices = @transform_3, window_bounds = array<i64: 32, 96>}, {pipeline_mode = #tpu.pipeline_mode<synchronous>, transform_indices = @transform_4, window_bounds = array<i64: 1, 96>}, {pipeline_mode = #tpu.pipeline_mode<synchronous>, transform_indices = @transform_5, window_bounds = array<i64: 2, 1>}, {transform_indices = @transform_6, window_bounds = array<i64: 2, 8, 32>}]} {
    %c8_i32 = arith.constant 8 : i32
    %0 = arith.muli %arg0, %c8_i32 : i32
    %c0 = arith.constant 0 : index
    %1 = memref.load %arg1[%c0] : memref<1xi32, #tpu.memory_space<smem>>
    %c0_i32 = arith.constant 0 : i32
    %2 = arith.cmpi eq, %arg0, %c0_i32 : i32
    %3 = arith.extui %2 : i1 to i32
    %c0_i32_0 = arith.constant 0 : i32
    %4 = arith.cmpi ne, %3, %c0_i32_0 : i32
    scf.if %4 {
      %cst = arith.constant 0.000000e+00 : f32
      %11 = vector.broadcast %cst : f32 to vector<2x32xf32>
      %c0_3 = arith.constant 0 : index
      %c0_4 = arith.constant 0 : index
      %12 = vector.load %arg10[%c0_3, %c0_4] : memref<2x32xf32, #tpu.memory_space<vmem>>, vector<2x32xf32>
      tpu.vector_store %arg10[%c0_3, %c0_4], %11 {strides = array<i32>} : memref<2x32xf32, #tpu.memory_space<vmem>>, vector<2x32xf32>,
    } else {
    }
    %5 = arith.cmpi sge, %0, %1 : i32
    %6 = arith.extui %5 : i1 to i32
    %c0_i32_1 = arith.constant 0 : i32
    %7 = arith.cmpi ne, %6, %c0_i32_1 : i32
    scf.if %7 {
      %cst = arith.constant 0.000000e+00 : f32
      %11 = vector.broadcast %cst : f32 to vector<2x8x32xf32>
      %c0_3 = arith.constant 0 : index
      %c0_4 = arith.constant 0 : index
      %c0_5 = arith.constant 0 : index
      %12 = vector.load %arg8[%c0_3, %c0_4, %c0_5] : memref<2x8x32xf32, #tpu.memory_space<vmem>>, vector<2x8x32xf32>
      tpu.vector_store %arg8[%c0_3, %c0_4, %c0_5], %11 {strides = array<i32>} : memref<2x8x32xf32, #tpu.memory_space<vmem>>, vector<2x8x32xf32>,
    } else {
    }
    %8 = arith.cmpi slt, %0, %1 : i32
    %9 = arith.extui %8 : i1 to i32
    %c0_i32_2 = arith.constant 0 : i32
    %10 = arith.cmpi ne, %9, %c0_i32_2 : i32
    scf.if %10 {
      %c0_3 = arith.constant 0 : index
      %c0_4 = arith.constant 0 : index
      %11 = vector.load %arg3[%c0_3, %c0_4] : memref<16x96xbf16, #tpu.memory_space<vmem>>, vector<16x96xbf16>
      %c0_5 = arith.constant 0 : index
      %c0_6 = arith.constant 0 : index
      %12 = vector.load %arg4[%c0_5, %c0_6] : memref<1x96xf32, #tpu.memory_space<vmem>>, vector<1x96xf32>
      %c0_7 = arith.constant 0 : index
      %c0_8 = arith.constant 0 : index
      %13 = vector.load %arg5[%c0_7, %c0_8] : memref<32x96xbf16, #tpu.memory_space<vmem>>, vector<32x96xbf16>
      %c0_9 = arith.constant 0 : index
      %c0_10 = arith.constant 0 : index
      %14 = vector.load %arg6[%c0_9, %c0_10] : memref<1x96xf32, #tpu.memory_space<vmem>>, vector<1x96xf32>
      %c0_11 = arith.constant 0 : index
      %c0_12 = arith.constant 0 : index
      %15 = vector.load %arg7[%c0_11, %c0_12] : memref<2x1xi32, #tpu.memory_space<vmem>>, vector<2x1xi32>
      %c0_13 = arith.constant 0 : index
      %c0_14 = arith.constant 0 : index
      %c0_15 = arith.constant 0 : index
      %16 = vector.load %arg2[%c0_13, %c0_14, %c0_15] : memref<2x8x16xf32, #tpu.memory_space<vmem>>, vector<2x8x16xf32>
      %17 = vector.shape_cast %16 : vector<2x8x16xf32> to vector<16x16xf32>
      %18 = arith.truncf %17 : vector<16x16xf32> to vector<16x16xbf16>
      %cst = arith.constant dense<0.000000e+00> : vector<16x96xf32>
      %19 = tpu.matmul %18, %11, %cst {dimension_numbers = #tpu.dot_dimension_numbers<[1], [0], [0], [1], [0, 0, 1, 1], [], []>} : vector<16x16xbf16>, vector<16x96xbf16>, vector<16x96xf32> -> vector<16x96xf32>
      %20 = vector.broadcast %12 : vector<1x96xf32> to vector<16x96xf32>
      %21 = arith.addf %19, %20 : vector<16x96xf32>
      %22 = vector.shape_cast %21 : vector<16x96xf32> to vector<2x8x96xf32>
      %c0_16 = arith.constant 0 : index
      %c0_17 = arith.constant 0 : index
      %c0_18 = arith.constant 0 : index
      %23 = vector.load %arg9[%c0_16, %c0_17, %c0_18] : memref<2x8x96xf32, #tpu.memory_space<vmem>>, vector<2x8x96xf32>
      tpu.vector_store %arg9[%c0_16, %c0_17, %c0_18], %22 {strides = array<i32>} : memref<2x8x96xf32, #tpu.memory_space<vmem>>, vector<2x8x96xf32>,
      %c0_19 = arith.constant 0 : index
      %c0_20 = arith.constant 0 : index
      %24 = vector.load %arg10[%c0_19, %c0_20] : memref<2x32xf32, #tpu.memory_space<vmem>>, vector<2x32xf32>
      %c0_i32_21 = arith.constant 0 : i32
      %c0_22 = arith.constant 0 : index
      %25 = arith.index_cast %c0_i32_21 : i32 to index
      %c0_23 = arith.constant 0 : index
      %26 = vector.load %arg9[%c0_22, %25, %c0_23] : memref<2x8x96xf32, #tpu.memory_space<vmem>>, vector<2x1x96xf32>
      %27 = vector.shape_cast %26 : vector<2x1x96xf32> to vector<2x96xf32>
      %28 = arith.truncf %24 : vector<2x32xf32> to vector<2x32xbf16>
      %cst_24 = arith.constant dense<0.000000e+00> : vector<2x96xf32>
      %29 = tpu.matmul %28, %13, %cst_24 {dimension_numbers = #tpu.dot_dimension_numbers<[1], [0], [0], [1], [0, 0, 1, 1], [], []>} : vector<2x32xbf16>, vector<32x96xbf16>, vector<2x96xf32> -> vector<2x96xf32>
      %30 = vector.broadcast %14 : vector<1x96xf32> to vector<2x96xf32>
      %31 = arith.addf %29, %30 : vector<2x96xf32>
      %32 = vector.extract_strided_slice %27 {offsets = [0, 0], sizes = [2, 32], strides = [1, 1]} : vector<2x96xf32> to vector<2x32xf32>
      %33 = vector.extract_strided_slice %31 {offsets = [0, 0], sizes = [2, 32], strides = [1, 1]} : vector<2x96xf32> to vector<2x32xf32>
      %34 = arith.addf %32, %33 : vector<2x32xf32>
      %35 = arith.negf %34 : vector<2x32xf32>
      %36 = math.exp %35 : vector<2x32xf32>
      %cst_25 = arith.constant 1.000000e+00 : f32
      %37 = vector.broadcast %cst_25 : f32 to vector<2x32xf32>
      %38 = arith.addf %37, %36 : vector<2x32xf32>
      %39 = arith.divf %37, %38 : vector<2x32xf32>
      %40 = vector.extract_strided_slice %27 {offsets = [0, 32], sizes = [2, 32], strides = [1, 1]} : vector<2x96xf32> to vector<2x32xf32>
      %41 = vector.extract_strided_slice %31 {offsets = [0, 32], sizes = [2, 32], strides = [1, 1]} : vector<2x96xf32> to vector<2x32xf32>
      %42 = arith.addf %40, %41 : vector<2x32xf32>
      %43 = arith.negf %42 : vector<2x32xf32>
      %44 = math.exp %43 : vector<2x32xf32>
      %cst_26 = arith.constant 1.000000e+00 : f32
      %45 = vector.broadcast %cst_26 : f32 to vector<2x32xf32>
      %46 = arith.addf %45, %44 : vector<2x32xf32>
      %47 = arith.divf %45, %46 : vector<2x32xf32>
      %48 = vector.extract_strided_slice %27 {offsets = [0, 64], sizes = [2, 32], strides = [1, 1]} : vector<2x96xf32> to vector<2x32xf32>
      %49 = vector.extract_strided_slice %31 {offsets = [0, 64], sizes = [2, 32], strides = [1, 1]} : vector<2x96xf32> to vector<2x32xf32>
      %50 = arith.mulf %39, %49 : vector<2x32xf32>
      %51 = arith.addf %48, %50 : vector<2x32xf32>
      %52 = math.tanh %51 : vector<2x32xf32>
      %cst_27 = arith.constant 1.000000e+00 : f32
      %53 = vector.broadcast %cst_27 : f32 to vector<2x32xf32>
      %54 = arith.subf %53, %47 : vector<2x32xf32>
      %55 = arith.mulf %54, %52 : vector<2x32xf32>
      %56 = arith.mulf %47, %24 : vector<2x32xf32>
      %57 = arith.addf %55, %56 : vector<2x32xf32>
      %58 = arith.addi %0, %c0_i32_21 : i32
      %59 = vector.broadcast %58 : i32 to vector<2x1xi32>
      %60 = arith.cmpi slt, %59, %15 : vector<2x1xi32>
      %61 = vector.shape_cast %60 : vector<2x1xi1> to vector<2x1xi1>
      %62 = vector.broadcast %61 : vector<2x1xi1> to vector<2x32xi1>
      %63 = arith.select %62, %57, %24 : vector<2x32xi1>, vector<2x32xf32>
      %cst_28 = arith.constant 0.000000e+00 : f32
      %64 = vector.shape_cast %60 : vector<2x1xi1> to vector<2x1xi1>
      %65 = vector.broadcast %64 : vector<2x1xi1> to vector<2x32xi1>
      %66 = vector.broadcast %cst_28 : f32 to vector<2x32xf32>
      %67 = arith.select %65, %63, %66 : vector<2x32xi1>, vector<2x32xf32>
      %c0_29 = arith.constant 0 : index
      %68 = arith.index_cast %c0_i32_21 : i32 to index
      %c0_30 = arith.constant 0 : index
      %69 = vector.load %arg8[%c0_29, %68, %c0_30] : memref<2x8x32xf32, #tpu.memory_space<vmem>>, vector<2x1x32xf32>
      %70 = vector.shape_cast %69 : vector<2x1x32xf32> to vector<2x32xf32>
      %71 = vector.shape_cast %67 : vector<2x32xf32> to vector<2x1x32xf32>
      tpu.vector_store %arg8[%c0_29, %68, %c0_30], %71 {strides = array<i32>} : memref<2x8x32xf32, #tpu.memory_space<vmem>>, vector<2x1x32xf32>,
      %c1_i32 = arith.constant 1 : i32
      %c0_31 = arith.constant 0 : index
      %72 = arith.index_cast %c1_i32 : i32 to index
      %c0_32 = arith.constant 0 : index
      %73 = vector.load %arg9[%c0_31, %72, %c0_32] : memref<2x8x96xf32, #tpu.memory_space<vmem>>, vector<2x1x96xf32>
      %74 = vector.shape_cast %73 : vector<2x1x96xf32> to vector<2x96xf32>
      %75 = arith.truncf %63 : vector<2x32xf32> to vector<2x32xbf16>
      %cst_33 = arith.constant dense<0.000000e+00> : vector<2x96xf32>
      %76 = tpu.matmul %75, %13, %cst_33 {dimension_numbers = #tpu.dot_dimension_numbers<[1], [0], [0], [1], [0, 0, 1, 1], [], []>} : vector<2x32xbf16>, vector<32x96xbf16>, vector<2x96xf32> -> vector<2x96xf32>
      %77 = vector.broadcast %14 : vector<1x96xf32> to vector<2x96xf32>
      %78 = arith.addf %76, %77 : vector<2x96xf32>
      %79 = vector.extract_strided_slice %74 {offsets = [0, 0], sizes = [2, 32], strides = [1, 1]} : vector<2x96xf32> to vector<2x32xf32>
      %80 = vector.extract_strided_slice %78 {offsets = [0, 0], sizes = [2, 32], strides = [1, 1]} : vector<2x96xf32> to vector<2x32xf32>
      %81 = arith.addf %79, %80 : vector<2x32xf32>
      %82 = arith.negf %81 : vector<2x32xf32>
      %83 = math.exp %82 : vector<2x32xf32>
      %cst_34 = arith.constant 1.000000e+00 : f32
      %84 = vector.broadcast %cst_34 : f32 to vector<2x32xf32>
      %85 = arith.addf %84, %83 : vector<2x32xf32>
      %86 = arith.divf %84, %85 : vector<2x32xf32>
      %87 = vector.extract_strided_slice %74 {offsets = [0, 32], sizes = [2, 32], strides = [1, 1]} : vector<2x96xf32> to vector<2x32xf32>
      %88 = vector.extract_strided_slice %78 {offsets = [0, 32], sizes = [2, 32], strides = [1, 1]} : vector<2x96xf32> to vector<2x32xf32>
      %89 = arith.addf %87, %88 : vector<2x32xf32>
      %90 = arith.negf %89 : vector<2x32xf32>
      %91 = math.exp %90 : vector<2x32xf32>
      %cst_35 = arith.constant 1.000000e+00 : f32
      %92 = vector.broadcast %cst_35 : f32 to vector<2x32xf32>
      %93 = arith.addf %92, %91 : vector<2x32xf32>
      %94 = arith.divf %92, %93 : vector<2x32xf32>
      %95 = vector.extract_strided_slice %74 {offsets = [0, 64], sizes = [2, 32], strides = [1, 1]} : vector<2x96xf32> to vector<2x32xf32>
      %96 = vector.extract_strided_slice %78 {offsets = [0, 64], sizes = [2, 32], strides = [1, 1]} : vector<2x96xf32> to vector<2x32xf32>
      %97 = arith.mulf %86, %96 : vector<2x32xf32>
      %98 = arith.addf %95, %97 : vector<2x32xf32>
      %99 = math.tanh %98 : vector<2x32xf32>
      %cst_36 = arith.constant 1.000000e+00 : f32
      %100 = vector.broadcast %cst_36 : f32 to vector<2x32xf32>
      %101 = arith.subf %100, %94 : vector<2x32xf32>
      %102 = arith.mulf %101, %99 : vector<2x32xf32>
      %103 = arith.mulf %94, %63 : vector<2x32xf32>
      %104 = arith.addf %102, %103 : vector<2x32xf32>
      %105 = arith.addi %0, %c1_i32 : i32
      %106 = vector.broadcast %105 : i32 to vector<2x1xi32>
      %107 = arith.cmpi slt, %106, %15 : vector<2x1xi32>
      %108 = vector.shape_cast %107 : vector<2x1xi1> to vector<2x1xi1>
      %109 = vector.broadcast %108 : vector<2x1xi1> to vector<2x32xi1>
      %110 = arith.select %109, %104, %63 : vector<2x32xi1>, vector<2x32xf32>
      %cst_37 = arith.constant 0.000000e+00 : f32
      %111 = vector.shape_cast %107 : vector<2x1xi1> to vector<2x1xi1>
      %112 = vector.broadcast %111 : vector<2x1xi1> to vector<2x32xi1>
      %113 = vector.broadcast %cst_37 : f32 to vector<2x32xf32>
      %114 = arith.select %112, %110, %113 : vector<2x32xi1>, vector<2x32xf32>
      %c0_38 = arith.constant 0 : index
      %115 = arith.index_cast %c1_i32 : i32 to index
      %c0_39 = arith.constant 0 : index
      %116 = vector.load %arg8[%c0_38, %115, %c0_39] : memref<2x8x32xf32, #tpu.memory_space<vmem>>, vector<2x1x32xf32>
      %117 = vector.shape_cast %116 : vector<2x1x32xf32> to vector<2x32xf32>
      %118 = vector.shape_cast %114 : vector<2x32xf32> to vector<2x1x32xf32>
      tpu.vector_store %arg8[%c0_38, %115, %c0_39], %118 {strides = array<i32>} : memref<2x8x32xf32, #tpu.memory_space<vmem>>, vector<2x1x32xf32>,
      %c2_i32 = arith.constant 2 : i32
      %c0_40 = arith.constant 0 : index
      %119 = arith.index_cast %c2_i32 : i32 to index
      %c0_41 = arith.constant 0 : index
      %120 = vector.load %arg9[%c0_40, %119, %c0_41] : memref<2x8x96xf32, #tpu.memory_space<vmem>>, vector<2x1x96xf32>
      %121 = vector.shape_cast %120 : vector<2x1x96xf32> to vector<2x96xf32>
      %122 = arith.truncf %110 : vector<2x32xf32> to vector<2x32xbf16>
      %cst_42 = arith.constant dense<0.000000e+00> : vector<2x96xf32>
      %123 = tpu.matmul %122, %13, %cst_42 {dimension_numbers = #tpu.dot_dimension_numbers<[1], [0], [0], [1], [0, 0, 1, 1], [], []>} : vector<2x32xbf16>, vector<32x96xbf16>, vector<2x96xf32> -> vector<2x96xf32>
      %124 = vector.broadcast %14 : vector<1x96xf32> to vector<2x96xf32>
      %125 = arith.addf %123, %124 : vector<2x96xf32>
      %126 = vector.extract_strided_slice %121 {offsets = [0, 0], sizes = [2, 32], strides = [1, 1]} : vector<2x96xf32> to vector<2x32xf32>
      %127 = vector.extract_strided_slice %125 {offsets = [0, 0], sizes = [2, 32], strides = [1, 1]} : vector<2x96xf32> to vector<2x32xf32>
      %128 = arith.addf %126, %127 : vector<2x32xf32>
      %129 = arith.negf %128 : vector<2x32xf32>
      %130 = math.exp %129 : vector<2x32xf32>
      %cst_43 = arith.constant 1.000000e+00 : f32
      %131 = vector.broadcast %cst_43 : f32 to vector<2x32xf32>
      %132 = arith.addf %131, %130 : vector<2x32xf32>
      %133 = arith.divf %131, %132 : vector<2x32xf32>
      %134 = vector.extract_strided_slice %121 {offsets = [0, 32], sizes = [2, 32], strides = [1, 1]} : vector<2x96xf32> to vector<2x32xf32>
      %135 = vector.extract_strided_slice %125 {offsets = [0, 32], sizes = [2, 32], strides = [1, 1]} : vector<2x96xf32> to vector<2x32xf32>
      %136 = arith.addf %134, %135 : vector<2x32xf32>
      %137 = arith.negf %136 : vector<2x32xf32>
      %138 = math.exp %137 : vector<2x32xf32>
      %cst_44 = arith.constant 1.000000e+00 : f32
      %139 = vector.broadcast %cst_44 : f32 to vector<2x32xf32>
      %140 = arith.addf %139, %138 : vector<2x32xf32>
      %141 = arith.divf %139, %140 : vector<2x32xf32>
      %142 = vector.extract_strided_slice %121 {offsets = [0, 64], sizes = [2, 32], strides = [1, 1]} : vector<2x96xf32> to vector<2x32xf32>
      %143 = vector.extract_strided_slice %125 {offsets = [0, 64], sizes = [2, 32], strides = [1, 1]} : vector<2x96xf32> to vector<2x32xf32>
      %144 = arith.mulf %133, %143 : vector<2x32xf32>
      %145 = arith.addf %142, %144 : vector<2x32xf32>
      %146 = math.tanh %145 : vector<2x32xf32>
      %cst_45 = arith.constant 1.000000e+00 : f32
      %147 = vector.broadcast %cst_45 : f32 to vector<2x32xf32>
      %148 = arith.subf %147, %141 : vector<2x32xf32>
      %149 = arith.mulf %148, %146 : vector<2x32xf32>
      %150 = arith.mulf %141, %110 : vector<2x32xf32>
      %151 = arith.addf %149, %150 : vector<2x32xf32>
      %152 = arith.addi %0, %c2_i32 : i32
      %153 = vector.broadcast %152 : i32 to vector<2x1xi32>
      %154 = arith.cmpi slt, %153, %15 : vector<2x1xi32>
      %155 = vector.shape_cast %154 : vector<2x1xi1> to vector<2x1xi1>
      %156 = vector.broadcast %155 : vector<2x1xi1> to vector<2x32xi1>
      %157 = arith.select %156, %151, %110 : vector<2x32xi1>, vector<2x32xf32>
      %cst_46 = arith.constant 0.000000e+00 : f32
      %158 = vector.shape_cast %154 : vector<2x1xi1> to vector<2x1xi1>
      %159 = vector.broadcast %158 : vector<2x1xi1> to vector<2x32xi1>
      %160 = vector.broadcast %cst_46 : f32 to vector<2x32xf32>
      %161 = arith.select %159, %157, %160 : vector<2x32xi1>, vector<2x32xf32>
      %c0_47 = arith.constant 0 : index
      %162 = arith.index_cast %c2_i32 : i32 to index
      %c0_48 = arith.constant 0 : index
      %163 = vector.load %arg8[%c0_47, %162, %c0_48] : memref<2x8x32xf32, #tpu.memory_space<vmem>>, vector<2x1x32xf32>
      %164 = vector.shape_cast %163 : vector<2x1x32xf32> to vector<2x32xf32>
      %165 = vector.shape_cast %161 : vector<2x32xf32> to vector<2x1x32xf32>
      tpu.vector_store %arg8[%c0_47, %162, %c0_48], %165 {strides = array<i32>} : memref<2x8x32xf32, #tpu.memory_space<vmem>>, vector<2x1x32xf32>,
      %c3_i32 = arith.constant 3 : i32
      %c0_49 = arith.constant 0 : index
      %166 = arith.index_cast %c3_i32 : i32 to index
      %c0_50 = arith.constant 0 : index
      %167 = vector.load %arg9[%c0_49, %166, %c0_50] : memref<2x8x96xf32, #tpu.memory_space<vmem>>, vector<2x1x96xf32>
      %168 = vector.shape_cast %167 : vector<2x1x96xf32> to vector<2x96xf32>
      %169 = arith.truncf %157 : vector<2x32xf32> to vector<2x32xbf16>
      %cst_51 = arith.constant dense<0.000000e+00> : vector<2x96xf32>
      %170 = tpu.matmul %169, %13, %cst_51 {dimension_numbers = #tpu.dot_dimension_numbers<[1], [0], [0], [1], [0, 0, 1, 1], [], []>} : vector<2x32xbf16>, vector<32x96xbf16>, vector<2x96xf32> -> vector<2x96xf32>
      %171 = vector.broadcast %14 : vector<1x96xf32> to vector<2x96xf32>
      %172 = arith.addf %170, %171 : vector<2x96xf32>
      %173 = vector.extract_strided_slice %168 {offsets = [0, 0], sizes = [2, 32], strides = [1, 1]} : vector<2x96xf32> to vector<2x32xf32>
      %174 = vector.extract_strided_slice %172 {offsets = [0, 0], sizes = [2, 32], strides = [1, 1]} : vector<2x96xf32> to vector<2x32xf32>
      %175 = arith.addf %173, %174 : vector<2x32xf32>
      %176 = arith.negf %175 : vector<2x32xf32>
      %177 = math.exp %176 : vector<2x32xf32>
      %cst_52 = arith.constant 1.000000e+00 : f32
      %178 = vector.broadcast %cst_52 : f32 to vector<2x32xf32>
      %179 = arith.addf %178, %177 : vector<2x32xf32>
      %180 = arith.divf %178, %179 : vector<2x32xf32>
      %181 = vector.extract_strided_slice %168 {offsets = [0, 32], sizes = [2, 32], strides = [1, 1]} : vector<2x96xf32> to vector<2x32xf32>
      %182 = vector.extract_strided_slice %172 {offsets = [0, 32], sizes = [2, 32], strides = [1, 1]} : vector<2x96xf32> to vector<2x32xf32>
      %183 = arith.addf %181, %182 : vector<2x32xf32>
      %184 = arith.negf %183 : vector<2x32xf32>
      %185 = math.exp %184 : vector<2x32xf32>
      %cst_53 = arith.constant 1.000000e+00 : f32
      %186 = vector.broadcast %cst_53 : f32 to vector<2x32xf32>
      %187 = arith.addf %186, %185 : vector<2x32xf32>
      %188 = arith.divf %186, %187 : vector<2x32xf32>
      %189 = vector.extract_strided_slice %168 {offsets = [0, 64], sizes = [2, 32], strides = [1, 1]} : vector<2x96xf32> to vector<2x32xf32>
      %190 = vector.extract_strided_slice %172 {offsets = [0, 64], sizes = [2, 32], strides = [1, 1]} : vector<2x96xf32> to vector<2x32xf32>
      %191 = arith.mulf %180, %190 : vector<2x32xf32>
      %192 = arith.addf %189, %191 : vector<2x32xf32>
      %193 = math.tanh %192 : vector<2x32xf32>
      %cst_54 = arith.constant 1.000000e+00 : f32
      %194 = vector.broadcast %cst_54 : f32 to vector<2x32xf32>
      %195 = arith.subf %194, %188 : vector<2x32xf32>
      %196 = arith.mulf %195, %193 : vector<2x32xf32>
      %197 = arith.mulf %188, %157 : vector<2x32xf32>
      %198 = arith.addf %196, %197 : vector<2x32xf32>
      %199 = arith.addi %0, %c3_i32 : i32
      %200 = vector.broadcast %199 : i32 to vector<2x1xi32>
      %201 = arith.cmpi slt, %200, %15 : vector<2x1xi32>
      %202 = vector.shape_cast %201 : vector<2x1xi1> to vector<2x1xi1>
      %203 = vector.broadcast %202 : vector<2x1xi1> to vector<2x32xi1>
      %204 = arith.select %203, %198, %157 : vector<2x32xi1>, vector<2x32xf32>
      %cst_55 = arith.constant 0.000000e+00 : f32
      %205 = vector.shape_cast %201 : vector<2x1xi1> to vector<2x1xi1>
      %206 = vector.broadcast %205 : vector<2x1xi1> to vector<2x32xi1>
      %207 = vector.broadcast %cst_55 : f32 to vector<2x32xf32>
      %208 = arith.select %206, %204, %207 : vector<2x32xi1>, vector<2x32xf32>
      %c0_56 = arith.constant 0 : index
      %209 = arith.index_cast %c3_i32 : i32 to index
      %c0_57 = arith.constant 0 : index
      %210 = vector.load %arg8[%c0_56, %209, %c0_57] : memref<2x8x32xf32, #tpu.memory_space<vmem>>, vector<2x1x32xf32>
      %211 = vector.shape_cast %210 : vector<2x1x32xf32> to vector<2x32xf32>
      %212 = vector.shape_cast %208 : vector<2x32xf32> to vector<2x1x32xf32>
      tpu.vector_store %arg8[%c0_56, %209, %c0_57], %212 {strides = array<i32>} : memref<2x8x32xf32, #tpu.memory_space<vmem>>, vector<2x1x32xf32>,
      %c4_i32 = arith.constant 4 : i32
      %c0_58 = arith.constant 0 : index
      %213 = arith.index_cast %c4_i32 : i32 to index
      %c0_59 = arith.constant 0 : index
      %214 = vector.load %arg9[%c0_58, %213, %c0_59] : memref<2x8x96xf32, #tpu.memory_space<vmem>>, vector<2x1x96xf32>
      %215 = vector.shape_cast %214 : vector<2x1x96xf32> to vector<2x96xf32>
      %216 = arith.truncf %204 : vector<2x32xf32> to vector<2x32xbf16>
      %cst_60 = arith.constant dense<0.000000e+00> : vector<2x96xf32>
      %217 = tpu.matmul %216, %13, %cst_60 {dimension_numbers = #tpu.dot_dimension_numbers<[1], [0], [0], [1], [0, 0, 1, 1], [], []>} : vector<2x32xbf16>, vector<32x96xbf16>, vector<2x96xf32> -> vector<2x96xf32>
      %218 = vector.broadcast %14 : vector<1x96xf32> to vector<2x96xf32>
      %219 = arith.addf %217, %218 : vector<2x96xf32>
      %220 = vector.extract_strided_slice %215 {offsets = [0, 0], sizes = [2, 32], strides = [1, 1]} : vector<2x96xf32> to vector<2x32xf32>
      %221 = vector.extract_strided_slice %219 {offsets = [0, 0], sizes = [2, 32], strides = [1, 1]} : vector<2x96xf32> to vector<2x32xf32>
      %222 = arith.addf %220, %221 : vector<2x32xf32>
      %223 = arith.negf %222 : vector<2x32xf32>
      %224 = math.exp %223 : vector<2x32xf32>
      %cst_61 = arith.constant 1.000000e+00 : f32
      %225 = vector.broadcast %cst_61 : f32 to vector<2x32xf32>
      %226 = arith.addf %225, %224 : vector<2x32xf32>
      %227 = arith.divf %225, %226 : vector<2x32xf32>
      %228 = vector.extract_strided_slice %215 {offsets = [0, 32], sizes = [2, 32], strides = [1, 1]} : vector<2x96xf32> to vector<2x32xf32>
      %229 = vector.extract_strided_slice %219 {offsets = [0, 32], sizes = [2, 32], strides = [1, 1]} : vector<2x96xf32> to vector<2x32xf32>
      %230 = arith.addf %228, %229 : vector<2x32xf32>
      %231 = arith.negf %230 : vector<2x32xf32>
      %232 = math.exp %231 : vector<2x32xf32>
      %cst_62 = arith.constant 1.000000e+00 : f32
      %233 = vector.broadcast %cst_62 : f32 to vector<2x32xf32>
      %234 = arith.addf %233, %232 : vector<2x32xf32>
      %235 = arith.divf %233, %234 : vector<2x32xf32>
      %236 = vector.extract_strided_slice %215 {offsets = [0, 64], sizes = [2, 32], strides = [1, 1]} : vector<2x96xf32> to vector<2x32xf32>
      %237 = vector.extract_strided_slice %219 {offsets = [0, 64], sizes = [2, 32], strides = [1, 1]} : vector<2x96xf32> to vector<2x32xf32>
      %238 = arith.mulf %227, %237 : vector<2x32xf32>
      %239 = arith.addf %236, %238 : vector<2x32xf32>
      %240 = math.tanh %239 : vector<2x32xf32>
      %cst_63 = arith.constant 1.000000e+00 : f32
      %241 = vector.broadcast %cst_63 : f32 to vector<2x32xf32>
      %242 = arith.subf %241, %235 : vector<2x32xf32>
      %243 = arith.mulf %242, %240 : vector<2x32xf32>
      %244 = arith.mulf %235, %204 : vector<2x32xf32>
      %245 = arith.addf %243, %244 : vector<2x32xf32>
      %246 = arith.addi %0, %c4_i32 : i32
      %247 = vector.broadcast %246 : i32 to vector<2x1xi32>
      %248 = arith.cmpi slt, %247, %15 : vector<2x1xi32>
      %249 = vector.shape_cast %248 : vector<2x1xi1> to vector<2x1xi1>
      %250 = vector.broadcast %249 : vector<2x1xi1> to vector<2x32xi1>
      %251 = arith.select %250, %245, %204 : vector<2x32xi1>, vector<2x32xf32>
      %cst_64 = arith.constant 0.000000e+00 : f32
      %252 = vector.shape_cast %248 : vector<2x1xi1> to vector<2x1xi1>
      %253 = vector.broadcast %252 : vector<2x1xi1> to vector<2x32xi1>
      %254 = vector.broadcast %cst_64 : f32 to vector<2x32xf32>
      %255 = arith.select %253, %251, %254 : vector<2x32xi1>, vector<2x32xf32>
      %c0_65 = arith.constant 0 : index
      %256 = arith.index_cast %c4_i32 : i32 to index
      %c0_66 = arith.constant 0 : index
      %257 = vector.load %arg8[%c0_65, %256, %c0_66] : memref<2x8x32xf32, #tpu.memory_space<vmem>>, vector<2x1x32xf32>
      %258 = vector.shape_cast %257 : vector<2x1x32xf32> to vector<2x32xf32>
      %259 = vector.shape_cast %255 : vector<2x32xf32> to vector<2x1x32xf32>
      tpu.vector_store %arg8[%c0_65, %256, %c0_66], %259 {strides = array<i32>} : memref<2x8x32xf32, #tpu.memory_space<vmem>>, vector<2x1x32xf32>,
      %c5_i32 = arith.constant 5 : i32
      %c0_67 = arith.constant 0 : index
      %260 = arith.index_cast %c5_i32 : i32 to index
      %c0_68 = arith.constant 0 : index
      %261 = vector.load %arg9[%c0_67, %260, %c0_68] : memref<2x8x96xf32, #tpu.memory_space<vmem>>, vector<2x1x96xf32>
      %262 = vector.shape_cast %261 : vector<2x1x96xf32> to vector<2x96xf32>
      %263 = arith.truncf %251 : vector<2x32xf32> to vector<2x32xbf16>
      %cst_69 = arith.constant dense<0.000000e+00> : vector<2x96xf32>
      %264 = tpu.matmul %263, %13, %cst_69 {dimension_numbers = #tpu.dot_dimension_numbers<[1], [0], [0], [1], [0, 0, 1, 1], [], []>} : vector<2x32xbf16>, vector<32x96xbf16>, vector<2x96xf32> -> vector<2x96xf32>
      %265 = vector.broadcast %14 : vector<1x96xf32> to vector<2x96xf32>
      %266 = arith.addf %264, %265 : vector<2x96xf32>
      %267 = vector.extract_strided_slice %262 {offsets = [0, 0], sizes = [2, 32], strides = [1, 1]} : vector<2x96xf32> to vector<2x32xf32>
      %268 = vector.extract_strided_slice %266 {offsets = [0, 0], sizes = [2, 32], strides = [1, 1]} : vector<2x96xf32> to vector<2x32xf32>
      %269 = arith.addf %267, %268 : vector<2x32xf32>
      %270 = arith.negf %269 : vector<2x32xf32>
      %271 = math.exp %270 : vector<2x32xf32>
      %cst_70 = arith.constant 1.000000e+00 : f32
      %272 = vector.broadcast %cst_70 : f32 to vector<2x32xf32>
      %273 = arith.addf %272, %271 : vector<2x32xf32>
      %274 = arith.divf %272, %273 : vector<2x32xf32>
      %275 = vector.extract_strided_slice %262 {offsets = [0, 32], sizes = [2, 32], strides = [1, 1]} : vector<2x96xf32> to vector<2x32xf32>
      %276 = vector.extract_strided_slice %266 {offsets = [0, 32], sizes = [2, 32], strides = [1, 1]} : vector<2x96xf32> to vector<2x32xf32>
      %277 = arith.addf %275, %276 : vector<2x32xf32>
      %278 = arith.negf %277 : vector<2x32xf32>
      %279 = math.exp %278 : vector<2x32xf32>
      %cst_71 = arith.constant 1.000000e+00 : f32
      %280 = vector.broadcast %cst_71 : f32 to vector<2x32xf32>
      %281 = arith.addf %280, %279 : vector<2x32xf32>
      %282 = arith.divf %280, %281 : vector<2x32xf32>
      %283 = vector.extract_strided_slice %262 {offsets = [0, 64], sizes = [2, 32], strides = [1, 1]} : vector<2x96xf32> to vector<2x32xf32>
      %284 = vector.extract_strided_slice %266 {offsets = [0, 64], sizes = [2, 32], strides = [1, 1]} : vector<2x96xf32> to vector<2x32xf32>
      %285 = arith.mulf %274, %284 : vector<2x32xf32>
      %286 = arith.addf %283, %285 : vector<2x32xf32>
      %287 = math.tanh %286 : vector<2x32xf32>
      %cst_72 = arith.constant 1.000000e+00 : f32
      %288 = vector.broadcast %cst_72 : f32 to vector<2x32xf32>
      %289 = arith.subf %288, %282 : vector<2x32xf32>
      %290 = arith.mulf %289, %287 : vector<2x32xf32>
      %291 = arith.mulf %282, %251 : vector<2x32xf32>
      %292 = arith.addf %290, %291 : vector<2x32xf32>
      %293 = arith.addi %0, %c5_i32 : i32
      %294 = vector.broadcast %293 : i32 to vector<2x1xi32>
      %295 = arith.cmpi slt, %294, %15 : vector<2x1xi32>
      %296 = vector.shape_cast %295 : vector<2x1xi1> to vector<2x1xi1>
      %297 = vector.broadcast %296 : vector<2x1xi1> to vector<2x32xi1>
      %298 = arith.select %297, %292, %251 : vector<2x32xi1>, vector<2x32xf32>
      %cst_73 = arith.constant 0.000000e+00 : f32
      %299 = vector.shape_cast %295 : vector<2x1xi1> to vector<2x1xi1>
      %300 = vector.broadcast %299 : vector<2x1xi1> to vector<2x32xi1>
      %301 = vector.broadcast %cst_73 : f32 to vector<2x32xf32>
      %302 = arith.select %300, %298, %301 : vector<2x32xi1>, vector<2x32xf32>
      %c0_74 = arith.constant 0 : index
      %303 = arith.index_cast %c5_i32 : i32 to index
      %c0_75 = arith.constant 0 : index
      %304 = vector.load %arg8[%c0_74, %303, %c0_75] : memref<2x8x32xf32, #tpu.memory_space<vmem>>, vector<2x1x32xf32>
      %305 = vector.shape_cast %304 : vector<2x1x32xf32> to vector<2x32xf32>
      %306 = vector.shape_cast %302 : vector<2x32xf32> to vector<2x1x32xf32>
      tpu.vector_store %arg8[%c0_74, %303, %c0_75], %306 {strides = array<i32>} : memref<2x8x32xf32, #tpu.memory_space<vmem>>, vector<2x1x32xf32>,
      %c6_i32 = arith.constant 6 : i32
      %c0_76 = arith.constant 0 : index
      %307 = arith.index_cast %c6_i32 : i32 to index
      %c0_77 = arith.constant 0 : index
      %308 = vector.load %arg9[%c0_76, %307, %c0_77] : memref<2x8x96xf32, #tpu.memory_space<vmem>>, vector<2x1x96xf32>
      %309 = vector.shape_cast %308 : vector<2x1x96xf32> to vector<2x96xf32>
      %310 = arith.truncf %298 : vector<2x32xf32> to vector<2x32xbf16>
      %cst_78 = arith.constant dense<0.000000e+00> : vector<2x96xf32>
      %311 = tpu.matmul %310, %13, %cst_78 {dimension_numbers = #tpu.dot_dimension_numbers<[1], [0], [0], [1], [0, 0, 1, 1], [], []>} : vector<2x32xbf16>, vector<32x96xbf16>, vector<2x96xf32> -> vector<2x96xf32>
      %312 = vector.broadcast %14 : vector<1x96xf32> to vector<2x96xf32>
      %313 = arith.addf %311, %312 : vector<2x96xf32>
      %314 = vector.extract_strided_slice %309 {offsets = [0, 0], sizes = [2, 32], strides = [1, 1]} : vector<2x96xf32> to vector<2x32xf32>
      %315 = vector.extract_strided_slice %313 {offsets = [0, 0], sizes = [2, 32], strides = [1, 1]} : vector<2x96xf32> to vector<2x32xf32>
      %316 = arith.addf %314, %315 : vector<2x32xf32>
      %317 = arith.negf %316 : vector<2x32xf32>
      %318 = math.exp %317 : vector<2x32xf32>
      %cst_79 = arith.constant 1.000000e+00 : f32
      %319 = vector.broadcast %cst_79 : f32 to vector<2x32xf32>
      %320 = arith.addf %319, %318 : vector<2x32xf32>
      %321 = arith.divf %319, %320 : vector<2x32xf32>
      %322 = vector.extract_strided_slice %309 {offsets = [0, 32], sizes = [2, 32], strides = [1, 1]} : vector<2x96xf32> to vector<2x32xf32>
      %323 = vector.extract_strided_slice %313 {offsets = [0, 32], sizes = [2, 32], strides = [1, 1]} : vector<2x96xf32> to vector<2x32xf32>
      %324 = arith.addf %322, %323 : vector<2x32xf32>
      %325 = arith.negf %324 : vector<2x32xf32>
      %326 = math.exp %325 : vector<2x32xf32>
      %cst_80 = arith.constant 1.000000e+00 : f32
      %327 = vector.broadcast %cst_80 : f32 to vector<2x32xf32>
      %328 = arith.addf %327, %326 : vector<2x32xf32>
      %329 = arith.divf %327, %328 : vector<2x32xf32>
      %330 = vector.extract_strided_slice %309 {offsets = [0, 64], sizes = [2, 32], strides = [1, 1]} : vector<2x96xf32> to vector<2x32xf32>
      %331 = vector.extract_strided_slice %313 {offsets = [0, 64], sizes = [2, 32], strides = [1, 1]} : vector<2x96xf32> to vector<2x32xf32>
      %332 = arith.mulf %321, %331 : vector<2x32xf32>
      %333 = arith.addf %330, %332 : vector<2x32xf32>
      %334 = math.tanh %333 : vector<2x32xf32>
      %cst_81 = arith.constant 1.000000e+00 : f32
      %335 = vector.broadcast %cst_81 : f32 to vector<2x32xf32>
      %336 = arith.subf %335, %329 : vector<2x32xf32>
      %337 = arith.mulf %336, %334 : vector<2x32xf32>
      %338 = arith.mulf %329, %298 : vector<2x32xf32>
      %339 = arith.addf %337, %338 : vector<2x32xf32>
      %340 = arith.addi %0, %c6_i32 : i32
      %341 = vector.broadcast %340 : i32 to vector<2x1xi32>
      %342 = arith.cmpi slt, %341, %15 : vector<2x1xi32>
      %343 = vector.shape_cast %342 : vector<2x1xi1> to vector<2x1xi1>
      %344 = vector.broadcast %343 : vector<2x1xi1> to vector<2x32xi1>
      %345 = arith.select %344, %339, %298 : vector<2x32xi1>, vector<2x32xf32>
      %cst_82 = arith.constant 0.000000e+00 : f32
      %346 = vector.shape_cast %342 : vector<2x1xi1> to vector<2x1xi1>
      %347 = vector.broadcast %346 : vector<2x1xi1> to vector<2x32xi1>
      %348 = vector.broadcast %cst_82 : f32 to vector<2x32xf32>
      %349 = arith.select %347, %345, %348 : vector<2x32xi1>, vector<2x32xf32>
      %c0_83 = arith.constant 0 : index
      %350 = arith.index_cast %c6_i32 : i32 to index
      %c0_84 = arith.constant 0 : index
      %351 = vector.load %arg8[%c0_83, %350, %c0_84] : memref<2x8x32xf32, #tpu.memory_space<vmem>>, vector<2x1x32xf32>
      %352 = vector.shape_cast %351 : vector<2x1x32xf32> to vector<2x32xf32>
      %353 = vector.shape_cast %349 : vector<2x32xf32> to vector<2x1x32xf32>
      tpu.vector_store %arg8[%c0_83, %350, %c0_84], %353 {strides = array<i32>} : memref<2x8x32xf32, #tpu.memory_space<vmem>>, vector<2x1x32xf32>,
      %c7_i32 = arith.constant 7 : i32
      %c0_85 = arith.constant 0 : index
      %354 = arith.index_cast %c7_i32 : i32 to index
      %c0_86 = arith.constant 0 : index
      %355 = vector.load %arg9[%c0_85, %354, %c0_86] : memref<2x8x96xf32, #tpu.memory_space<vmem>>, vector<2x1x96xf32>
      %356 = vector.shape_cast %355 : vector<2x1x96xf32> to vector<2x96xf32>
      %357 = arith.truncf %345 : vector<2x32xf32> to vector<2x32xbf16>
      %cst_87 = arith.constant dense<0.000000e+00> : vector<2x96xf32>
      %358 = tpu.matmul %357, %13, %cst_87 {dimension_numbers = #tpu.dot_dimension_numbers<[1], [0], [0], [1], [0, 0, 1, 1], [], []>} : vector<2x32xbf16>, vector<32x96xbf16>, vector<2x96xf32> -> vector<2x96xf32>
      %359 = vector.broadcast %14 : vector<1x96xf32> to vector<2x96xf32>
      %360 = arith.addf %358, %359 : vector<2x96xf32>
      %361 = vector.extract_strided_slice %356 {offsets = [0, 0], sizes = [2, 32], strides = [1, 1]} : vector<2x96xf32> to vector<2x32xf32>
      %362 = vector.extract_strided_slice %360 {offsets = [0, 0], sizes = [2, 32], strides = [1, 1]} : vector<2x96xf32> to vector<2x32xf32>
      %363 = arith.addf %361, %362 : vector<2x32xf32>
      %364 = arith.negf %363 : vector<2x32xf32>
      %365 = math.exp %364 : vector<2x32xf32>
      %cst_88 = arith.constant 1.000000e+00 : f32
      %366 = vector.broadcast %cst_88 : f32 to vector<2x32xf32>
      %367 = arith.addf %366, %365 : vector<2x32xf32>
      %368 = arith.divf %366, %367 : vector<2x32xf32>
      %369 = vector.extract_strided_slice %356 {offsets = [0, 32], sizes = [2, 32], strides = [1, 1]} : vector<2x96xf32> to vector<2x32xf32>
      %370 = vector.extract_strided_slice %360 {offsets = [0, 32], sizes = [2, 32], strides = [1, 1]} : vector<2x96xf32> to vector<2x32xf32>
      %371 = arith.addf %369, %370 : vector<2x32xf32>
      %372 = arith.negf %371 : vector<2x32xf32>
      %373 = math.exp %372 : vector<2x32xf32>
      %cst_89 = arith.constant 1.000000e+00 : f32
      %374 = vector.broadcast %cst_89 : f32 to vector<2x32xf32>
      %375 = arith.addf %374, %373 : vector<2x32xf32>
      %376 = arith.divf %374, %375 : vector<2x32xf32>
      %377 = vector.extract_strided_slice %356 {offsets = [0, 64], sizes = [2, 32], strides = [1, 1]} : vector<2x96xf32> to vector<2x32xf32>
      %378 = vector.extract_strided_slice %360 {offsets = [0, 64], sizes = [2, 32], strides = [1, 1]} : vector<2x96xf32> to vector<2x32xf32>
      %379 = arith.mulf %368, %378 : vector<2x32xf32>
      %380 = arith.addf %377, %379 : vector<2x32xf32>
      %381 = math.tanh %380 : vector<2x32xf32>
      %cst_90 = arith.constant 1.000000e+00 : f32
      %382 = vector.broadcast %cst_90 : f32 to vector<2x32xf32>
      %383 = arith.subf %382, %376 : vector<2x32xf32>
      %384 = arith.mulf %383, %381 : vector<2x32xf32>
      %385 = arith.mulf %376, %345 : vector<2x32xf32>
      %386 = arith.addf %384, %385 : vector<2x32xf32>
      %387 = arith.addi %0, %c7_i32 : i32
      %388 = vector.broadcast %387 : i32 to vector<2x1xi32>
      %389 = arith.cmpi slt, %388, %15 : vector<2x1xi32>
      %390 = vector.shape_cast %389 : vector<2x1xi1> to vector<2x1xi1>
      %391 = vector.broadcast %390 : vector<2x1xi1> to vector<2x32xi1>
      %392 = arith.select %391, %386, %345 : vector<2x32xi1>, vector<2x32xf32>
      %cst_91 = arith.constant 0.000000e+00 : f32
      %393 = vector.shape_cast %389 : vector<2x1xi1> to vector<2x1xi1>
      %394 = vector.broadcast %393 : vector<2x1xi1> to vector<2x32xi1>
      %395 = vector.broadcast %cst_91 : f32 to vector<2x32xf32>
      %396 = arith.select %394, %392, %395 : vector<2x32xi1>, vector<2x32xf32>
      %c0_92 = arith.constant 0 : index
      %397 = arith.index_cast %c7_i32 : i32 to index
      %c0_93 = arith.constant 0 : index
      %398 = vector.load %arg8[%c0_92, %397, %c0_93] : memref<2x8x32xf32, #tpu.memory_space<vmem>>, vector<2x1x32xf32>
      %399 = vector.shape_cast %398 : vector<2x1x32xf32> to vector<2x32xf32>
      %400 = vector.shape_cast %396 : vector<2x32xf32> to vector<2x1x32xf32>
      tpu.vector_store %arg8[%c0_92, %397, %c0_93], %400 {strides = array<i32>} : memref<2x8x32xf32, #tpu.memory_space<vmem>>, vector<2x1x32xf32>,
      %c8_i32_94 = arith.constant 8 : i32
      %c0_95 = arith.constant 0 : index
      %c0_96 = arith.constant 0 : index
      %401 = vector.load %arg10[%c0_95, %c0_96] : memref<2x32xf32, #tpu.memory_space<vmem>>, vector<2x32xf32>
      tpu.vector_store %arg10[%c0_95, %c0_96], %392 {strides = array<i32>} : memref<2x32xf32, #tpu.memory_space<vmem>>, vector<2x32xf32>,
    } else {
    }
    return
  }
  func.func @transform_0(%arg0: i32, %arg1: memref<1xi32, #tpu.memory_space<smem>>) -> (i32, i32, i32) {
    %c0_i32 = arith.constant 0 : i32
    %c0_i32_0 = arith.constant 0 : i32
    %c0_i32_1 = arith.constant 0 : i32
    return %c0_i32, %arg0, %c0_i32_0 : i32, i32, i32
  }
  func.func @transform_1(%arg0: i32, %arg1: memref<1xi32, #tpu.memory_space<smem>>) -> (i32, i32) {
    %c0_i32 = arith.constant 0 : i32
    %c0_i32_0 = arith.constant 0 : i32
    %c0_i32_1 = arith.constant 0 : i32
    return %c0_i32, %c0_i32_0 : i32, i32
  }
  func.func @transform_2(%arg0: i32, %arg1: memref<1xi32, #tpu.memory_space<smem>>) -> (i32, i32) {
    %c0_i32 = arith.constant 0 : i32
    %c0_i32_0 = arith.constant 0 : i32
    %c0_i32_1 = arith.constant 0 : i32
    return %c0_i32, %c0_i32_0 : i32, i32
  }
  func.func @transform_3(%arg0: i32, %arg1: memref<1xi32, #tpu.memory_space<smem>>) -> (i32, i32) {
    %c0_i32 = arith.constant 0 : i32
    %c0_i32_0 = arith.constant 0 : i32
    %c0_i32_1 = arith.constant 0 : i32
    return %c0_i32, %c0_i32_0 : i32, i32
  }
  func.func @transform_4(%arg0: i32, %arg1: memref<1xi32, #tpu.memory_space<smem>>) -> (i32, i32) {
    %c0_i32 = arith.constant 0 : i32
    %c0_i32_0 = arith.constant 0 : i32
    %c0_i32_1 = arith.constant 0 : i32
    return %c0_i32, %c0_i32_0 : i32, i32
  }
  func.func @transform_5(%arg0: i32, %arg1: memref<1xi32, #tpu.memory_space<smem>>) -> (i32, i32) {
    %c0_i32 = arith.constant 0 : i32
    %c0_i32_0 = arith.constant 0 : i32
    %c0_i32_1 = arith.constant 0 : i32
    return %c0_i32, %c0_i32_0 : i32, i32
  }
  func.func @transform_6(%arg0: i32, %arg1: memref<1xi32, #tpu.memory_space<smem>>) -> (i32, i32, i32) {
    %c0_i32 = arith.constant 0 : i32
    %c0_i32_0 = arith.constant 0 : i32
    %c0_i32_1 = arith.constant 0 : i32
    return %c0_i32, %arg0, %c0_i32_0 : i32, i32, i32
  }
}

module attributes {stable_mosaic.version = 11 : i64} {
  func.func @_gru_kernel(%arg0: i32, %arg1: memref<1xi32, #tpu.memory_space<smem>>, %arg2: memref<2x8x32xf32, #tpu.memory_space<vmem>>, %arg3: memref<32x96xbf16, #tpu.memory_space<vmem>>, %arg4: memref<1x96xf32, #tpu.memory_space<vmem>>, %arg5: memref<32x96xbf16, #tpu.memory_space<vmem>>, %arg6: memref<1x96xf32, #tpu.memory_space<vmem>>, %arg7: memref<2x1xi32, #tpu.memory_space<vmem>>, %arg8: memref<2x8x32xf32, #tpu.memory_space<vmem>>, %arg9: memref<2x8x96xf32, #tpu.memory_space<vmem>>, %arg10: memref<2x32xf32, #tpu.memory_space<vmem>>) attributes {dimension_semantics = [#tpu.dimension_semantics<arbitrary>], iteration_bounds = array<i64: 1>, scalar_prefetch = 1 : i64, scratch_operands = 2 : i64, tpu.core_type = #tpu.core_type<tc>, window_params = [{transform_indices = @transform_0, window_bounds = array<i64: 2, 8, 32>}, {pipeline_mode = #tpu.pipeline_mode<synchronous>, transform_indices = @transform_1, window_bounds = array<i64: 32, 96>}, {pipeline_mode = #tpu.pipeline_mode<synchronous>, transform_indices = @transform_2, window_bounds = array<i64: 1, 96>}, {pipeline_mode = #tpu.pipeline_mode<synchronous>, transform_indices = @transform_3, window_bounds = array<i64: 32, 96>}, {pipeline_mode = #tpu.pipeline_mode<synchronous>, transform_indices = @transform_4, window_bounds = array<i64: 1, 96>}, {pipeline_mode = #tpu.pipeline_mode<synchronous>, transform_indices = @transform_5, window_bounds = array<i64: 2, 1>}, {transform_indices = @transform_6, window_bounds = array<i64: 2, 8, 32>}]} {
    %c8_i32 = arith.constant 8 : i32
    %0 = arith.muli %arg0, %c8_i32 : i32
    %c0 = arith.constant 0 : index
    %1 = memref.load %arg1[%c0] : memref<1xi32, #tpu.memory_space<smem>>
    %c0_i32 = arith.constant 0 : i32
    %2 = arith.cmpi eq, %arg0, %c0_i32 : i32
    %3 = arith.extui %2 : i1 to i32
    %c0_i32_0 = arith.constant 0 : i32
    %4 = arith.cmpi ne, %3, %c0_i32_0 : i32
    scf.if %4 {
      %cst = arith.constant 0.000000e+00 : f32
      %11 = vector.broadcast %cst : f32 to vector<2x32xf32>
      %c0_3 = arith.constant 0 : index
      %c0_4 = arith.constant 0 : index
      %12 = vector.load %arg10[%c0_3, %c0_4] : memref<2x32xf32, #tpu.memory_space<vmem>>, vector<2x32xf32>
      tpu.vector_store %arg10[%c0_3, %c0_4], %11 {strides = array<i32>} : memref<2x32xf32, #tpu.memory_space<vmem>>, vector<2x32xf32>,
    } else {
    }
    %5 = arith.cmpi sge, %0, %1 : i32
    %6 = arith.extui %5 : i1 to i32
    %c0_i32_1 = arith.constant 0 : i32
    %7 = arith.cmpi ne, %6, %c0_i32_1 : i32
    scf.if %7 {
      %cst = arith.constant 0.000000e+00 : f32
      %11 = vector.broadcast %cst : f32 to vector<2x8x32xf32>
      %c0_3 = arith.constant 0 : index
      %c0_4 = arith.constant 0 : index
      %c0_5 = arith.constant 0 : index
      %12 = vector.load %arg8[%c0_3, %c0_4, %c0_5] : memref<2x8x32xf32, #tpu.memory_space<vmem>>, vector<2x8x32xf32>
      tpu.vector_store %arg8[%c0_3, %c0_4, %c0_5], %11 {strides = array<i32>} : memref<2x8x32xf32, #tpu.memory_space<vmem>>, vector<2x8x32xf32>,
    } else {
    }
    %8 = arith.cmpi slt, %0, %1 : i32
    %9 = arith.extui %8 : i1 to i32
    %c0_i32_2 = arith.constant 0 : i32
    %10 = arith.cmpi ne, %9, %c0_i32_2 : i32
    scf.if %10 {
      %c0_3 = arith.constant 0 : index
      %c0_4 = arith.constant 0 : index
      %11 = vector.load %arg3[%c0_3, %c0_4] : memref<32x96xbf16, #tpu.memory_space<vmem>>, vector<32x96xbf16>
      %c0_5 = arith.constant 0 : index
      %c0_6 = arith.constant 0 : index
      %12 = vector.load %arg4[%c0_5, %c0_6] : memref<1x96xf32, #tpu.memory_space<vmem>>, vector<1x96xf32>
      %c0_7 = arith.constant 0 : index
      %c0_8 = arith.constant 0 : index
      %13 = vector.load %arg5[%c0_7, %c0_8] : memref<32x96xbf16, #tpu.memory_space<vmem>>, vector<32x96xbf16>
      %c0_9 = arith.constant 0 : index
      %c0_10 = arith.constant 0 : index
      %14 = vector.load %arg6[%c0_9, %c0_10] : memref<1x96xf32, #tpu.memory_space<vmem>>, vector<1x96xf32>
      %c0_11 = arith.constant 0 : index
      %c0_12 = arith.constant 0 : index
      %15 = vector.load %arg7[%c0_11, %c0_12] : memref<2x1xi32, #tpu.memory_space<vmem>>, vector<2x1xi32>
      %c0_13 = arith.constant 0 : index
      %c0_14 = arith.constant 0 : index
      %c0_15 = arith.constant 0 : index
      %16 = vector.load %arg2[%c0_13, %c0_14, %c0_15] : memref<2x8x32xf32, #tpu.memory_space<vmem>>, vector<2x8x32xf32>
      %17 = vector.shape_cast %16 : vector<2x8x32xf32> to vector<16x32xf32>
      %18 = arith.truncf %17 : vector<16x32xf32> to vector<16x32xbf16>
      %cst = arith.constant dense<0.000000e+00> : vector<16x96xf32>
      %19 = tpu.matmul %18, %11, %cst {dimension_numbers = #tpu.dot_dimension_numbers<[1], [0], [0], [1], [0, 0, 1, 1], [], []>} : vector<16x32xbf16>, vector<32x96xbf16>, vector<16x96xf32> -> vector<16x96xf32>
      %20 = vector.broadcast %12 : vector<1x96xf32> to vector<16x96xf32>
      %21 = arith.addf %19, %20 : vector<16x96xf32>
      %22 = vector.shape_cast %21 : vector<16x96xf32> to vector<2x8x96xf32>
      %c0_16 = arith.constant 0 : index
      %c0_17 = arith.constant 0 : index
      %c0_18 = arith.constant 0 : index
      %23 = vector.load %arg9[%c0_16, %c0_17, %c0_18] : memref<2x8x96xf32, #tpu.memory_space<vmem>>, vector<2x8x96xf32>
      tpu.vector_store %arg9[%c0_16, %c0_17, %c0_18], %22 {strides = array<i32>} : memref<2x8x96xf32, #tpu.memory_space<vmem>>, vector<2x8x96xf32>,
      %c0_19 = arith.constant 0 : index
      %c0_20 = arith.constant 0 : index
      %24 = vector.load %arg10[%c0_19, %c0_20] : memref<2x32xf32, #tpu.memory_space<vmem>>, vector<2x32xf32>
      %c0_i32_21 = arith.constant 0 : i32
      %c0_22 = arith.constant 0 : index
      %25 = arith.index_cast %c0_i32_21 : i32 to index
      %c0_23 = arith.constant 0 : index
      %26 = vector.load %arg9[%c0_22, %25, %c0_23] : memref<2x8x96xf32, #tpu.memory_space<vmem>>, vector<2x1x96xf32>
      %27 = vector.shape_cast %26 : vector<2x1x96xf32> to vector<2x96xf32>
      %28 = arith.truncf %24 : vector<2x32xf32> to vector<2x32xbf16>
      %cst_24 = arith.constant dense<0.000000e+00> : vector<2x96xf32>
      %29 = tpu.matmul %28, %13, %cst_24 {dimension_numbers = #tpu.dot_dimension_numbers<[1], [0], [0], [1], [0, 0, 1, 1], [], []>} : vector<2x32xbf16>, vector<32x96xbf16>, vector<2x96xf32> -> vector<2x96xf32>
      %30 = vector.broadcast %14 : vector<1x96xf32> to vector<2x96xf32>
      %31 = arith.addf %29, %30 : vector<2x96xf32>
      %32 = vector.extract_strided_slice %27 {offsets = [0, 0], sizes = [2, 32], strides = [1, 1]} : vector<2x96xf32> to vector<2x32xf32>
      %33 = vector.extract_strided_slice %31 {offsets = [0, 0], sizes = [2, 32], strides = [1, 1]} : vector<2x96xf32> to vector<2x32xf32>
      %34 = arith.addf %32, %33 : vector<2x32xf32>
      %35 = arith.negf %34 : vector<2x32xf32>
      %36 = math.exp %35 : vector<2x32xf32>
      %cst_25 = arith.constant 1.000000e+00 : f32
      %37 = vector.broadcast %cst_25 : f32 to vector<2x32xf32>
      %38 = arith.addf %37, %36 : vector<2x32xf32>
      %39 = arith.divf %37, %38 : vector<2x32xf32>
      %40 = vector.extract_strided_slice %27 {offsets = [0, 32], sizes = [2, 32], strides = [1, 1]} : vector<2x96xf32> to vector<2x32xf32>
      %41 = vector.extract_strided_slice %31 {offsets = [0, 32], sizes = [2, 32], strides = [1, 1]} : vector<2x96xf32> to vector<2x32xf32>
      %42 = arith.addf %40, %41 : vector<2x32xf32>
      %43 = arith.negf %42 : vector<2x32xf32>
      %44 = math.exp %43 : vector<2x32xf32>
      %cst_26 = arith.constant 1.000000e+00 : f32
      %45 = vector.broadcast %cst_26 : f32 to vector<2x32xf32>
      %46 = arith.addf %45, %44 : vector<2x32xf32>
      %47 = arith.divf %45, %46 : vector<2x32xf32>
      %48 = vector.extract_strided_slice %27 {offsets = [0, 64], sizes = [2, 32], strides = [1, 1]} : vector<2x96xf32> to vector<2x32xf32>
      %49 = vector.extract_strided_slice %31 {offsets = [0, 64], sizes = [2, 32], strides = [1, 1]} : vector<2x96xf32> to vector<2x32xf32>
      %50 = arith.mulf %39, %49 : vector<2x32xf32>
      %51 = arith.addf %48, %50 : vector<2x32xf32>
      %52 = math.tanh %51 : vector<2x32xf32>
      %cst_27 = arith.constant 1.000000e+00 : f32
      %53 = vector.broadcast %cst_27 : f32 to vector<2x32xf32>
      %54 = arith.subf %53, %47 : vector<2x32xf32>
      %55 = arith.mulf %54, %52 : vector<2x32xf32>
      %56 = arith.mulf %47, %24 : vector<2x32xf32>
      %57 = arith.addf %55, %56 : vector<2x32xf32>
      %58 = arith.addi %0, %c0_i32_21 : i32
      %59 = vector.broadcast %58 : i32 to vector<2x1xi32>
      %60 = arith.cmpi slt, %59, %15 : vector<2x1xi32>
      %61 = vector.shape_cast %60 : vector<2x1xi1> to vector<2x1xi1>
      %62 = vector.broadcast %61 : vector<2x1xi1> to vector<2x32xi1>
      %63 = arith.select %62, %57, %24 : vector<2x32xi1>, vector<2x32xf32>
      %c0_28 = arith.constant 0 : index
      %64 = arith.index_cast %c0_i32_21 : i32 to index
      %c0_29 = arith.constant 0 : index
      %65 = vector.load %arg2[%c0_28, %64, %c0_29] : memref<2x8x32xf32, #tpu.memory_space<vmem>>, vector<2x1x32xf32>
      %66 = vector.shape_cast %65 : vector<2x1x32xf32> to vector<2x32xf32>
      %67 = arith.addf %63, %66 : vector<2x32xf32>
      %cst_30 = arith.constant 0.000000e+00 : f32
      %68 = vector.shape_cast %60 : vector<2x1xi1> to vector<2x1xi1>
      %69 = vector.broadcast %68 : vector<2x1xi1> to vector<2x32xi1>
      %70 = vector.broadcast %cst_30 : f32 to vector<2x32xf32>
      %71 = arith.select %69, %67, %70 : vector<2x32xi1>, vector<2x32xf32>
      %c0_31 = arith.constant 0 : index
      %72 = arith.index_cast %c0_i32_21 : i32 to index
      %c0_32 = arith.constant 0 : index
      %73 = vector.load %arg8[%c0_31, %72, %c0_32] : memref<2x8x32xf32, #tpu.memory_space<vmem>>, vector<2x1x32xf32>
      %74 = vector.shape_cast %73 : vector<2x1x32xf32> to vector<2x32xf32>
      %75 = vector.shape_cast %71 : vector<2x32xf32> to vector<2x1x32xf32>
      tpu.vector_store %arg8[%c0_31, %72, %c0_32], %75 {strides = array<i32>} : memref<2x8x32xf32, #tpu.memory_space<vmem>>, vector<2x1x32xf32>,
      %c1_i32 = arith.constant 1 : i32
      %c0_33 = arith.constant 0 : index
      %76 = arith.index_cast %c1_i32 : i32 to index
      %c0_34 = arith.constant 0 : index
      %77 = vector.load %arg9[%c0_33, %76, %c0_34] : memref<2x8x96xf32, #tpu.memory_space<vmem>>, vector<2x1x96xf32>
      %78 = vector.shape_cast %77 : vector<2x1x96xf32> to vector<2x96xf32>
      %79 = arith.truncf %63 : vector<2x32xf32> to vector<2x32xbf16>
      %cst_35 = arith.constant dense<0.000000e+00> : vector<2x96xf32>
      %80 = tpu.matmul %79, %13, %cst_35 {dimension_numbers = #tpu.dot_dimension_numbers<[1], [0], [0], [1], [0, 0, 1, 1], [], []>} : vector<2x32xbf16>, vector<32x96xbf16>, vector<2x96xf32> -> vector<2x96xf32>
      %81 = vector.broadcast %14 : vector<1x96xf32> to vector<2x96xf32>
      %82 = arith.addf %80, %81 : vector<2x96xf32>
      %83 = vector.extract_strided_slice %78 {offsets = [0, 0], sizes = [2, 32], strides = [1, 1]} : vector<2x96xf32> to vector<2x32xf32>
      %84 = vector.extract_strided_slice %82 {offsets = [0, 0], sizes = [2, 32], strides = [1, 1]} : vector<2x96xf32> to vector<2x32xf32>
      %85 = arith.addf %83, %84 : vector<2x32xf32>
      %86 = arith.negf %85 : vector<2x32xf32>
      %87 = math.exp %86 : vector<2x32xf32>
      %cst_36 = arith.constant 1.000000e+00 : f32
      %88 = vector.broadcast %cst_36 : f32 to vector<2x32xf32>
      %89 = arith.addf %88, %87 : vector<2x32xf32>
      %90 = arith.divf %88, %89 : vector<2x32xf32>
      %91 = vector.extract_strided_slice %78 {offsets = [0, 32], sizes = [2, 32], strides = [1, 1]} : vector<2x96xf32> to vector<2x32xf32>
      %92 = vector.extract_strided_slice %82 {offsets = [0, 32], sizes = [2, 32], strides = [1, 1]} : vector<2x96xf32> to vector<2x32xf32>
      %93 = arith.addf %91, %92 : vector<2x32xf32>
      %94 = arith.negf %93 : vector<2x32xf32>
      %95 = math.exp %94 : vector<2x32xf32>
      %cst_37 = arith.constant 1.000000e+00 : f32
      %96 = vector.broadcast %cst_37 : f32 to vector<2x32xf32>
      %97 = arith.addf %96, %95 : vector<2x32xf32>
      %98 = arith.divf %96, %97 : vector<2x32xf32>
      %99 = vector.extract_strided_slice %78 {offsets = [0, 64], sizes = [2, 32], strides = [1, 1]} : vector<2x96xf32> to vector<2x32xf32>
      %100 = vector.extract_strided_slice %82 {offsets = [0, 64], sizes = [2, 32], strides = [1, 1]} : vector<2x96xf32> to vector<2x32xf32>
      %101 = arith.mulf %90, %100 : vector<2x32xf32>
      %102 = arith.addf %99, %101 : vector<2x32xf32>
      %103 = math.tanh %102 : vector<2x32xf32>
      %cst_38 = arith.constant 1.000000e+00 : f32
      %104 = vector.broadcast %cst_38 : f32 to vector<2x32xf32>
      %105 = arith.subf %104, %98 : vector<2x32xf32>
      %106 = arith.mulf %105, %103 : vector<2x32xf32>
      %107 = arith.mulf %98, %63 : vector<2x32xf32>
      %108 = arith.addf %106, %107 : vector<2x32xf32>
      %109 = arith.addi %0, %c1_i32 : i32
      %110 = vector.broadcast %109 : i32 to vector<2x1xi32>
      %111 = arith.cmpi slt, %110, %15 : vector<2x1xi32>
      %112 = vector.shape_cast %111 : vector<2x1xi1> to vector<2x1xi1>
      %113 = vector.broadcast %112 : vector<2x1xi1> to vector<2x32xi1>
      %114 = arith.select %113, %108, %63 : vector<2x32xi1>, vector<2x32xf32>
      %c0_39 = arith.constant 0 : index
      %115 = arith.index_cast %c1_i32 : i32 to index
      %c0_40 = arith.constant 0 : index
      %116 = vector.load %arg2[%c0_39, %115, %c0_40] : memref<2x8x32xf32, #tpu.memory_space<vmem>>, vector<2x1x32xf32>
      %117 = vector.shape_cast %116 : vector<2x1x32xf32> to vector<2x32xf32>
      %118 = arith.addf %114, %117 : vector<2x32xf32>
      %cst_41 = arith.constant 0.000000e+00 : f32
      %119 = vector.shape_cast %111 : vector<2x1xi1> to vector<2x1xi1>
      %120 = vector.broadcast %119 : vector<2x1xi1> to vector<2x32xi1>
      %121 = vector.broadcast %cst_41 : f32 to vector<2x32xf32>
      %122 = arith.select %120, %118, %121 : vector<2x32xi1>, vector<2x32xf32>
      %c0_42 = arith.constant 0 : index
      %123 = arith.index_cast %c1_i32 : i32 to index
      %c0_43 = arith.constant 0 : index
      %124 = vector.load %arg8[%c0_42, %123, %c0_43] : memref<2x8x32xf32, #tpu.memory_space<vmem>>, vector<2x1x32xf32>
      %125 = vector.shape_cast %124 : vector<2x1x32xf32> to vector<2x32xf32>
      %126 = vector.shape_cast %122 : vector<2x32xf32> to vector<2x1x32xf32>
      tpu.vector_store %arg8[%c0_42, %123, %c0_43], %126 {strides = array<i32>} : memref<2x8x32xf32, #tpu.memory_space<vmem>>, vector<2x1x32xf32>,
      %c2_i32 = arith.constant 2 : i32
      %c0_44 = arith.constant 0 : index
      %127 = arith.index_cast %c2_i32 : i32 to index
      %c0_45 = arith.constant 0 : index
      %128 = vector.load %arg9[%c0_44, %127, %c0_45] : memref<2x8x96xf32, #tpu.memory_space<vmem>>, vector<2x1x96xf32>
      %129 = vector.shape_cast %128 : vector<2x1x96xf32> to vector<2x96xf32>
      %130 = arith.truncf %114 : vector<2x32xf32> to vector<2x32xbf16>
      %cst_46 = arith.constant dense<0.000000e+00> : vector<2x96xf32>
      %131 = tpu.matmul %130, %13, %cst_46 {dimension_numbers = #tpu.dot_dimension_numbers<[1], [0], [0], [1], [0, 0, 1, 1], [], []>} : vector<2x32xbf16>, vector<32x96xbf16>, vector<2x96xf32> -> vector<2x96xf32>
      %132 = vector.broadcast %14 : vector<1x96xf32> to vector<2x96xf32>
      %133 = arith.addf %131, %132 : vector<2x96xf32>
      %134 = vector.extract_strided_slice %129 {offsets = [0, 0], sizes = [2, 32], strides = [1, 1]} : vector<2x96xf32> to vector<2x32xf32>
      %135 = vector.extract_strided_slice %133 {offsets = [0, 0], sizes = [2, 32], strides = [1, 1]} : vector<2x96xf32> to vector<2x32xf32>
      %136 = arith.addf %134, %135 : vector<2x32xf32>
      %137 = arith.negf %136 : vector<2x32xf32>
      %138 = math.exp %137 : vector<2x32xf32>
      %cst_47 = arith.constant 1.000000e+00 : f32
      %139 = vector.broadcast %cst_47 : f32 to vector<2x32xf32>
      %140 = arith.addf %139, %138 : vector<2x32xf32>
      %141 = arith.divf %139, %140 : vector<2x32xf32>
      %142 = vector.extract_strided_slice %129 {offsets = [0, 32], sizes = [2, 32], strides = [1, 1]} : vector<2x96xf32> to vector<2x32xf32>
      %143 = vector.extract_strided_slice %133 {offsets = [0, 32], sizes = [2, 32], strides = [1, 1]} : vector<2x96xf32> to vector<2x32xf32>
      %144 = arith.addf %142, %143 : vector<2x32xf32>
      %145 = arith.negf %144 : vector<2x32xf32>
      %146 = math.exp %145 : vector<2x32xf32>
      %cst_48 = arith.constant 1.000000e+00 : f32
      %147 = vector.broadcast %cst_48 : f32 to vector<2x32xf32>
      %148 = arith.addf %147, %146 : vector<2x32xf32>
      %149 = arith.divf %147, %148 : vector<2x32xf32>
      %150 = vector.extract_strided_slice %129 {offsets = [0, 64], sizes = [2, 32], strides = [1, 1]} : vector<2x96xf32> to vector<2x32xf32>
      %151 = vector.extract_strided_slice %133 {offsets = [0, 64], sizes = [2, 32], strides = [1, 1]} : vector<2x96xf32> to vector<2x32xf32>
      %152 = arith.mulf %141, %151 : vector<2x32xf32>
      %153 = arith.addf %150, %152 : vector<2x32xf32>
      %154 = math.tanh %153 : vector<2x32xf32>
      %cst_49 = arith.constant 1.000000e+00 : f32
      %155 = vector.broadcast %cst_49 : f32 to vector<2x32xf32>
      %156 = arith.subf %155, %149 : vector<2x32xf32>
      %157 = arith.mulf %156, %154 : vector<2x32xf32>
      %158 = arith.mulf %149, %114 : vector<2x32xf32>
      %159 = arith.addf %157, %158 : vector<2x32xf32>
      %160 = arith.addi %0, %c2_i32 : i32
      %161 = vector.broadcast %160 : i32 to vector<2x1xi32>
      %162 = arith.cmpi slt, %161, %15 : vector<2x1xi32>
      %163 = vector.shape_cast %162 : vector<2x1xi1> to vector<2x1xi1>
      %164 = vector.broadcast %163 : vector<2x1xi1> to vector<2x32xi1>
      %165 = arith.select %164, %159, %114 : vector<2x32xi1>, vector<2x32xf32>
      %c0_50 = arith.constant 0 : index
      %166 = arith.index_cast %c2_i32 : i32 to index
      %c0_51 = arith.constant 0 : index
      %167 = vector.load %arg2[%c0_50, %166, %c0_51] : memref<2x8x32xf32, #tpu.memory_space<vmem>>, vector<2x1x32xf32>
      %168 = vector.shape_cast %167 : vector<2x1x32xf32> to vector<2x32xf32>
      %169 = arith.addf %165, %168 : vector<2x32xf32>
      %cst_52 = arith.constant 0.000000e+00 : f32
      %170 = vector.shape_cast %162 : vector<2x1xi1> to vector<2x1xi1>
      %171 = vector.broadcast %170 : vector<2x1xi1> to vector<2x32xi1>
      %172 = vector.broadcast %cst_52 : f32 to vector<2x32xf32>
      %173 = arith.select %171, %169, %172 : vector<2x32xi1>, vector<2x32xf32>
      %c0_53 = arith.constant 0 : index
      %174 = arith.index_cast %c2_i32 : i32 to index
      %c0_54 = arith.constant 0 : index
      %175 = vector.load %arg8[%c0_53, %174, %c0_54] : memref<2x8x32xf32, #tpu.memory_space<vmem>>, vector<2x1x32xf32>
      %176 = vector.shape_cast %175 : vector<2x1x32xf32> to vector<2x32xf32>
      %177 = vector.shape_cast %173 : vector<2x32xf32> to vector<2x1x32xf32>
      tpu.vector_store %arg8[%c0_53, %174, %c0_54], %177 {strides = array<i32>} : memref<2x8x32xf32, #tpu.memory_space<vmem>>, vector<2x1x32xf32>,
      %c3_i32 = arith.constant 3 : i32
      %c0_55 = arith.constant 0 : index
      %178 = arith.index_cast %c3_i32 : i32 to index
      %c0_56 = arith.constant 0 : index
      %179 = vector.load %arg9[%c0_55, %178, %c0_56] : memref<2x8x96xf32, #tpu.memory_space<vmem>>, vector<2x1x96xf32>
      %180 = vector.shape_cast %179 : vector<2x1x96xf32> to vector<2x96xf32>
      %181 = arith.truncf %165 : vector<2x32xf32> to vector<2x32xbf16>
      %cst_57 = arith.constant dense<0.000000e+00> : vector<2x96xf32>
      %182 = tpu.matmul %181, %13, %cst_57 {dimension_numbers = #tpu.dot_dimension_numbers<[1], [0], [0], [1], [0, 0, 1, 1], [], []>} : vector<2x32xbf16>, vector<32x96xbf16>, vector<2x96xf32> -> vector<2x96xf32>
      %183 = vector.broadcast %14 : vector<1x96xf32> to vector<2x96xf32>
      %184 = arith.addf %182, %183 : vector<2x96xf32>
      %185 = vector.extract_strided_slice %180 {offsets = [0, 0], sizes = [2, 32], strides = [1, 1]} : vector<2x96xf32> to vector<2x32xf32>
      %186 = vector.extract_strided_slice %184 {offsets = [0, 0], sizes = [2, 32], strides = [1, 1]} : vector<2x96xf32> to vector<2x32xf32>
      %187 = arith.addf %185, %186 : vector<2x32xf32>
      %188 = arith.negf %187 : vector<2x32xf32>
      %189 = math.exp %188 : vector<2x32xf32>
      %cst_58 = arith.constant 1.000000e+00 : f32
      %190 = vector.broadcast %cst_58 : f32 to vector<2x32xf32>
      %191 = arith.addf %190, %189 : vector<2x32xf32>
      %192 = arith.divf %190, %191 : vector<2x32xf32>
      %193 = vector.extract_strided_slice %180 {offsets = [0, 32], sizes = [2, 32], strides = [1, 1]} : vector<2x96xf32> to vector<2x32xf32>
      %194 = vector.extract_strided_slice %184 {offsets = [0, 32], sizes = [2, 32], strides = [1, 1]} : vector<2x96xf32> to vector<2x32xf32>
      %195 = arith.addf %193, %194 : vector<2x32xf32>
      %196 = arith.negf %195 : vector<2x32xf32>
      %197 = math.exp %196 : vector<2x32xf32>
      %cst_59 = arith.constant 1.000000e+00 : f32
      %198 = vector.broadcast %cst_59 : f32 to vector<2x32xf32>
      %199 = arith.addf %198, %197 : vector<2x32xf32>
      %200 = arith.divf %198, %199 : vector<2x32xf32>
      %201 = vector.extract_strided_slice %180 {offsets = [0, 64], sizes = [2, 32], strides = [1, 1]} : vector<2x96xf32> to vector<2x32xf32>
      %202 = vector.extract_strided_slice %184 {offsets = [0, 64], sizes = [2, 32], strides = [1, 1]} : vector<2x96xf32> to vector<2x32xf32>
      %203 = arith.mulf %192, %202 : vector<2x32xf32>
      %204 = arith.addf %201, %203 : vector<2x32xf32>
      %205 = math.tanh %204 : vector<2x32xf32>
      %cst_60 = arith.constant 1.000000e+00 : f32
      %206 = vector.broadcast %cst_60 : f32 to vector<2x32xf32>
      %207 = arith.subf %206, %200 : vector<2x32xf32>
      %208 = arith.mulf %207, %205 : vector<2x32xf32>
      %209 = arith.mulf %200, %165 : vector<2x32xf32>
      %210 = arith.addf %208, %209 : vector<2x32xf32>
      %211 = arith.addi %0, %c3_i32 : i32
      %212 = vector.broadcast %211 : i32 to vector<2x1xi32>
      %213 = arith.cmpi slt, %212, %15 : vector<2x1xi32>
      %214 = vector.shape_cast %213 : vector<2x1xi1> to vector<2x1xi1>
      %215 = vector.broadcast %214 : vector<2x1xi1> to vector<2x32xi1>
      %216 = arith.select %215, %210, %165 : vector<2x32xi1>, vector<2x32xf32>
      %c0_61 = arith.constant 0 : index
      %217 = arith.index_cast %c3_i32 : i32 to index
      %c0_62 = arith.constant 0 : index
      %218 = vector.load %arg2[%c0_61, %217, %c0_62] : memref<2x8x32xf32, #tpu.memory_space<vmem>>, vector<2x1x32xf32>
      %219 = vector.shape_cast %218 : vector<2x1x32xf32> to vector<2x32xf32>
      %220 = arith.addf %216, %219 : vector<2x32xf32>
      %cst_63 = arith.constant 0.000000e+00 : f32
      %221 = vector.shape_cast %213 : vector<2x1xi1> to vector<2x1xi1>
      %222 = vector.broadcast %221 : vector<2x1xi1> to vector<2x32xi1>
      %223 = vector.broadcast %cst_63 : f32 to vector<2x32xf32>
      %224 = arith.select %222, %220, %223 : vector<2x32xi1>, vector<2x32xf32>
      %c0_64 = arith.constant 0 : index
      %225 = arith.index_cast %c3_i32 : i32 to index
      %c0_65 = arith.constant 0 : index
      %226 = vector.load %arg8[%c0_64, %225, %c0_65] : memref<2x8x32xf32, #tpu.memory_space<vmem>>, vector<2x1x32xf32>
      %227 = vector.shape_cast %226 : vector<2x1x32xf32> to vector<2x32xf32>
      %228 = vector.shape_cast %224 : vector<2x32xf32> to vector<2x1x32xf32>
      tpu.vector_store %arg8[%c0_64, %225, %c0_65], %228 {strides = array<i32>} : memref<2x8x32xf32, #tpu.memory_space<vmem>>, vector<2x1x32xf32>,
      %c4_i32 = arith.constant 4 : i32
      %c0_66 = arith.constant 0 : index
      %229 = arith.index_cast %c4_i32 : i32 to index
      %c0_67 = arith.constant 0 : index
      %230 = vector.load %arg9[%c0_66, %229, %c0_67] : memref<2x8x96xf32, #tpu.memory_space<vmem>>, vector<2x1x96xf32>
      %231 = vector.shape_cast %230 : vector<2x1x96xf32> to vector<2x96xf32>
      %232 = arith.truncf %216 : vector<2x32xf32> to vector<2x32xbf16>
      %cst_68 = arith.constant dense<0.000000e+00> : vector<2x96xf32>
      %233 = tpu.matmul %232, %13, %cst_68 {dimension_numbers = #tpu.dot_dimension_numbers<[1], [0], [0], [1], [0, 0, 1, 1], [], []>} : vector<2x32xbf16>, vector<32x96xbf16>, vector<2x96xf32> -> vector<2x96xf32>
      %234 = vector.broadcast %14 : vector<1x96xf32> to vector<2x96xf32>
      %235 = arith.addf %233, %234 : vector<2x96xf32>
      %236 = vector.extract_strided_slice %231 {offsets = [0, 0], sizes = [2, 32], strides = [1, 1]} : vector<2x96xf32> to vector<2x32xf32>
      %237 = vector.extract_strided_slice %235 {offsets = [0, 0], sizes = [2, 32], strides = [1, 1]} : vector<2x96xf32> to vector<2x32xf32>
      %238 = arith.addf %236, %237 : vector<2x32xf32>
      %239 = arith.negf %238 : vector<2x32xf32>
      %240 = math.exp %239 : vector<2x32xf32>
      %cst_69 = arith.constant 1.000000e+00 : f32
      %241 = vector.broadcast %cst_69 : f32 to vector<2x32xf32>
      %242 = arith.addf %241, %240 : vector<2x32xf32>
      %243 = arith.divf %241, %242 : vector<2x32xf32>
      %244 = vector.extract_strided_slice %231 {offsets = [0, 32], sizes = [2, 32], strides = [1, 1]} : vector<2x96xf32> to vector<2x32xf32>
      %245 = vector.extract_strided_slice %235 {offsets = [0, 32], sizes = [2, 32], strides = [1, 1]} : vector<2x96xf32> to vector<2x32xf32>
      %246 = arith.addf %244, %245 : vector<2x32xf32>
      %247 = arith.negf %246 : vector<2x32xf32>
      %248 = math.exp %247 : vector<2x32xf32>
      %cst_70 = arith.constant 1.000000e+00 : f32
      %249 = vector.broadcast %cst_70 : f32 to vector<2x32xf32>
      %250 = arith.addf %249, %248 : vector<2x32xf32>
      %251 = arith.divf %249, %250 : vector<2x32xf32>
      %252 = vector.extract_strided_slice %231 {offsets = [0, 64], sizes = [2, 32], strides = [1, 1]} : vector<2x96xf32> to vector<2x32xf32>
      %253 = vector.extract_strided_slice %235 {offsets = [0, 64], sizes = [2, 32], strides = [1, 1]} : vector<2x96xf32> to vector<2x32xf32>
      %254 = arith.mulf %243, %253 : vector<2x32xf32>
      %255 = arith.addf %252, %254 : vector<2x32xf32>
      %256 = math.tanh %255 : vector<2x32xf32>
      %cst_71 = arith.constant 1.000000e+00 : f32
      %257 = vector.broadcast %cst_71 : f32 to vector<2x32xf32>
      %258 = arith.subf %257, %251 : vector<2x32xf32>
      %259 = arith.mulf %258, %256 : vector<2x32xf32>
      %260 = arith.mulf %251, %216 : vector<2x32xf32>
      %261 = arith.addf %259, %260 : vector<2x32xf32>
      %262 = arith.addi %0, %c4_i32 : i32
      %263 = vector.broadcast %262 : i32 to vector<2x1xi32>
      %264 = arith.cmpi slt, %263, %15 : vector<2x1xi32>
      %265 = vector.shape_cast %264 : vector<2x1xi1> to vector<2x1xi1>
      %266 = vector.broadcast %265 : vector<2x1xi1> to vector<2x32xi1>
      %267 = arith.select %266, %261, %216 : vector<2x32xi1>, vector<2x32xf32>
      %c0_72 = arith.constant 0 : index
      %268 = arith.index_cast %c4_i32 : i32 to index
      %c0_73 = arith.constant 0 : index
      %269 = vector.load %arg2[%c0_72, %268, %c0_73] : memref<2x8x32xf32, #tpu.memory_space<vmem>>, vector<2x1x32xf32>
      %270 = vector.shape_cast %269 : vector<2x1x32xf32> to vector<2x32xf32>
      %271 = arith.addf %267, %270 : vector<2x32xf32>
      %cst_74 = arith.constant 0.000000e+00 : f32
      %272 = vector.shape_cast %264 : vector<2x1xi1> to vector<2x1xi1>
      %273 = vector.broadcast %272 : vector<2x1xi1> to vector<2x32xi1>
      %274 = vector.broadcast %cst_74 : f32 to vector<2x32xf32>
      %275 = arith.select %273, %271, %274 : vector<2x32xi1>, vector<2x32xf32>
      %c0_75 = arith.constant 0 : index
      %276 = arith.index_cast %c4_i32 : i32 to index
      %c0_76 = arith.constant 0 : index
      %277 = vector.load %arg8[%c0_75, %276, %c0_76] : memref<2x8x32xf32, #tpu.memory_space<vmem>>, vector<2x1x32xf32>
      %278 = vector.shape_cast %277 : vector<2x1x32xf32> to vector<2x32xf32>
      %279 = vector.shape_cast %275 : vector<2x32xf32> to vector<2x1x32xf32>
      tpu.vector_store %arg8[%c0_75, %276, %c0_76], %279 {strides = array<i32>} : memref<2x8x32xf32, #tpu.memory_space<vmem>>, vector<2x1x32xf32>,
      %c5_i32 = arith.constant 5 : i32
      %c0_77 = arith.constant 0 : index
      %280 = arith.index_cast %c5_i32 : i32 to index
      %c0_78 = arith.constant 0 : index
      %281 = vector.load %arg9[%c0_77, %280, %c0_78] : memref<2x8x96xf32, #tpu.memory_space<vmem>>, vector<2x1x96xf32>
      %282 = vector.shape_cast %281 : vector<2x1x96xf32> to vector<2x96xf32>
      %283 = arith.truncf %267 : vector<2x32xf32> to vector<2x32xbf16>
      %cst_79 = arith.constant dense<0.000000e+00> : vector<2x96xf32>
      %284 = tpu.matmul %283, %13, %cst_79 {dimension_numbers = #tpu.dot_dimension_numbers<[1], [0], [0], [1], [0, 0, 1, 1], [], []>} : vector<2x32xbf16>, vector<32x96xbf16>, vector<2x96xf32> -> vector<2x96xf32>
      %285 = vector.broadcast %14 : vector<1x96xf32> to vector<2x96xf32>
      %286 = arith.addf %284, %285 : vector<2x96xf32>
      %287 = vector.extract_strided_slice %282 {offsets = [0, 0], sizes = [2, 32], strides = [1, 1]} : vector<2x96xf32> to vector<2x32xf32>
      %288 = vector.extract_strided_slice %286 {offsets = [0, 0], sizes = [2, 32], strides = [1, 1]} : vector<2x96xf32> to vector<2x32xf32>
      %289 = arith.addf %287, %288 : vector<2x32xf32>
      %290 = arith.negf %289 : vector<2x32xf32>
      %291 = math.exp %290 : vector<2x32xf32>
      %cst_80 = arith.constant 1.000000e+00 : f32
      %292 = vector.broadcast %cst_80 : f32 to vector<2x32xf32>
      %293 = arith.addf %292, %291 : vector<2x32xf32>
      %294 = arith.divf %292, %293 : vector<2x32xf32>
      %295 = vector.extract_strided_slice %282 {offsets = [0, 32], sizes = [2, 32], strides = [1, 1]} : vector<2x96xf32> to vector<2x32xf32>
      %296 = vector.extract_strided_slice %286 {offsets = [0, 32], sizes = [2, 32], strides = [1, 1]} : vector<2x96xf32> to vector<2x32xf32>
      %297 = arith.addf %295, %296 : vector<2x32xf32>
      %298 = arith.negf %297 : vector<2x32xf32>
      %299 = math.exp %298 : vector<2x32xf32>
      %cst_81 = arith.constant 1.000000e+00 : f32
      %300 = vector.broadcast %cst_81 : f32 to vector<2x32xf32>
      %301 = arith.addf %300, %299 : vector<2x32xf32>
      %302 = arith.divf %300, %301 : vector<2x32xf32>
      %303 = vector.extract_strided_slice %282 {offsets = [0, 64], sizes = [2, 32], strides = [1, 1]} : vector<2x96xf32> to vector<2x32xf32>
      %304 = vector.extract_strided_slice %286 {offsets = [0, 64], sizes = [2, 32], strides = [1, 1]} : vector<2x96xf32> to vector<2x32xf32>
      %305 = arith.mulf %294, %304 : vector<2x32xf32>
      %306 = arith.addf %303, %305 : vector<2x32xf32>
      %307 = math.tanh %306 : vector<2x32xf32>
      %cst_82 = arith.constant 1.000000e+00 : f32
      %308 = vector.broadcast %cst_82 : f32 to vector<2x32xf32>
      %309 = arith.subf %308, %302 : vector<2x32xf32>
      %310 = arith.mulf %309, %307 : vector<2x32xf32>
      %311 = arith.mulf %302, %267 : vector<2x32xf32>
      %312 = arith.addf %310, %311 : vector<2x32xf32>
      %313 = arith.addi %0, %c5_i32 : i32
      %314 = vector.broadcast %313 : i32 to vector<2x1xi32>
      %315 = arith.cmpi slt, %314, %15 : vector<2x1xi32>
      %316 = vector.shape_cast %315 : vector<2x1xi1> to vector<2x1xi1>
      %317 = vector.broadcast %316 : vector<2x1xi1> to vector<2x32xi1>
      %318 = arith.select %317, %312, %267 : vector<2x32xi1>, vector<2x32xf32>
      %c0_83 = arith.constant 0 : index
      %319 = arith.index_cast %c5_i32 : i32 to index
      %c0_84 = arith.constant 0 : index
      %320 = vector.load %arg2[%c0_83, %319, %c0_84] : memref<2x8x32xf32, #tpu.memory_space<vmem>>, vector<2x1x32xf32>
      %321 = vector.shape_cast %320 : vector<2x1x32xf32> to vector<2x32xf32>
      %322 = arith.addf %318, %321 : vector<2x32xf32>
      %cst_85 = arith.constant 0.000000e+00 : f32
      %323 = vector.shape_cast %315 : vector<2x1xi1> to vector<2x1xi1>
      %324 = vector.broadcast %323 : vector<2x1xi1> to vector<2x32xi1>
      %325 = vector.broadcast %cst_85 : f32 to vector<2x32xf32>
      %326 = arith.select %324, %322, %325 : vector<2x32xi1>, vector<2x32xf32>
      %c0_86 = arith.constant 0 : index
      %327 = arith.index_cast %c5_i32 : i32 to index
      %c0_87 = arith.constant 0 : index
      %328 = vector.load %arg8[%c0_86, %327, %c0_87] : memref<2x8x32xf32, #tpu.memory_space<vmem>>, vector<2x1x32xf32>
      %329 = vector.shape_cast %328 : vector<2x1x32xf32> to vector<2x32xf32>
      %330 = vector.shape_cast %326 : vector<2x32xf32> to vector<2x1x32xf32>
      tpu.vector_store %arg8[%c0_86, %327, %c0_87], %330 {strides = array<i32>} : memref<2x8x32xf32, #tpu.memory_space<vmem>>, vector<2x1x32xf32>,
      %c6_i32 = arith.constant 6 : i32
      %c0_88 = arith.constant 0 : index
      %331 = arith.index_cast %c6_i32 : i32 to index
      %c0_89 = arith.constant 0 : index
      %332 = vector.load %arg9[%c0_88, %331, %c0_89] : memref<2x8x96xf32, #tpu.memory_space<vmem>>, vector<2x1x96xf32>
      %333 = vector.shape_cast %332 : vector<2x1x96xf32> to vector<2x96xf32>
      %334 = arith.truncf %318 : vector<2x32xf32> to vector<2x32xbf16>
      %cst_90 = arith.constant dense<0.000000e+00> : vector<2x96xf32>
      %335 = tpu.matmul %334, %13, %cst_90 {dimension_numbers = #tpu.dot_dimension_numbers<[1], [0], [0], [1], [0, 0, 1, 1], [], []>} : vector<2x32xbf16>, vector<32x96xbf16>, vector<2x96xf32> -> vector<2x96xf32>
      %336 = vector.broadcast %14 : vector<1x96xf32> to vector<2x96xf32>
      %337 = arith.addf %335, %336 : vector<2x96xf32>
      %338 = vector.extract_strided_slice %333 {offsets = [0, 0], sizes = [2, 32], strides = [1, 1]} : vector<2x96xf32> to vector<2x32xf32>
      %339 = vector.extract_strided_slice %337 {offsets = [0, 0], sizes = [2, 32], strides = [1, 1]} : vector<2x96xf32> to vector<2x32xf32>
      %340 = arith.addf %338, %339 : vector<2x32xf32>
      %341 = arith.negf %340 : vector<2x32xf32>
      %342 = math.exp %341 : vector<2x32xf32>
      %cst_91 = arith.constant 1.000000e+00 : f32
      %343 = vector.broadcast %cst_91 : f32 to vector<2x32xf32>
      %344 = arith.addf %343, %342 : vector<2x32xf32>
      %345 = arith.divf %343, %344 : vector<2x32xf32>
      %346 = vector.extract_strided_slice %333 {offsets = [0, 32], sizes = [2, 32], strides = [1, 1]} : vector<2x96xf32> to vector<2x32xf32>
      %347 = vector.extract_strided_slice %337 {offsets = [0, 32], sizes = [2, 32], strides = [1, 1]} : vector<2x96xf32> to vector<2x32xf32>
      %348 = arith.addf %346, %347 : vector<2x32xf32>
      %349 = arith.negf %348 : vector<2x32xf32>
      %350 = math.exp %349 : vector<2x32xf32>
      %cst_92 = arith.constant 1.000000e+00 : f32
      %351 = vector.broadcast %cst_92 : f32 to vector<2x32xf32>
      %352 = arith.addf %351, %350 : vector<2x32xf32>
      %353 = arith.divf %351, %352 : vector<2x32xf32>
      %354 = vector.extract_strided_slice %333 {offsets = [0, 64], sizes = [2, 32], strides = [1, 1]} : vector<2x96xf32> to vector<2x32xf32>
      %355 = vector.extract_strided_slice %337 {offsets = [0, 64], sizes = [2, 32], strides = [1, 1]} : vector<2x96xf32> to vector<2x32xf32>
      %356 = arith.mulf %345, %355 : vector<2x32xf32>
      %357 = arith.addf %354, %356 : vector<2x32xf32>
      %358 = math.tanh %357 : vector<2x32xf32>
      %cst_93 = arith.constant 1.000000e+00 : f32
      %359 = vector.broadcast %cst_93 : f32 to vector<2x32xf32>
      %360 = arith.subf %359, %353 : vector<2x32xf32>
      %361 = arith.mulf %360, %358 : vector<2x32xf32>
      %362 = arith.mulf %353, %318 : vector<2x32xf32>
      %363 = arith.addf %361, %362 : vector<2x32xf32>
      %364 = arith.addi %0, %c6_i32 : i32
      %365 = vector.broadcast %364 : i32 to vector<2x1xi32>
      %366 = arith.cmpi slt, %365, %15 : vector<2x1xi32>
      %367 = vector.shape_cast %366 : vector<2x1xi1> to vector<2x1xi1>
      %368 = vector.broadcast %367 : vector<2x1xi1> to vector<2x32xi1>
      %369 = arith.select %368, %363, %318 : vector<2x32xi1>, vector<2x32xf32>
      %c0_94 = arith.constant 0 : index
      %370 = arith.index_cast %c6_i32 : i32 to index
      %c0_95 = arith.constant 0 : index
      %371 = vector.load %arg2[%c0_94, %370, %c0_95] : memref<2x8x32xf32, #tpu.memory_space<vmem>>, vector<2x1x32xf32>
      %372 = vector.shape_cast %371 : vector<2x1x32xf32> to vector<2x32xf32>
      %373 = arith.addf %369, %372 : vector<2x32xf32>
      %cst_96 = arith.constant 0.000000e+00 : f32
      %374 = vector.shape_cast %366 : vector<2x1xi1> to vector<2x1xi1>
      %375 = vector.broadcast %374 : vector<2x1xi1> to vector<2x32xi1>
      %376 = vector.broadcast %cst_96 : f32 to vector<2x32xf32>
      %377 = arith.select %375, %373, %376 : vector<2x32xi1>, vector<2x32xf32>
      %c0_97 = arith.constant 0 : index
      %378 = arith.index_cast %c6_i32 : i32 to index
      %c0_98 = arith.constant 0 : index
      %379 = vector.load %arg8[%c0_97, %378, %c0_98] : memref<2x8x32xf32, #tpu.memory_space<vmem>>, vector<2x1x32xf32>
      %380 = vector.shape_cast %379 : vector<2x1x32xf32> to vector<2x32xf32>
      %381 = vector.shape_cast %377 : vector<2x32xf32> to vector<2x1x32xf32>
      tpu.vector_store %arg8[%c0_97, %378, %c0_98], %381 {strides = array<i32>} : memref<2x8x32xf32, #tpu.memory_space<vmem>>, vector<2x1x32xf32>,
      %c7_i32 = arith.constant 7 : i32
      %c0_99 = arith.constant 0 : index
      %382 = arith.index_cast %c7_i32 : i32 to index
      %c0_100 = arith.constant 0 : index
      %383 = vector.load %arg9[%c0_99, %382, %c0_100] : memref<2x8x96xf32, #tpu.memory_space<vmem>>, vector<2x1x96xf32>
      %384 = vector.shape_cast %383 : vector<2x1x96xf32> to vector<2x96xf32>
      %385 = arith.truncf %369 : vector<2x32xf32> to vector<2x32xbf16>
      %cst_101 = arith.constant dense<0.000000e+00> : vector<2x96xf32>
      %386 = tpu.matmul %385, %13, %cst_101 {dimension_numbers = #tpu.dot_dimension_numbers<[1], [0], [0], [1], [0, 0, 1, 1], [], []>} : vector<2x32xbf16>, vector<32x96xbf16>, vector<2x96xf32> -> vector<2x96xf32>
      %387 = vector.broadcast %14 : vector<1x96xf32> to vector<2x96xf32>
      %388 = arith.addf %386, %387 : vector<2x96xf32>
      %389 = vector.extract_strided_slice %384 {offsets = [0, 0], sizes = [2, 32], strides = [1, 1]} : vector<2x96xf32> to vector<2x32xf32>
      %390 = vector.extract_strided_slice %388 {offsets = [0, 0], sizes = [2, 32], strides = [1, 1]} : vector<2x96xf32> to vector<2x32xf32>
      %391 = arith.addf %389, %390 : vector<2x32xf32>
      %392 = arith.negf %391 : vector<2x32xf32>
      %393 = math.exp %392 : vector<2x32xf32>
      %cst_102 = arith.constant 1.000000e+00 : f32
      %394 = vector.broadcast %cst_102 : f32 to vector<2x32xf32>
      %395 = arith.addf %394, %393 : vector<2x32xf32>
      %396 = arith.divf %394, %395 : vector<2x32xf32>
      %397 = vector.extract_strided_slice %384 {offsets = [0, 32], sizes = [2, 32], strides = [1, 1]} : vector<2x96xf32> to vector<2x32xf32>
      %398 = vector.extract_strided_slice %388 {offsets = [0, 32], sizes = [2, 32], strides = [1, 1]} : vector<2x96xf32> to vector<2x32xf32>
      %399 = arith.addf %397, %398 : vector<2x32xf32>
      %400 = arith.negf %399 : vector<2x32xf32>
      %401 = math.exp %400 : vector<2x32xf32>
      %cst_103 = arith.constant 1.000000e+00 : f32
      %402 = vector.broadcast %cst_103 : f32 to vector<2x32xf32>
      %403 = arith.addf %402, %401 : vector<2x32xf32>
      %404 = arith.divf %402, %403 : vector<2x32xf32>
      %405 = vector.extract_strided_slice %384 {offsets = [0, 64], sizes = [2, 32], strides = [1, 1]} : vector<2x96xf32> to vector<2x32xf32>
      %406 = vector.extract_strided_slice %388 {offsets = [0, 64], sizes = [2, 32], strides = [1, 1]} : vector<2x96xf32> to vector<2x32xf32>
      %407 = arith.mulf %396, %406 : vector<2x32xf32>
      %408 = arith.addf %405, %407 : vector<2x32xf32>
      %409 = math.tanh %408 : vector<2x32xf32>
      %cst_104 = arith.constant 1.000000e+00 : f32
      %410 = vector.broadcast %cst_104 : f32 to vector<2x32xf32>
      %411 = arith.subf %410, %404 : vector<2x32xf32>
      %412 = arith.mulf %411, %409 : vector<2x32xf32>
      %413 = arith.mulf %404, %369 : vector<2x32xf32>
      %414 = arith.addf %412, %413 : vector<2x32xf32>
      %415 = arith.addi %0, %c7_i32 : i32
      %416 = vector.broadcast %415 : i32 to vector<2x1xi32>
      %417 = arith.cmpi slt, %416, %15 : vector<2x1xi32>
      %418 = vector.shape_cast %417 : vector<2x1xi1> to vector<2x1xi1>
      %419 = vector.broadcast %418 : vector<2x1xi1> to vector<2x32xi1>
      %420 = arith.select %419, %414, %369 : vector<2x32xi1>, vector<2x32xf32>
      %c0_105 = arith.constant 0 : index
      %421 = arith.index_cast %c7_i32 : i32 to index
      %c0_106 = arith.constant 0 : index
      %422 = vector.load %arg2[%c0_105, %421, %c0_106] : memref<2x8x32xf32, #tpu.memory_space<vmem>>, vector<2x1x32xf32>
      %423 = vector.shape_cast %422 : vector<2x1x32xf32> to vector<2x32xf32>
      %424 = arith.addf %420, %423 : vector<2x32xf32>
      %cst_107 = arith.constant 0.000000e+00 : f32
      %425 = vector.shape_cast %417 : vector<2x1xi1> to vector<2x1xi1>
      %426 = vector.broadcast %425 : vector<2x1xi1> to vector<2x32xi1>
      %427 = vector.broadcast %cst_107 : f32 to vector<2x32xf32>
      %428 = arith.select %426, %424, %427 : vector<2x32xi1>, vector<2x32xf32>
      %c0_108 = arith.constant 0 : index
      %429 = arith.index_cast %c7_i32 : i32 to index
      %c0_109 = arith.constant 0 : index
      %430 = vector.load %arg8[%c0_108, %429, %c0_109] : memref<2x8x32xf32, #tpu.memory_space<vmem>>, vector<2x1x32xf32>
      %431 = vector.shape_cast %430 : vector<2x1x32xf32> to vector<2x32xf32>
      %432 = vector.shape_cast %428 : vector<2x32xf32> to vector<2x1x32xf32>
      tpu.vector_store %arg8[%c0_108, %429, %c0_109], %432 {strides = array<i32>} : memref<2x8x32xf32, #tpu.memory_space<vmem>>, vector<2x1x32xf32>,
      %c8_i32_110 = arith.constant 8 : i32
      %c0_111 = arith.constant 0 : index
      %c0_112 = arith.constant 0 : index
      %433 = vector.load %arg10[%c0_111, %c0_112] : memref<2x32xf32, #tpu.memory_space<vmem>>, vector<2x32xf32>
      tpu.vector_store %arg10[%c0_111, %c0_112], %420 {strides = array<i32>} : memref<2x32xf32, #tpu.memory_space<vmem>>, vector<2x32xf32>,
    } else {
    }
    return
  }
  func.func @transform_0(%arg0: i32, %arg1: memref<1xi32, #tpu.memory_space<smem>>) -> (i32, i32, i32) {
    %c0_i32 = arith.constant 0 : i32
    %c0_i32_0 = arith.constant 0 : i32
    %c0_i32_1 = arith.constant 0 : i32
    return %c0_i32, %arg0, %c0_i32_0 : i32, i32, i32
  }
  func.func @transform_1(%arg0: i32, %arg1: memref<1xi32, #tpu.memory_space<smem>>) -> (i32, i32) {
    %c0_i32 = arith.constant 0 : i32
    %c0_i32_0 = arith.constant 0 : i32
    %c0_i32_1 = arith.constant 0 : i32
    return %c0_i32, %c0_i32_0 : i32, i32
  }
  func.func @transform_2(%arg0: i32, %arg1: memref<1xi32, #tpu.memory_space<smem>>) -> (i32, i32) {
    %c0_i32 = arith.constant 0 : i32
    %c0_i32_0 = arith.constant 0 : i32
    %c0_i32_1 = arith.constant 0 : i32
    return %c0_i32, %c0_i32_0 : i32, i32
  }
  func.func @transform_3(%arg0: i32, %arg1: memref<1xi32, #tpu.memory_space<smem>>) -> (i32, i32) {
    %c0_i32 = arith.constant 0 : i32
    %c0_i32_0 = arith.constant 0 : i32
    %c0_i32_1 = arith.constant 0 : i32
    return %c0_i32, %c0_i32_0 : i32, i32
  }
  func.func @transform_4(%arg0: i32, %arg1: memref<1xi32, #tpu.memory_space<smem>>) -> (i32, i32) {
    %c0_i32 = arith.constant 0 : i32
    %c0_i32_0 = arith.constant 0 : i32
    %c0_i32_1 = arith.constant 0 : i32
    return %c0_i32, %c0_i32_0 : i32, i32
  }
  func.func @transform_5(%arg0: i32, %arg1: memref<1xi32, #tpu.memory_space<smem>>) -> (i32, i32) {
    %c0_i32 = arith.constant 0 : i32
    %c0_i32_0 = arith.constant 0 : i32
    %c0_i32_1 = arith.constant 0 : i32
    return %c0_i32, %c0_i32_0 : i32, i32
  }
  func.func @transform_6(%arg0: i32, %arg1: memref<1xi32, #tpu.memory_space<smem>>) -> (i32, i32, i32) {
    %c0_i32 = arith.constant 0 : i32
    %c0_i32_0 = arith.constant 0 : i32
    %c0_i32_1 = arith.constant 0 : i32
    return %c0_i32, %arg0, %c0_i32_0 : i32, i32, i32
  }
}

</mosaic_0001>

<llo_original>
// kernel: rnn_apc_forward.7
$region0: #{rnn_apc_forward.7}
  #allocation0 [shape = 'u32[]', space=smem, size = 0x4, offset = 0x4, fixed_abs, tag = 'smem constant byte address 0x4 - core index']
  #allocation1 [shape = 'u32[144,128]{1,0:T(1,128)}', space=vmem, size = 0x12000, scoped, tag = 'internal scratch']
  %s0 = inlined_call_operand.vmem [shape: f32[16,32], index: 0, kind: input, shape index: {}]
  %s1 = inlined_call_operand.vmem [shape: bf16[32,16], index: 1, kind: input, shape index: {}]
  %s2 = inlined_call_operand.vmem [shape: f32[1,16], index: 2, kind: input, shape index: {}]
  %s3 = inlined_call_operand.hbm [shape: f32[16,16], index: 3, kind: output, shape index: {}]
  %s4 = sld [smem:[#allocation0]]
  $region22: #{rnn_apc_forward.7} parent=0
    _
  %s6 = ssub.s32 1, %s4
  %s7 = scalar_select 0, %s6, %s4
  $region1: #{rnn_apc_forward.7} parent=0
    #allocation2 [shape = 'u8[8192]{0}', space=vmem, size = 0x2000, scoped, tag = 'output window, operand 0, single buffered']
    #allocation3 [shape = 's32[1]{0}', space=sflag, size = 0x4, scoped, tag = 'scoped memory for rnn_apc_forward.7']
    %8 = vsyncpa [#allocation3], 0
    // Predicated region
    $region2: #{rnn_apc_forward.7} parent=1 // pred_check
      _
    $region3: #{rnn_apc_forward.7} parent=1 // pred_check_branch
      %10 = sbr.rel (0) target = $region5
    $region4: #{rnn_apc_forward.7} parent=1 // pred_region
      _
    $region5: #{rnn_apc_forward.7} parent=1 // pred_fallthru
      _
    // Predicated region
    $region6: #{rnn_apc_forward.7} parent=1 // pred_check
      _
    $region7: #{rnn_apc_forward.7} parent=1 // pred_check_branch
      %12 = sbr.rel (0) target = $region9
    $region8: #{rnn_apc_forward.7} parent=1 // pred_region
      _
    $region9: #{rnn_apc_forward.7} parent=1 // pred_fallthru
      _
    // Predicated region
    $region10: #{rnn_apc_forward.7} parent=1 // pred_check
      _
    $region11: #{rnn_apc_forward.7} parent=1 // pred_check_branch
      %14 = sbr.rel (0) target = $region13
    $region12: #{rnn_apc_forward.7} parent=1 // pred_region
      _
    $region13: #{rnn_apc_forward.7} parent=1 // pred_fallthru
      _
    %v16 = vld [vmem:[%s0] sm:$0xff]
    %v17 = vld [vmem:[%s0 + $0x8] sm:$0xff]
    %v18 = vpack.c.bf16 %v17, %v16
    %v19 = vld [vmem:[%s1] sm:$0xf]
    %v20 = vld [vmem:[%s1 + $0x4] sm:$0xf]
    %v21 = vld [vmem:[%s1 + $0x8] sm:$0xf]
    %v22 = vld [vmem:[%s1 + $0xc] sm:$0xf]
    %v23 = vld [vmem:[%s2] sm:$0x1]
    %v25 = vlaneseq
    %v26 = vshrl.u32 %v25, 7
    %v27 = vsub.s32 0, %v26
    %v28 = vrot.slane %v23, %v27
    %v34 = vunpack.c.l.b16 %v19
    %v35 = vunpack.c.l.b16 %v20
    %v36 = vunpack.c.l.b16 %v21
    %v37 = vunpack.c.l.b16 %v22
    %v38 = vpack.c.b16 %v35, %v34
    %v39 = vpack.c.b16 %v37, %v36
    %vm42 = vcmask 261120
    %v44 = vsel %vm42, %v18, 0
    %46 = vmatprep.subr.bf16.mxu0 0
    %47 = vmatpush1.bf16.msra.mxu0 %v38
    %48 = vmatprep.subr.bf16.mxu0 0
    %49 = vmatpush1.bf16.msra.mxu0 %v39
    %50 = vmatprep.subr.bf16.mxu0 0
    %51 = vmatpush1.bf16.msra.mxu0 0
    %52 = vmatprep.subr.bf16.mxu0 0
    %53 = vmatpush1.bf16.msra.mxu0 0
    %54 = vmatprep.subr.bf16.mxu0 0
    %55 = vmatpush1.bf16.msra.mxu0 0
    %56 = vmatprep.subr.bf16.mxu0 0
    %57 = vmatpush1.bf16.msra.mxu0 0
    %58 = vmatprep.subr.bf16.mxu0 0
    %59 = vmatpush1.bf16.msra.mxu0 0
    %60 = vmatprep.subr.bf16.mxu0 0
    %61 = vmatpush1.bf16.msra.mxu0 0
    %62 = vmatprep.subr.bf16.mxu0 0
    %63 = vmatpush1.bf16.msra.mxu0 0
    %64 = vmatprep.subr.bf16.mxu0 0
    %65 = vmatpush1.bf16.msra.mxu0 0
    %66 = vmatprep.subr.bf16.mxu0 0
    %67 = vmatpush1.bf16.msra.mxu0 0
    %68 = vmatprep.subr.bf16.mxu0 0
    %69 = vmatpush1.bf16.msra.mxu0 0
    %70 = vmatprep.subr.bf16.mxu0 0
    %71 = vmatpush1.bf16.msra.mxu0 0
    %72 = vmatprep.subr.bf16.mxu0 0
    %73 = vmatpush1.bf16.msra.mxu0 0
    %74 = vmatprep.subr.bf16.mxu0 0
    %75 = vmatpush1.bf16.msra.mxu0 0
    %76 = vmatprep.subr.bf16.mxu0 0
    %77 = vmatpush1.bf16.msra.mxu0 0
    %78 = vmatprep.mubr.bf16.mxu0 0
    %79 = vmatmul.mubr.bf16.gmra.mrb[0].mxu0 %v44
    %v80 = vpop.f32.mrb[0].mxu0
    %v81 = vadd.f32 %v28, %v80
    %v82 = vpop.f32.mrb[0].mxu0
    %v83 = vpop.f32.mrb[0].mxu0
    %v84 = vadd.f32 %v28, %v83
    %v85 = vpop.f32.mrb[0].mxu0
    %86 = vdwg.mxu0
    %vm87 = vcmask 130048
    %88 = vst.msk [vmem:[#allocation2] sm:$0xff] %vm87, %v81
    %89 = vst.msk [vmem:[#allocation2 + $0x8] sm:$0xff] %vm87, %v84
    // Predicated region
    $region14: #{rnn_apc_forward.7} parent=1 // pred_check
      _
    $region15: #{rnn_apc_forward.7} parent=1 // pred_check_branch
      %91 = sbr.rel (0) target = $region17
    $region16: #{rnn_apc_forward.7} parent=1 // pred_region
      %s93 = ssub.s32 256, 256
      %94 = vsyncadd [#allocation3], %s93
      %s95 = sshll.u32 [#allocation2], 4
      %s96 = int_to_ptr.vmem [resolvable:$true] %s95
      %101 = dma.vmem_to_hbm [thread:$0]  %s96, 256, %s3, [#allocation3], 128, 128, 8
    $region17: #{rnn_apc_forward.7} parent=1 // pred_fallthru
      _
    // Predicated region
    $region18: #{rnn_apc_forward.7} parent=1 // pred_check
      _
    $region19: #{rnn_apc_forward.7} parent=1 // pred_check_branch
      %103 = sbr.rel (0) target = $region21
    $region20: #{rnn_apc_forward.7} parent=1 // pred_region
      %104 = dma.done [#allocation3], 256
    $region21: #{rnn_apc_forward.7} parent=1 // pred_fallthru
      _
    %105 = vsyncpa [#allocation3], 1

// kernel: rnn_apc_forward.4
$region0: #{rnn_apc_forward.4}
  #allocation0 [shape = 'u32[]', space=smem, size = 0x4, offset = 0x4, fixed_abs, tag = 'smem constant byte address 0x4 - core index']
  #allocation1 [shape = 'u32[144,128]{1,0:T(1,128)}', space=vmem, size = 0x12000, scoped, tag = 'internal scratch']
  #allocation2 [shape = 'f32[2,8,96]{2,1,0:T(8,128)}', space=vmem, size = 0x2000, scoped, tag = 'scratch operand']
  #allocation3 [shape = 'f32[2,32]{1,0:T(2,128)}', space=vmem, size = 0x400, scoped, tag = 'scratch operand']
  #allocation4 [shape = 's32[1]{0}', space=sflag, size = 0x4, scoped, tag = 'scoped memory for rnn_apc_forward.4']
  #allocation5 [shape = 's32[1]{0:T(128)S(6)}', space=smem, size = 0x200, scoped, tag = 'prefetched SMEM operand 0']
  %s0 = inlined_call_operand.<no memory space> [shape: s32[1], index: 0, kind: input, shape index: {}]
  %s1 = inlined_call_operand.vmem [shape: f32[2,8,16], index: 1, kind: input, shape index: {}]
  %s2 = inlined_call_operand.vmem [shape: bf16[16,96], index: 2, kind: input, shape index: {}]
  %s3 = inlined_call_operand.vmem [shape: f32[1,96], index: 3, kind: input, shape index: {}]
  %s4 = inlined_call_operand.vmem [shape: bf16[32,96], index: 4, kind: input, shape index: {}]
  %s5 = inlined_call_operand.vmem [shape: f32[1,96], index: 5, kind: input, shape index: {}]
  %s6 = inlined_call_operand.vmem [shape: s32[2,1], index: 6, kind: input, shape index: {}]
  %s7 = inlined_call_operand.vmem [shape: f32[2,8,32], index: 7, kind: output, shape index: {}]
  %s8 = sld [smem:[#allocation0]]
  $region46: #{rnn_apc_forward.4} parent=0
    _
  %s10 = ssub.s32 1, %s8
  %s11 = scalar_select 0, %s10, %s8
  %12 = sst [smem:[#allocation5]] %s0
  // Predicated region
  $region2: #{rnn_apc_forward.4} parent=0 // pred_check
    _
  $region3: #{rnn_apc_forward.4} parent=0 // pred_check_branch
    %14 = sbr.rel (0) target = $region5
  $region4: #{rnn_apc_forward.4} parent=0 // pred_region
    _
  $region5: #{rnn_apc_forward.4} parent=0 // pred_fallthru
    _
  // Predicated region
  $region6: #{rnn_apc_forward.4} parent=0 // pred_check
    _
  $region7: #{rnn_apc_forward.4} parent=0 // pred_check_branch
    %16 = sbr.rel (0) target = $region9
  $region8: #{rnn_apc_forward.4} parent=0 // pred_region
    _
  $region9: #{rnn_apc_forward.4} parent=0 // pred_fallthru
    _
  // Predicated region
  $region10: #{rnn_apc_forward.4} parent=0 // pred_check
    _
  $region11: #{rnn_apc_forward.4} parent=0 // pred_check_branch
    %18 = sbr.rel (0) target = $region13
  $region12: #{rnn_apc_forward.4} parent=0 // pred_region
    _
  $region13: #{rnn_apc_forward.4} parent=0 // pred_fallthru
    _
  // Predicated region
  $region14: #{rnn_apc_forward.4} parent=0 // pred_check
    _
  $region15: #{rnn_apc_forward.4} parent=0 // pred_check_branch
    %20 = sbr.rel (0) target = $region17
  $region16: #{rnn_apc_forward.4} parent=0 // pred_region
    _
  $region17: #{rnn_apc_forward.4} parent=0 // pred_fallthru
    _
  // Predicated region
  $region18: #{rnn_apc_forward.4} parent=0 // pred_check
    _
  $region19: #{rnn_apc_forward.4} parent=0 // pred_check_branch
    %22 = sbr.rel (0) target = $region21
  $region20: #{rnn_apc_forward.4} parent=0 // pred_region
    _
  $region21: #{rnn_apc_forward.4} parent=0 // pred_fallthru
    _
  // Predicated region
  $region22: #{rnn_apc_forward.4} parent=0 // pred_check
    _
  $region23: #{rnn_apc_forward.4} parent=0 // pred_check_branch
    %24 = sbr.rel (0) target = $region25
  $region24: #{rnn_apc_forward.4} parent=0 // pred_region
    _
  $region25: #{rnn_apc_forward.4} parent=0 // pred_fallthru
    _
  %s26 = smul.u32 0, 8
  %s27 = sld [smem:[#allocation5]]
  %p28 = scmp.eq.s32.totalorder 0, 0
  // Predicated region
  $region26: #{rnn_apc_forward.4} parent=0 // pred_check
    %p29 = pneg %p28
  $region27: #{rnn_apc_forward.4} parent=0 // pred_check_branch
    %31 = sbr.rel (%p29) target = $region29
  $region28: #{rnn_apc_forward.4} parent=0 // pred_region
    %vm32 = vcmask 254976
    %33 = vst.msk [vmem:[#allocation3] sm:$0x3] %vm32, 0.0
  $region29: #{rnn_apc_forward.4} parent=0 // pred_fallthru
    _
  %p34 = scmp.ge.s32.totalorder %s26, %s27
  // Predicated region
  $region30: #{rnn_apc_forward.4} parent=0 // pred_check
    %p35 = pneg %p34
  $region31: #{rnn_apc_forward.4} parent=0 // pred_check_branch
    %37 = sbr.rel (%p35) target = $region33
  $region32: #{rnn_apc_forward.4} parent=0 // pred_region
    %vm38 = vcmask 261120
    %39 = vst.msk [vmem:[%s7] sm:$0xff] %vm38, 0.0
    %40 = vst.msk [vmem:[%s7 + $0x8] sm:$0xff] %vm38, 0.0
  $region33: #{rnn_apc_forward.4} parent=0 // pred_fallthru
    _
  %p41 = scmp.lt.s32.totalorder %s26, %s27
  // Predicated region
  $region34: #{rnn_apc_forward.4} parent=0 // pred_check
    %p42 = pneg %p41
  $region35: #{rnn_apc_forward.4} parent=0 // pred_check_branch
    %44 = sbr.rel (%p42) target = $region37
  $region36: #{rnn_apc_forward.4} parent=0 // pred_region
    %v45 = vld [vmem:[%s2] sm:$0xf]
    %v46 = vld [vmem:[%s2 + $0x4] sm:$0xf]
    %v47 = vld [vmem:[%s3] sm:$0x1]
    %v48 = vld [vmem:[%s4] sm:$0xf]
    %v49 = vld [vmem:[%s4 + $0x4] sm:$0xf]
    %v50 = vld [vmem:[%s4 + $0x8] sm:$0xf]
    %v51 = vld [vmem:[%s4 + $0xc] sm:$0xf]
    %v52 = vld [vmem:[%s5] sm:$0x1]
    %v53 = vld [vmem:[%s6] sm:$0x3]
    %v54 = vld [vmem:[%s1] sm:$0xff]
    %v55 = vld [vmem:[%s1 + $0x8] sm:$0xff]
    %v56 = vpack.c.bf16 %v55, %v54
    %v58 = vlaneseq
    %v59 = vshrl.u32 %v58, 7
    %v60 = vsub.s32 0, %v59
    %v61 = vrot.slane %v47, %v60
    %v65 = vunpack.c.l.b16 %v45
    %v66 = vunpack.c.l.b16 %v46
    %v67 = vpack.c.b16 %v66, %v65
    %vm69 = vcmask 130048
    %v71 = vsel %vm69, %v56, 0
    %73 = vmatprep.subr.bf16.mxu0 0
    %74 = vmatpush1.bf16.msra.mxu0 %v67
    %75 = vmatprep.subr.bf16.mxu0 0
    %76 = vmatpush1.bf16.msra.mxu0 0
    %77 = vmatprep.subr.bf16.mxu0 0
    %78 = vmatpush1.bf16.msra.mxu0 0
    %79 = vmatprep.subr.bf16.mxu0 0
    %80 = vmatpush1.bf16.msra.mxu0 0
    %81 = vmatprep.subr.bf16.mxu0 0
    %82 = vmatpush1.bf16.msra.mxu0 0
    %83 = vmatprep.subr.bf16.mxu0 0
    %84 = vmatpush1.bf16.msra.mxu0 0
    %85 = vmatprep.subr.bf16.mxu0 0
    %86 = vmatpush1.bf16.msra.mxu0 0
    %87 = vmatprep.subr.bf16.mxu0 0
    %88 = vmatpush1.bf16.msra.mxu0 0
    %89 = vmatprep.subr.bf16.mxu0 0
    %90 = vmatpush1.bf16.msra.mxu0 0
    %91 = vmatprep.subr.bf16.mxu0 0
    %92 = vmatpush1.bf16.msra.mxu0 0
    %93 = vmatprep.subr.bf16.mxu0 0
    %94 = vmatpush1.bf16.msra.mxu0 0
    %95 = vmatprep.subr.bf16.mxu0 0
    %96 = vmatpush1.bf16.msra.mxu0 0
    %97 = vmatprep.subr.bf16.mxu0 0
    %98 = vmatpush1.bf16.msra.mxu0 0
    %99 = vmatprep.subr.bf16.mxu0 0
    %100 = vmatpush1.bf16.msra.mxu0 0
    %101 = vmatprep.subr.bf16.mxu0 0
    %102 = vmatpush1.bf16.msra.mxu0 0
    %103 = vmatprep.subr.bf16.mxu0 0
    %104 = vmatpush1.bf16.msra.mxu0 0
    %105 = vmatprep.mubr.bf16.mxu0 0
    %106 = vmatmul.mubr.bf16.gmra.mrb[0].mxu0 %v71
    %v107 = vpop.f32.mrb[0].mxu0
    %v108 = vadd.f32 %v61, %v107
    %v109 = vpop.f32.mrb[0].mxu0
    %v110 = vpop.f32.mrb[0].mxu0
    %v111 = vadd.f32 %v61, %v110
    %v112 = vpop.f32.mrb[0].mxu0
    %113 = vdwg.mxu0
    %vm114 = vcmask 785408
    %115 = vst.msk [vmem:[#allocation2] sm:$0xff] %vm114, %v108
    %116 = vst.msk [vmem:[#allocation2 + $0x8] sm:$0xff] %vm114, %v111
    %v117 = vld [vmem:[#allocation3] sm:$0x3]
    %v118 = vld [vmem:[#allocation2] sm:$0x1]
    %v119 = vld [vmem:[#allocation2 + $0x8] sm:$0x1]
    %v120 = vpack.c.bf16 %v117, %v117
    %v122 = vlaneseq
    %v123 = vshrl.u32 %v122, 7
    %v124 = vsub.s32 0, %v123
    %v125 = vrot.slane %v52, %v124
    %v131 = vunpack.c.l.b16 %v48
    %v132 = vunpack.c.l.b16 %v49
    %v133 = vunpack.c.l.b16 %v50
    %v134 = vunpack.c.l.b16 %v51
    %v135 = vpack.c.b16 %v132, %v131
    %v136 = vpack.c.b16 %v134, %v133
    %vm139 = vcmask 261120
    %v141 = vsel %vm139, %v120, 0
    %143 = vmatprep.subr.bf16.mxu0 0
    %144 = vmatpush1.bf16.msra.mxu0 %v135
    %145 = vmatprep.subr.bf16.mxu0 0
    %146 = vmatpush1.bf16.msra.mxu0 %v136
    %147 = vmatprep.subr.bf16.mxu0 0
    %148 = vmatpush1.bf16.msra.mxu0 0
    %149 = vmatprep.subr.bf16.mxu0 0
    %150 = vmatpush1.bf16.msra.mxu0 0
    %151 = vmatprep.subr.bf16.mxu0 0
    %152 = vmatpush1.bf16.msra.mxu0 0
    %153 = vmatprep.subr.bf16.mxu0 0
    %154 = vmatpush1.bf16.msra.mxu0 0
    %155 = vmatprep.subr.bf16.mxu0 0
    %156 = vmatpush1.bf16.msra.mxu0 0
    %157 = vmatprep.subr.bf16.mxu0 0
    %158 = vmatpush1.bf16.msra.mxu0 0
    %159 = vmatprep.subr.bf16.mxu0 0
    %160 = vmatpush1.bf16.msra.mxu0 0
    %161 = vmatprep.subr.bf16.mxu0 0
    %162 = vmatpush1.bf16.msra.mxu0 0
    %163 = vmatprep.subr.bf16.mxu0 0
    %164 = vmatpush1.bf16.msra.mxu0 0
    %165 = vmatprep.subr.bf16.mxu0 0
    %166 = vmatpush1.bf16.msra.mxu0 0
    %167 = vmatprep.subr.bf16.mxu0 0
    %168 = vmatpush1.bf16.msra.mxu0 0
    %169 = vmatprep.subr.bf16.mxu0 0
    %170 = vmatpush1.bf16.msra.mxu0 0
    %171 = vmatprep.subr.bf16.mxu0 0
    %172 = vmatpush1.bf16.msra.mxu0 0
    %173 = vmatprep.subr.bf16.mxu0 0
    %174 = vmatpush1.bf16.msra.mxu0 0
    %175 = vmatprep.mubr.bf16.mxu0 0
    %176 = vmatmul.mubr.bf16.gmra.mrb[0].mxu0 %v141
    %v177 = vpop.f32.mrb[0].mxu0
    %v178 = vadd.f32 %v125, %v177
    %v179 = vpop.f32.mrb[0].mxu0
    %v180 = vpop.f32.mrb[0].mxu0
    %v181 = vpop.f32.mrb[0].mxu0
    %182 = vdwg.mxu0
    %v184 = vrot.slane %v178, 1
    %v187 = vadd.f32 %v118, %v178
    %v188 = vadd.f32 %v119, %v184
    %v189 = vxor.u32 %v187, 2147483648
    %v190 = vxor.u32 %v188, 2147483648
    %v191 = vmul.f32 %v189, 1.442695
    %v192 = vpow.pop %v191
    %v193 = vmul.f32 %v190, 1.442695
    %v194 = vpow.pop %v193
    %v195 = vadd.f32 %v192, 1.0
    %v196 = vadd.f32 %v194, 1.0
    %v197 = vrcp.pop %v195
    %v198 = vmul.f32 1.0, %v197
    %v199 = vrcp.pop %v196
    %v200 = vmul.f32 1.0, %v199
    %201 = vrot.lane.b32.xlu0 %v178, 64
    %v202 = vpop.permute.xlu0 %201
    %203 = vrot.lane.b32.xlu0 %v184, 64
    %v204 = vpop.permute.xlu0 %203
    %v207 = vmul.f32 %v198, %v202
    %v208 = vmul.f32 %v200, %v204
    %211 = vrot.lane.b32.xlu0 %v207, 64
    %v212 = vpop.permute.xlu0 %211
    %213 = vrot.lane.b32.xlu0 %v208, 64
    %v214 = vpop.permute.xlu0 %213
    %v217 = vadd.f32 %v118, %v212
    %v218 = vadd.f32 %v119, %v214
    %v219 = vtanh.pop %v217
    %v220 = vtanh.pop %v218
    %v221 = vsub.f32 1.0, %v198
    %v222 = vsub.f32 1.0, %v200
    %225 = vrot.lane.b32.xlu0 %v219, 96
    %v226 = vpop.permute.xlu0 %225
    %227 = vrot.lane.b32.xlu0 %v220, 96
    %v228 = vpop.permute.xlu0 %227
    %v231 = vmul.f32 %v221, %v226
    %v232 = vmul.f32 %v222, %v228
    %v234 = vrot.slane %v117, 1
    %235 = vrot.lane.b32.xlu0 %v117, 32
    %v236 = vpop.permute.xlu0 %235
    %237 = vrot.lane.b32.xlu0 %v234, 32
    %v238 = vpop.permute.xlu0 %237
    %v241 = vmul.f32 %v198, %v236
    %v242 = vmul.f32 %v200, %v238
    %v243 = vadd.f32 %v231, %v241
    %v244 = vadd.f32 %v232, %v242
    %v245 = vstv %s26
    %vm246 = vcmp.lt.s32.totalorder %v245, %v53
    %v247 = vsel %vm246, 1, 0
    %248 = vset.pattern.permute.xlu0 0
    %249 = vperm.xlu0 %248, %v247
    %v250 = vpop.permute.xlu0 %249
    %vm251 = vcmp.eq.s32.totalorder %v250, 1
    %v254 = vrot.slane %v244, 7
    %vm255 = vcmask 1041409
    %v256 = vsel %vm255, %v254, %v243
    %257 = vrot.lane.b32.xlu0 %v256, 96
    %v258 = vpop.permute.xlu0 %257
    %v260 = vsel %vm251, %v258, %v117
    %v261 = vsel %vm251, %v258, 0.0
    %v264 = vunpack.c.l.s4 1966171168
    %v265 = vunpack.c.0.s8 %v264
    %v266 = vlaneseq
    %v267 = vshrl.u32 %v266, 7
    %v268 = vsub.s32 %v265, %v267
    %v269 = vrot.slane %v261, %v268
    %v270 = vcombine.high %v269, %v269
    %v272 = vunpack.c.l.s4 1966171168
    %v273 = vunpack.c.0.s8 %v272
    %v274 = vlaneseq
    %v275 = vshrl.u32 %v274, 7
    %v276 = vsub.s32 %v273, %v275
    %v277 = vrot.slane %v269, %v276
    %v279 = vunpack.c.l.s4 1966171168
    %v280 = vunpack.c.0.s8 %v279
    %v281 = vlaneseq
    %v282 = vshrl.u32 %v281, 7
    %v283 = vsub.s32 %v280, %v282
    %v284 = vrot.slane %v270, %v283
    %vm287 = vcmask 253952
    %288 = vst.msk [vmem:[%s7] sm:$0x1] %vm287, %v277
    %289 = vst.msk [vmem:[%s7 + $0x8] sm:$0x1] %vm287, %v284
    %v290 = vld [vmem:[#allocation2 + $0x1] sm:$0x1]
    %v291 = vld [vmem:[#allocation2 + $0x9] sm:$0x1]
    %v292 = vpack.c.bf16 %v260, %v260
    %v294 = vsel %vm139, %v292, 0
    %296 = vmatprep.subr.bf16.mxu0 0
    %297 = vmatpush1.bf16.msra.mxu0 %v135
    %298 = vmatprep.subr.bf16.mxu0 0
    %299 = vmatpush1.bf16.msra.mxu0 %v136
    %300 = vmatprep.subr.bf16.mxu0 0
    %301 = vmatpush1.bf16.msra.mxu0 0
    %302 = vmatprep.subr.bf16.mxu0 0
    %303 = vmatpush1.bf16.msra.mxu0 0
    %304 = vmatprep.subr.bf16.mxu0 0
    %305 = vmatpush1.bf16.msra.mxu0 0
    %306 = vmatprep.subr.bf16.mxu0 0
    %307 = vmatpush1.bf16.msra.mxu0 0
    %308 = vmatprep.subr.bf16.mxu0 0
    %309 = vmatpush1.bf16.msra.mxu0 0
    %310 = vmatprep.subr.bf16.mxu0 0
    %311 = vmatpush1.bf16.msra.mxu0 0
    %312 = vmatprep.subr.bf16.mxu0 0
    %313 = vmatpush1.bf16.msra.mxu0 0
    %314 = vmatprep.subr.bf16.mxu0 0
    %315 = vmatpush1.bf16.msra.mxu0 0
    %316 = vmatprep.subr.bf16.mxu0 0
    %317 = vmatpush1.bf16.msra.mxu0 0
    %318 = vmatprep.subr.bf16.mxu0 0
    %319 = vmatpush1.bf16.msra.mxu0 0
    %320 = vmatprep.subr.bf16.mxu0 0
    %321 = vmatpush1.bf16.msra.mxu0 0
    %322 = vmatprep.subr.bf16.mxu0 0
    %323 = vmatpush1.bf16.msra.mxu0 0
    %324 = vmatprep.subr.bf16.mxu0 0
    %325 = vmatpush1.bf16.msra.mxu0 0
    %326 = vmatprep.subr.bf16.mxu0 0
    %327 = vmatpush1.bf16.msra.mxu0 0
    %328 = vmatprep.mubr.bf16.mxu0 0
    %329 = vmatmul.mubr.bf16.gmra.mrb[0].mxu0 %v294
    %v330 = vpop.f32.mrb[0].mxu0
    %v331 = vadd.f32 %v125, %v330
    %v332 = vpop.f32.mrb[0].mxu0
    %v333 = vpop.f32.mrb[0].mxu0
    %v334 = vpop.f32.mrb[0].mxu0
    %335 = vdwg.mxu0
    %v337 = vrot.slane %v331, 1
    %v340 = vadd.f32 %v290, %v331
    %v341 = vadd.f32 %v291, %v337
    %v342 = vxor.u32 %v340, 2147483648
    %v343 = vxor.u32 %v341, 2147483648
    %v344 = vmul.f32 %v342, 1.442695
    %v345 = vpow.pop %v344
    %v346 = vmul.f32 %v343, 1.442695
    %v347 = vpow.pop %v346
    %v348 = vadd.f32 %v345, 1.0
    %v349 = vadd.f32 %v347, 1.0
    %v350 = vrcp.pop %v348
    %v351 = vmul.f32 1.0, %v350
    %v352 = vrcp.pop %v349
    %v353 = vmul.f32 1.0, %v352
    %354 = vrot.lane.b32.xlu0 %v331, 64
    %v355 = vpop.permute.xlu0 %354
    %356 = vrot.lane.b32.xlu0 %v337, 64
    %v357 = vpop.permute.xlu0 %356
    %v360 = vmul.f32 %v351, %v355
    %v361 = vmul.f32 %v353, %v357
    %364 = vrot.lane.b32.xlu0 %v360, 64
    %v365 = vpop.permute.xlu0 %364
    %366 = vrot.lane.b32.xlu0 %v361, 64
    %v367 = vpop.permute.xlu0 %366
    %v370 = vadd.f32 %v290, %v365
    %v371 = vadd.f32 %v291, %v367
    %v372 = vtanh.pop %v370
    %v373 = vtanh.pop %v371
    %v374 = vsub.f32 1.0, %v351
    %v375 = vsub.f32 1.0, %v353
    %378 = vrot.lane.b32.xlu0 %v372, 96
    %v379 = vpop.permute.xlu0 %378
    %380 = vrot.lane.b32.xlu0 %v373, 96
    %v381 = vpop.permute.xlu0 %380
    %v384 = vmul.f32 %v374, %v379
    %v385 = vmul.f32 %v375, %v381
    %v387 = vrot.slane %v260, 1
    %388 = vrot.lane.b32.xlu0 %v260, 32
    %v389 = vpop.permute.xlu0 %388
    %390 = vrot.lane.b32.xlu0 %v387, 32
    %v391 = vpop.permute.xlu0 %390
    %v394 = vmul.f32 %v351, %v389
    %v395 = vmul.f32 %v353, %v391
    %v396 = vadd.f32 %v384, %v394
    %v397 = vadd.f32 %v385, %v395
    %s398 = sadd.s32 %s26, 1
    %v399 = vstv %s398
    %vm400 = vcmp.lt.s32.totalorder %v399, %v53
    %v401 = vsel %vm400, 1, 0
    %402 = vset.pattern.permute.xlu0 0
    %403 = vperm.xlu0 %402, %v401
    %v404 = vpop.permute.xlu0 %403
    %vm405 = vcmp.eq.s32.totalorder %v404, 1
    %v408 = vrot.slane %v397, 7
    %v409 = vsel %vm255, %v408, %v396
    %410 = vrot.lane.b32.xlu0 %v409, 96
    %v411 = vpop.permute.xlu0 %410
    %v413 = vsel %vm405, %v411, %v260
    %v414 = vsel %vm405, %v411, 0.0
    %v417 = vunpack.c.l.s4 1966171168
    %v418 = vunpack.c.0.s8 %v417
    %v419 = vlaneseq
    %v420 = vshrl.u32 %v419, 7
    %v421 = vsub.s32 %v418, %v420
    %v422 = vrot.slane %v414, %v421
    %v423 = vcombine.high %v422, %v422
    %v425 = vunpack.c.l.s4 1966171168
    %v426 = vunpack.c.0.s8 %v425
    %v427 = vlaneseq
    %v428 = vshrl.u32 %v427, 7
    %v429 = vsub.s32 %v426, %v428
    %v430 = vrot.slane %v422, %v429
    %v432 = vunpack.c.l.s4 1966171168
    %v433 = vunpack.c.0.s8 %v432
    %v434 = vlaneseq
    %v435 = vshrl.u32 %v434, 7
    %v436 = vsub.s32 %v433, %v435
    %v437 = vrot.slane %v423, %v436
    %440 = vst.msk [vmem:[%s7 + $0x1] sm:$0x1] %vm287, %v430
    %441 = vst.msk [vmem:[%s7 + $0x9] sm:$0x1] %vm287, %v437
    %v442 = vld [vmem:[#allocation2 + $0x2] sm:$0x1]
    %v443 = vld [vmem:[#allocation2 + $0xa] sm:$0x1]
    %v444 = vpack.c.bf16 %v413, %v413
    %v446 = vsel %vm139, %v444, 0
    %448 = vmatprep.subr.bf16.mxu0 0
    %449 = vmatpush1.bf16.msra.mxu0 %v135
    %450 = vmatprep.subr.bf16.mxu0 0
    %451 = vmatpush1.bf16.msra.mxu0 %v136
    %452 = vmatprep.subr.bf16.mxu0 0
    %453 = vmatpush1.bf16.msra.mxu0 0
    %454 = vmatprep.subr.bf16.mxu0 0
    %455 = vmatpush1.bf16.msra.mxu0 0
    %456 = vmatprep.subr.bf16.mxu0 0
    %457 = vmatpush1.bf16.msra.mxu0 0
    %458 = vmatprep.subr.bf16.mxu0 0
    %459 = vmatpush1.bf16.msra.mxu0 0
    %460 = vmatprep.subr.bf16.mxu0 0
    %461 = vmatpush1.bf16.msra.mxu0 0
    %462 = vmatprep.subr.bf16.mxu0 0
    %463 = vmatpush1.bf16.msra.mxu0 0
    %464 = vmatprep.subr.bf16.mxu0 0
    %465 = vmatpush1.bf16.msra.mxu0 0
    %466 = vmatprep.subr.bf16.mxu0 0
    %467 = vmatpush1.bf16.msra.mxu0 0
    %468 = vmatprep.subr.bf16.mxu0 0
    %469 = vmatpush1.bf16.msra.mxu0 0
    %470 = vmatprep.subr.bf16.mxu0 0
    %471 = vmatpush1.bf16.msra.mxu0 0
    %472 = vmatprep.subr.bf16.mxu0 0
    %473 = vmatpush1.bf16.msra.mxu0 0
    %474 = vmatprep.subr.bf16.mxu0 0
    %475 = vmatpush1.bf16.msra.mxu0 0
    %476 = vmatprep.subr.bf16.mxu0 0
    %477 = vmatpush1.bf16.msra.mxu0 0
    %478 = vmatprep.subr.bf16.mxu0 0
    %479 = vmatpush1.bf16.msra.mxu0 0
    %480 = vmatprep.mubr.bf16.mxu0 0
    %481 = vmatmul.mubr.bf16.gmra.mrb[0].mxu0 %v446
    %v482 = vpop.f32.mrb[0].mxu0
    %v483 = vadd.f32 %v125, %v482
    %v484 = vpop.f32.mrb[0].mxu0
    %v485 = vpop.f32.mrb[0].mxu0
    %v486 = vpop.f32.mrb[0].mxu0
    %487 = vdwg.mxu0
    %v489 = vrot.slane %v483, 1
    %v492 = vadd.f32 %v442, %v483
    %v493 = vadd.f32 %v443, %v489
    %v494 = vxor.u32 %v492, 2147483648
    %v495 = vxor.u32 %v493, 2147483648
    %v496 = vmul.f32 %v494, 1.442695
    %v497 = vpow.pop %v496
    %v498 = vmul.f32 %v495, 1.442695
    %v499 = vpow.pop %v498
    %v500 = vadd.f32 %v497, 1.0
    %v501 = vadd.f32 %v499, 1.0
    %v502 = vrcp.pop %v500
    %v503 = vmul.f32 1.0, %v502
    %v504 = vrcp.pop %v501
    %v505 = vmul.f32 1.0, %v504
    %506 = vrot.lane.b32.xlu0 %v483, 64
    %v507 = vpop.permute.xlu0 %506
    %508 = vrot.lane.b32.xlu0 %v489, 64
    %v509 = vpop.permute.xlu0 %508
    %v512 = vmul.f32 %v503, %v507
    %v513 = vmul.f32 %v505, %v509
    %516 = vrot.lane.b32.xlu0 %v512, 64
    %v517 = vpop.permute.xlu0 %516
    %518 = vrot.lane.b32.xlu0 %v513, 64
    %v519 = vpop.permute.xlu0 %518
    %v522 = vadd.f32 %v442, %v517
    %v523 = vadd.f32 %v443, %v519
    %v524 = vtanh.pop %v522
    %v525 = vtanh.pop %v523
    %v526 = vsub.f32 1.0, %v503
    %v527 = vsub.f32 1.0, %v505
    %530 = vrot.lane.b32.xlu0 %v524, 96
    %v531 = vpop.permute.xlu0 %530
    %532 = vrot.lane.b32.xlu0 %v525, 96
    %v533 = vpop.permute.xlu0 %532
    %v536 = vmul.f32 %v526, %v531
    %v537 = vmul.f32 %v527, %v533
    %v539 = vrot.slane %v413, 1
    %540 = vrot.lane.b32.xlu0 %v413, 32
    %v541 = vpop.permute.xlu0 %540
    %542 = vrot.lane.b32.xlu0 %v539, 32
    %v543 = vpop.permute.xlu0 %542
    %v546 = vmul.f32 %v503, %v541
    %v547 = vmul.f32 %v505, %v543
    %v548 = vadd.f32 %v536, %v546
    %v549 = vadd.f32 %v537, %v547
    %s550 = sadd.s32 %s26, 2
    %v551 = vstv %s550
    %vm552 = vcmp.lt.s32.totalorder %v551, %v53
    %v553 = vsel %vm552, 1, 0
    %554 = vset.pattern.permute.xlu0 0
    %555 = vperm.xlu0 %554, %v553
    %v556 = vpop.permute.xlu0 %555
    %vm557 = vcmp.eq.s32.totalorder %v556, 1
    %v560 = vrot.slane %v549, 7
    %v561 = vsel %vm255, %v560, %v548
    %562 = vrot.lane.b32.xlu0 %v561, 96
    %v563 = vpop.permute.xlu0 %562
    %v565 = vsel %vm557, %v563, %v413
    %v566 = vsel %vm557, %v563, 0.0
    %v569 = vunpack.c.l.s4 1966171168
    %v570 = vunpack.c.0.s8 %v569
    %v571 = vlaneseq
    %v572 = vshrl.u32 %v571, 7
    %v573 = vsub.s32 %v570, %v572
    %v574 = vrot.slane %v566, %v573
    %v575 = vcombine.high %v574, %v574
    %v577 = vunpack.c.l.s4 1966171168
    %v578 = vunpack.c.0.s8 %v577
    %v579 = vlaneseq
    %v580 = vshrl.u32 %v579, 7
    %v581 = vsub.s32 %v578, %v580
    %v582 = vrot.slane %v574, %v581
    %v584 = vunpack.c.l.s4 1966171168
    %v585 = vunpack.c.0.s8 %v584
    %v586 = vlaneseq
    %v587 = vshrl.u32 %v586, 7
    %v588 = vsub.s32 %v585, %v587
    %v589 = vrot.slane %v575, %v588
    %592 = vst.msk [vmem:[%s7 + $0x2] sm:$0x1] %vm287, %v582
    %593 = vst.msk [vmem:[%s7 + $0xa] sm:$0x1] %vm287, %v589
    %v594 = vld [vmem:[#allocation2 + $0x3] sm:$0x1]
    %v595 = vld [vmem:[#allocation2 + $0xb] sm:$0x1]
    %v596 = vpack.c.bf16 %v565, %v565
    %v598 = vsel %vm139, %v596, 0
    %600 = vmatprep.subr.bf16.mxu0 0
    %601 = vmatpush1.bf16.msra.mxu0 %v135
    %602 = vmatprep.subr.bf16.mxu0 0
    %603 = vmatpush1.bf16.msra.mxu0 %v136
    %604 = vmatprep.subr.bf16.mxu0 0
    %605 = vmatpush1.bf16.msra.mxu0 0
    %606 = vmatprep.subr.bf16.mxu0 0
    %607 = vmatpush1.bf16.msra.mxu0 0
    %608 = vmatprep.subr.bf16.mxu0 0
    %609 = vmatpush1.bf16.msra.mxu0 0
    %610 = vmatprep.subr.bf16.mxu0 0
    %611 = vmatpush1.bf16.msra.mxu0 0
    %612 = vmatprep.subr.bf16.mxu0 0
    %613 = vmatpush1.bf16.msra.mxu0 0
    %614 = vmatprep.subr.bf16.mxu0 0
    %615 = vmatpush1.bf16.msra.mxu0 0
    %616 = vmatprep.subr.bf16.mxu0 0
    %617 = vmatpush1.bf16.msra.mxu0 0
    %618 = vmatprep.subr.bf16.mxu0 0
    %619 = vmatpush1.bf16.msra.mxu0 0
    %620 = vmatprep.subr.bf16.mxu0 0
    %621 = vmatpush1.bf16.msra.mxu0 0
    %622 = vmatprep.subr.bf16.mxu0 0
    %623 = vmatpush1.bf16.msra.mxu0 0
    %624 = vmatprep.subr.bf16.mxu0 0
    %625 = vmatpush1.bf16.msra.mxu0 0
    %626 = vmatprep.subr.bf16.mxu0 0
    %627 = vmatpush1.bf16.msra.mxu0 0
    %628 = vmatprep.subr.bf16.mxu0 0
    %629 = vmatpush1.bf16.msra.mxu0 0
    %630 = vmatprep.subr.bf16.mxu0 0
    %631 = vmatpush1.bf16.msra.mxu0 0
    %632 = vmatprep.mubr.bf16.mxu0 0
    %633 = vmatmul.mubr.bf16.gmra.mrb[0].mxu0 %v598
    %v634 = vpop.f32.mrb[0].mxu0
    %v635 = vadd.f32 %v125, %v634
    %v636 = vpop.f32.mrb[0].mxu0
    %v637 = vpop.f32.mrb[0].mxu0
    %v638 = vpop.f32.mrb[0].mxu0
    %639 = vdwg.mxu0
    %v641 = vrot.slane %v635, 1
    %v644 = vadd.f32 %v594, %v635
    %v645 = vadd.f32 %v595, %v641
    %v646 = vxor.u32 %v644, 2147483648
    %v647 = vxor.u32 %v645, 2147483648
    %v648 = vmul.f32 %v646, 1.442695
    %v649 = vpow.pop %v648
    %v650 = vmul.f32 %v647, 1.442695
    %v651 = vpow.pop %v650
    %v652 = vadd.f32 %v649, 1.0
    %v653 = vadd.f32 %v651, 1.0
    %v654 = vrcp.pop %v652
    %v655 = vmul.f32 1.0, %v654
    %v656 = vrcp.pop %v653
    %v657 = vmul.f32 1.0, %v656
    %658 = vrot.lane.b32.xlu0 %v635, 64
    %v659 = vpop.permute.xlu0 %658
    %660 = vrot.lane.b32.xlu0 %v641, 64
    %v661 = vpop.permute.xlu0 %660
    %v664 = vmul.f32 %v655, %v659
    %v665 = vmul.f32 %v657, %v661
    %668 = vrot.lane.b32.xlu0 %v664, 64
    %v669 = vpop.permute.xlu0 %668
    %670 = vrot.lane.b32.xlu0 %v665, 64
    %v671 = vpop.permute.xlu0 %670
    %v674 = vadd.f32 %v594, %v669
    %v675 = vadd.f32 %v595, %v671
    %v676 = vtanh.pop %v674
    %v677 = vtanh.pop %v675
    %v678 = vsub.f32 1.0, %v655
    %v679 = vsub.f32 1.0, %v657
    %682 = vrot.lane.b32.xlu0 %v676, 96
    %v683 = vpop.permute.xlu0 %682
    %684 = vrot.lane.b32.xlu0 %v677, 96
    %v685 = vpop.permute.xlu0 %684
    %v688 = vmul.f32 %v678, %v683
    %v689 = vmul.f32 %v679, %v685
    %v691 = vrot.slane %v565, 1
    %692 = vrot.lane.b32.xlu0 %v565, 32
    %v693 = vpop.permute.xlu0 %692
    %694 = vrot.lane.b32.xlu0 %v691, 32
    %v695 = vpop.permute.xlu0 %694
    %v698 = vmul.f32 %v655, %v693
    %v699 = vmul.f32 %v657, %v695
    %v700 = vadd.f32 %v688, %v698
    %v701 = vadd.f32 %v689, %v699
    %s702 = sadd.s32 %s26, 3
    %v703 = vstv %s702
    %vm704 = vcmp.lt.s32.totalorder %v703, %v53
    %v705 = vsel %vm704, 1, 0
    %706 = vset.pattern.permute.xlu0 0
    %707 = vperm.xlu0 %706, %v705
    %v708 = vpop.permute.xlu0 %707
    %vm709 = vcmp.eq.s32.totalorder %v708, 1
    %v712 = vrot.slane %v701, 7
    %v713 = vsel %vm255, %v712, %v700
    %714 = vrot.lane.b32.xlu0 %v713, 96
    %v715 = vpop.permute.xlu0 %714
    %v717 = vsel %vm709, %v715, %v565
    %v718 = vsel %vm709, %v715, 0.0
    %v721 = vunpack.c.l.s4 1966171168
    %v722 = vunpack.c.0.s8 %v721
    %v723 = vlaneseq
    %v724 = vshrl.u32 %v723, 7
    %v725 = vsub.s32 %v722, %v724
    %v726 = vrot.slane %v718, %v725
    %v727 = vcombine.high %v726, %v726
    %v729 = vunpack.c.l.s4 1966171168
    %v730 = vunpack.c.0.s8 %v729
    %v731 = vlaneseq
    %v732 = vshrl.u32 %v731, 7
    %v733 = vsub.s32 %v730, %v732
    %v734 = vrot.slane %v726, %v733
    %v736 = vunpack.c.l.s4 1966171168
    %v737 = vunpack.c.0.s8 %v736
    %v738 = vlaneseq
    %v739 = vshrl.u32 %v738, 7
    %v740 = vsub.s32 %v737, %v739
    %v741 = vrot.slane %v727, %v740
    %744 = vst.msk [vmem:[%s7 + $0x3] sm:$0x1] %vm287, %v734
    %745 = vst.msk [vmem:[%s7 + $0xb] sm:$0x1] %vm287, %v741
    %v746 = vld [vmem:[#allocation2 + $0x4] sm:$0x1]
    %v747 = vld [vmem:[#allocation2 + $0xc] sm:$0x1]
    %v748 = vpack.c.bf16 %v717, %v717
    %v750 = vsel %vm139, %v748, 0
    %752 = vmatprep.subr.bf16.mxu0 0
    %753 = vmatpush1.bf16.msra.mxu0 %v135
    %754 = vmatprep.subr.bf16.mxu0 0
    %755 = vmatpush1.bf16.msra.mxu0 %v136
    %756 = vmatprep.subr.bf16.mxu0 0
    %757 = vmatpush1.bf16.msra.mxu0 0
    %758 = vmatprep.subr.bf16.mxu0 0
    %759 = vmatpush1.bf16.msra.mxu0 0
    %760 = vmatprep.subr.bf16.mxu0 0
    %761 = vmatpush1.bf16.msra.mxu0 0
    %762 = vmatprep.subr.bf16.mxu0 0
    %763 = vmatpush1.bf16.msra.mxu0 0
    %764 = vmatprep.subr.bf16.mxu0 0
    %765 = vmatpush1.bf16.msra.mxu0 0
    %766 = vmatprep.subr.bf16.mxu0 0
    %767 = vmatpush1.bf16.msra.mxu0 0
    %768 = vmatprep.subr.bf16.mxu0 0
    %769 = vmatpush1.bf16.msra.mxu0 0
    %770 = vmatprep.subr.bf16.mxu0 0
    %771 = vmatpush1.bf16.msra.mxu0 0
    %772 = vmatprep.subr.bf16.mxu0 0
    %773 = vmatpush1.bf16.msra.mxu0 0
    %774 = vmatprep.subr.bf16.mxu0 0
    %775 = vmatpush1.bf16.msra.mxu0 0
    %776 = vmatprep.subr.bf16.mxu0 0
    %777 = vmatpush1.bf16.msra.mxu0 0
    %778 = vmatprep.subr.bf16.mxu0 0
    %779 = vmatpush1.bf16.msra.mxu0 0
    %780 = vmatprep.subr.bf16.mxu0 0
    %781 = vmatpush1.bf16.msra.mxu0 0
    %782 = vmatprep.subr.bf16.mxu0 0
    %783 = vmatpush1.bf16.msra.mxu0 0
    %784 = vmatprep.mubr.bf16.mxu0 0
    %785 = vmatmul.mubr.bf16.gmra.mrb[0].mxu0 %v750
    %v786 = vpop.f32.mrb[0].mxu0
    %v787 = vadd.f32 %v125, %v786
    %v788 = vpop.f32.mrb[0].mxu0
    %v789 = vpop.f32.mrb[0].mxu0
    %v790 = vpop.f32.mrb[0].mxu0
    %791 = vdwg.mxu0
    %v793 = vrot.slane %v787, 1
    %v796 = vadd.f32 %v746, %v787
    %v797 = vadd.f32 %v747, %v793
    %v798 = vxor.u32 %v796, 2147483648
    %v799 = vxor.u32 %v797, 2147483648
    %v800 = vmul.f32 %v798, 1.442695
    %v801 = vpow.pop %v800
    %v802 = vmul.f32 %v799, 1.442695
    %v803 = vpow.pop %v802
    %v804 = vadd.f32 %v801, 1.0
    %v805 = vadd.f32 %v803, 1.0
    %v806 = vrcp.pop %v804
    %v807 = vmul.f32 1.0, %v806
    %v808 = vrcp.pop %v805
    %v809 = vmul.f32 1.0, %v808
    %810 = vrot.lane.b32.xlu0 %v787, 64
    %v811 = vpop.permute.xlu0 %810
    %812 = vrot.lane.b32.xlu0 %v793, 64
    %v813 = vpop.permute.xlu0 %812
    %v816 = vmul.f32 %v807, %v811
    %v817 = vmul.f32 %v809, %v813
    %820 = vrot.lane.b32.xlu0 %v816, 64
    %v821 = vpop.permute.xlu0 %820
    %822 = vrot.lane.b32.xlu0 %v817, 64
    %v823 = vpop.permute.xlu0 %822
    %v826 = vadd.f32 %v746, %v821
    %v827 = vadd.f32 %v747, %v823
    %v828 = vtanh.pop %v826
    %v829 = vtanh.pop %v827
    %v830 = vsub.f32 1.0, %v807
    %v831 = vsub.f32 1.0, %v809
    %834 = vrot.lane.b32.xlu0 %v828, 96
    %v835 = vpop.permute.xlu0 %834
    %836 = vrot.lane.b32.xlu0 %v829, 96
    %v837 = vpop.permute.xlu0 %836
    %v840 = vmul.f32 %v830, %v835
    %v841 = vmul.f32 %v831, %v837
    %v843 = vrot.slane %v717, 1
    %844 = vrot.lane.b32.xlu0 %v717, 32
    %v845 = vpop.permute.xlu0 %844
    %846 = vrot.lane.b32.xlu0 %v843, 32
    %v847 = vpop.permute.xlu0 %846
    %v850 = vmul.f32 %v807, %v845
    %v851 = vmul.f32 %v809, %v847
    %v852 = vadd.f32 %v840, %v850
    %v853 = vadd.f32 %v841, %v851
    %s854 = sadd.s32 %s26, 4
    %v855 = vstv %s854
    %vm856 = vcmp.lt.s32.totalorder %v855, %v53
    %v857 = vsel %vm856, 1, 0
    %858 = vset.pattern.permute.xlu0 0
    %859 = vperm.xlu0 %858, %v857
    %v860 = vpop.permute.xlu0 %859
    %vm861 = vcmp.eq.s32.totalorder %v860, 1
    %v864 = vrot.slane %v853, 7
    %v865 = vsel %vm255, %v864, %v852
    %866 = vrot.lane.b32.xlu0 %v865, 96
    %v867 = vpop.permute.xlu0 %866
    %v869 = vsel %vm861, %v867, %v717
    %v870 = vsel %vm861, %v867, 0.0
    %v873 = vunpack.c.l.s4 1966171168
    %v874 = vunpack.c.0.s8 %v873
    %v875 = vlaneseq
    %v876 = vshrl.u32 %v875, 7
    %v877 = vsub.s32 %v874, %v876
    %v878 = vrot.slane %v870, %v877
    %v879 = vcombine.high %v878, %v878
    %v881 = vunpack.c.l.s4 1966171168
    %v882 = vunpack.c.0.s8 %v881
    %v883 = vlaneseq
    %v884 = vshrl.u32 %v883, 7
    %v885 = vsub.s32 %v882, %v884
    %v886 = vrot.slane %v878, %v885
    %v888 = vunpack.c.l.s4 1966171168
    %v889 = vunpack.c.0.s8 %v888
    %v890 = vlaneseq
    %v891 = vshrl.u32 %v890, 7
    %v892 = vsub.s32 %v889, %v891
    %v893 = vrot.slane %v879, %v892
    %896 = vst.msk [vmem:[%s7 + $0x4] sm:$0x1] %vm287, %v886
    %897 = vst.msk [vmem:[%s7 + $0xc] sm:$0x1] %vm287, %v893
    %v898 = vld [vmem:[#allocation2 + $0x5] sm:$0x1]
    %v899 = vld [vmem:[#allocation2 + $0xd] sm:$0x1]
    %v900 = vpack.c.bf16 %v869, %v869
    %v902 = vsel %vm139, %v900, 0
    %904 = vmatprep.subr.bf16.mxu0 0
    %905 = vmatpush1.bf16.msra.mxu0 %v135
    %906 = vmatprep.subr.bf16.mxu0 0
    %907 = vmatpush1.bf16.msra.mxu0 %v136
    %908 = vmatprep.subr.bf16.mxu0 0
    %909 = vmatpush1.bf16.msra.mxu0 0
    %910 = vmatprep.subr.bf16.mxu0 0
    %911 = vmatpush1.bf16.msra.mxu0 0
    %912 = vmatprep.subr.bf16.mxu0 0
    %913 = vmatpush1.bf16.msra.mxu0 0
    %914 = vmatprep.subr.bf16.mxu0 0
    %915 = vmatpush1.bf16.msra.mxu0 0
    %916 = vmatprep.subr.bf16.mxu0 0
    %917 = vmatpush1.bf16.msra.mxu0 0
    %918 = vmatprep.subr.bf16.mxu0 0
    %919 = vmatpush1.bf16.msra.mxu0 0
    %920 = vmatprep.subr.bf16.mxu0 0
    %921 = vmatpush1.bf16.msra.mxu0 0
    %922 = vmatprep.subr.bf16.mxu0 0
    %923 = vmatpush1.bf16.msra.mxu0 0
    %924 = vmatprep.subr.bf16.mxu0 0
    %925 = vmatpush1.bf16.msra.mxu0 0
    %926 = vmatprep.subr.bf16.mxu0 0
    %927 = vmatpush1.bf16.msra.mxu0 0
    %928 = vmatprep.subr.bf16.mxu0 0
    %929 = vmatpush1.bf16.msra.mxu0 0
    %930 = vmatprep.subr.bf16.mxu0 0
    %931 = vmatpush1.bf16.msra.mxu0 0
    %932 = vmatprep.subr.bf16.mxu0 0
    %933 = vmatpush1.bf16.msra.mxu0 0
    %934 = vmatprep.subr.bf16.mxu0 0
    %935 = vmatpush1.bf16.msra.mxu0 0
    %936 = vmatprep.mubr.bf16.mxu0 0
    %937 = vmatmul.mubr.bf16.gmra.mrb[0].mxu0 %v902
    %v938 = vpop.f32.mrb[0].mxu0
    %v939 = vadd.f32 %v125, %v938
    %v940 = vpop.f32.mrb[0].mxu0
    %v941 = vpop.f32.mrb[0].mxu0
    %v942 = vpop.f32.mrb[0].mxu0
    %943 = vdwg.mxu0
    %v945 = vrot.slane %v939, 1
    %v948 = vadd.f32 %v898, %v939
    %v949 = vadd.f32 %v899, %v945
    %v950 = vxor.u32 %v948, 2147483648
    %v951 = vxor.u32 %v949, 2147483648
    %v952 = vmul.f32 %v950, 1.442695
    %v953 = vpow.pop %v952
    %v954 = vmul.f32 %v951, 1.442695
    %v955 = vpow.pop %v954
    %v956 = vadd.f32 %v953, 1.0
    %v957 = vadd.f32 %v955, 1.0
    %v958 = vrcp.pop %v956
    %v959 = vmul.f32 1.0, %v958
    %v960 = vrcp.pop %v957
    %v961 = vmul.f32 1.0, %v960
    %962 = vrot.lane.b32.xlu0 %v939, 64
    %v963 = vpop.permute.xlu0 %962
    %964 = vrot.lane.b32.xlu0 %v945, 64
    %v965 = vpop.permute.xlu0 %964
    %v968 = vmul.f32 %v959, %v963
    %v969 = vmul.f32 %v961, %v965
    %972 = vrot.lane.b32.xlu0 %v968, 64
    %v973 = vpop.permute.xlu0 %972
    %974 = vrot.lane.b32.xlu0 %v969, 64
    %v975 = vpop.permute.xlu0 %974
    %v978 = vadd.f32 %v898, %v973
    %v979 = vadd.f32 %v899, %v975
    %v980 = vtanh.pop %v978
    %v981 = vtanh.pop %v979
    %v982 = vsub.f32 1.0, %v959
    %v983 = vsub.f32 1.0, %v961
    %986 = vrot.lane.b32.xlu0 %v980, 96
    %v987 = vpop.permute.xlu0 %986
    %988 = vrot.lane.b32.xlu0 %v981, 96
    %v989 = vpop.permute.xlu0 %988
    %v992 = vmul.f32 %v982, %v987
    %v993 = vmul.f32 %v983, %v989
    %v995 = vrot.slane %v869, 1
    %996 = vrot.lane.b32.xlu0 %v869, 32
    %v997 = vpop.permute.xlu0 %996
    %998 = vrot.lane.b32.xlu0 %v995, 32
    %v999 = vpop.permute.xlu0 %998
    %v1002 = vmul.f32 %v959, %v997
    %v1003 = vmul.f32 %v961, %v999
    %v1004 = vadd.f32 %v992, %v1002
    %v1005 = vadd.f32 %v993, %v1003
    %s1006 = sadd.s32 %s26, 5
    %v1007 = vstv %s1006
    %vm1008 = vcmp.lt.s32.totalorder %v1007, %v53
    %v1009 = vsel %vm1008, 1, 0
    %1010 = vset.pattern.permute.xlu0 0
    %1011 = vperm.xlu0 %1010, %v1009
    %v1012 = vpop.permute.xlu0 %1011
    %vm1013 = vcmp.eq.s32.totalorder %v1012, 1
    %v1016 = vrot.slane %v1005, 7
    %v1017 = vsel %vm255, %v1016, %v1004
    %1018 = vrot.lane.b32.xlu0 %v1017, 96
    %v1019 = vpop.permute.xlu0 %1018
    %v1021 = vsel %vm1013, %v1019, %v869
    %v1022 = vsel %vm1013, %v1019, 0.0
    %v1025 = vunpack.c.l.s4 1966171168
    %v1026 = vunpack.c.0.s8 %v1025
    %v1027 = vlaneseq
    %v1028 = vshrl.u32 %v1027, 7
    %v1029 = vsub.s32 %v1026, %v1028
    %v1030 = vrot.slane %v1022, %v1029
    %v1031 = vcombine.high %v1030, %v1030
    %v1033 = vunpack.c.l.s4 1966171168
    %v1034 = vunpack.c.0.s8 %v1033
    %v1035 = vlaneseq
    %v1036 = vshrl.u32 %v1035, 7
    %v1037 = vsub.s32 %v1034, %v1036
    %v1038 = vrot.slane %v1030, %v1037
    %v1040 = vunpack.c.l.s4 1966171168
    %v1041 = vunpack.c.0.s8 %v1040
    %v1042 = vlaneseq
    %v1043 = vshrl.u32 %v1042, 7
    %v1044 = vsub.s32 %v1041, %v1043
    %v1045 = vrot.slane %v1031, %v1044
    %1048 = vst.msk [vmem:[%s7 + $0x5] sm:$0x1] %vm287, %v1038
    %1049 = vst.msk [vmem:[%s7 + $0xd] sm:$0x1] %vm287, %v1045
    %v1050 = vld [vmem:[#allocation2 + $0x6] sm:$0x1]
    %v1051 = vld [vmem:[#allocation2 + $0xe] sm:$0x1]
    %v1052 = vpack.c.bf16 %v1021, %v1021
    %v1054 = vsel %vm139, %v1052, 0
    %1056 = vmatprep.subr.bf16.mxu0 0
    %1057 = vmatpush1.bf16.msra.mxu0 %v135
    %1058 = vmatprep.subr.bf16.mxu0 0
    %1059 = vmatpush1.bf16.msra.mxu0 %v136
    %1060 = vmatprep.subr.bf16.mxu0 0
    %1061 = vmatpush1.bf16.msra.mxu0 0
    %1062 = vmatprep.subr.bf16.mxu0 0
    %1063 = vmatpush1.bf16.msra.mxu0 0
    %1064 = vmatprep.subr.bf16.mxu0 0
    %1065 = vmatpush1.bf16.msra.mxu0 0
    %1066 = vmatprep.subr.bf16.mxu0 0
    %1067 = vmatpush1.bf16.msra.mxu0 0
    %1068 = vmatprep.subr.bf16.mxu0 0
    %1069 = vmatpush1.bf16.msra.mxu0 0
    %1070 = vmatprep.subr.bf16.mxu0 0
    %1071 = vmatpush1.bf16.msra.mxu0 0
    %1072 = vmatprep.subr.bf16.mxu0 0
    %1073 = vmatpush1.bf16.msra.mxu0 0
    %1074 = vmatprep.subr.bf16.mxu0 0
    %1075 = vmatpush1.bf16.msra.mxu0 0
    %1076 = vmatprep.subr.bf16.mxu0 0
    %1077 = vmatpush1.bf16.msra.mxu0 0
    %1078 = vmatprep.subr.bf16.mxu0 0
    %1079 = vmatpush1.bf16.msra.mxu0 0
    %1080 = vmatprep.subr.bf16.mxu0 0
    %1081 = vmatpush1.bf16.msra.mxu0 0
    %1082 = vmatprep.subr.bf16.mxu0 0
    %1083 = vmatpush1.bf16.msra.mxu0 0
    %1084 = vmatprep.subr.bf16.mxu0 0
    %1085 = vmatpush1.bf16.msra.mxu0 0
    %1086 = vmatprep.subr.bf16.mxu0 0
    %1087 = vmatpush1.bf16.msra.mxu0 0
    %1088 = vmatprep.mubr.bf16.mxu0 0
    %1089 = vmatmul.mubr.bf16.gmra.mrb[0].mxu0 %v1054
    %v1090 = vpop.f32.mrb[0].mxu0
    %v1091 = vadd.f32 %v125, %v1090
    %v1092 = vpop.f32.mrb[0].mxu0
    %v1093 = vpop.f32.mrb[0].mxu0
    %v1094 = vpop.f32.mrb[0].mxu0
    %1095 = vdwg.mxu0
    %v1097 = vrot.slane %v1091, 1
    %v1100 = vadd.f32 %v1050, %v1091
    %v1101 = vadd.f32 %v1051, %v1097
    %v1102 = vxor.u32 %v1100, 2147483648
    %v1103 = vxor.u32 %v1101, 2147483648
    %v1104 = vmul.f32 %v1102, 1.442695
    %v1105 = vpow.pop %v1104
    %v1106 = vmul.f32 %v1103, 1.442695
    %v1107 = vpow.pop %v1106
    %v1108 = vadd.f32 %v1105, 1.0
    %v1109 = vadd.f32 %v1107, 1.0
    %v1110 = vrcp.pop %v1108
    %v1111 = vmul.f32 1.0, %v1110
    %v1112 = vrcp.pop %v1109
    %v1113 = vmul.f32 1.0, %v1112
    %1114 = vrot.lane.b32.xlu0 %v1091, 64
    %v1115 = vpop.permute.xlu0 %1114
    %1116 = vrot.lane.b32.xlu0 %v1097, 64
    %v1117 = vpop.permute.xlu0 %1116
    %v1120 = vmul.f32 %v1111, %v1115
    %v1121 = vmul.f32 %v1113, %v1117
    %1124 = vrot.lane.b32.xlu0 %v1120, 64
    %v1125 = vpop.permute.xlu0 %1124
    %1126 = vrot.lane.b32.xlu0 %v1121, 64
    %v1127 = vpop.permute.xlu0 %1126
    %v1130 = vadd.f32 %v1050, %v1125
    %v1131 = vadd.f32 %v1051, %v1127
    %v1132 = vtanh.pop %v1130
    %v1133 = vtanh.pop %v1131
    %v1134 = vsub.f32 1.0, %v1111
    %v1135 = vsub.f32 1.0, %v1113
    %1138 = vrot.lane.b32.xlu0 %v1132, 96
    %v1139 = vpop.permute.xlu0 %1138
    %1140 = vrot.lane.b32.xlu0 %v1133, 96
    %v1141 = vpop.permute.xlu0 %1140
    %v1144 = vmul.f32 %v1134, %v1139
    %v1145 = vmul.f32 %v1135, %v1141
    %v1147 = vrot.slane %v1021, 1
    %1148 = vrot.lane.b32.xlu0 %v1021, 32
    %v1149 = vpop.permute.xlu0 %1148
    %1150 = vrot.lane.b32.xlu0 %v1147, 32
    %v1151 = vpop.permute.xlu0 %1150
    %v1154 = vmul.f32 %v1111, %v1149
    %v1155 = vmul.f32 %v1113, %v1151
    %v1156 = vadd.f32 %v1144, %v1154
    %v1157 = vadd.f32 %v1145, %v1155
    %s1158 = sadd.s32 %s26, 6
    %v1159 = vstv %s1158
    %vm1160 = vcmp.lt.s32.totalorder %v1159, %v53
    %v1161 = vsel %vm1160, 1, 0
    %1162 = vset.pattern.permute.xlu0 0
    %1163 = vperm.xlu0 %1162, %v1161
    %v1164 = vpop.permute.xlu0 %1163
    %vm1165 = vcmp.eq.s32.totalorder %v1164, 1
    %v1168 = vrot.slane %v1157, 7
    %v1169 = vsel %vm255, %v1168, %v1156
    %1170 = vrot.lane.b32.xlu0 %v1169, 96
    %v1171 = vpop.permute.xlu0 %1170
    %v1173 = vsel %vm1165, %v1171, %v1021
    %v1174 = vsel %vm1165, %v1171, 0.0
    %v1177 = vunpack.c.l.s4 1966171168
    %v1178 = vunpack.c.0.s8 %v1177
    %v1179 = vlaneseq
    %v1180 = vshrl.u32 %v1179, 7
    %v1181 = vsub.s32 %v1178, %v1180
    %v1182 = vrot.slane %v1174, %v1181
    %v1183 = vcombine.high %v1182, %v1182
    %v1185 = vunpack.c.l.s4 1966171168
    %v1186 = vunpack.c.0.s8 %v1185
    %v1187 = vlaneseq
    %v1188 = vshrl.u32 %v1187, 7
    %v1189 = vsub.s32 %v1186, %v1188
    %v1190 = vrot.slane %v1182, %v1189
    %v1192 = vunpack.c.l.s4 1966171168
    %v1193 = vunpack.c.0.s8 %v1192
    %v1194 = vlaneseq
    %v1195 = vshrl.u32 %v1194, 7
    %v1196 = vsub.s32 %v1193, %v1195
    %v1197 = vrot.slane %v1183, %v1196
    %1200 = vst.msk [vmem:[%s7 + $0x6] sm:$0x1] %vm287, %v1190
    %1201 = vst.msk [vmem:[%s7 + $0xe] sm:$0x1] %vm287, %v1197
    %v1202 = vld [vmem:[#allocation2 + $0x7] sm:$0x1]
    %v1203 = vld [vmem:[#allocation2 + $0xf] sm:$0x1]
    %v1204 = vpack.c.bf16 %v1173, %v1173
    %v1206 = vsel %vm139, %v1204, 0
    %1208 = vmatprep.subr.bf16.mxu0 0
    %1209 = vmatpush1.bf16.msra.mxu0 %v135
    %1210 = vmatprep.subr.bf16.mxu0 0
    %1211 = vmatpush1.bf16.msra.mxu0 %v136
    %1212 = vmatprep.subr.bf16.mxu0 0
    %1213 = vmatpush1.bf16.msra.mxu0 0
    %1214 = vmatprep.subr.bf16.mxu0 0
    %1215 = vmatpush1.bf16.msra.mxu0 0
    %1216 = vmatprep.subr.bf16.mxu0 0
    %1217 = vmatpush1.bf16.msra.mxu0 0
    %1218 = vmatprep.subr.bf16.mxu0 0
    %1219 = vmatpush1.bf16.msra.mxu0 0
    %1220 = vmatprep.subr.bf16.mxu0 0
    %1221 = vmatpush1.bf16.msra.mxu0 0
    %1222 = vmatprep.subr.bf16.mxu0 0
    %1223 = vmatpush1.bf16.msra.mxu0 0
    %1224 = vmatprep.subr.bf16.mxu0 0
    %1225 = vmatpush1.bf16.msra.mxu0 0
    %1226 = vmatprep.subr.bf16.mxu0 0
    %1227 = vmatpush1.bf16.msra.mxu0 0
    %1228 = vmatprep.subr.bf16.mxu0 0
    %1229 = vmatpush1.bf16.msra.mxu0 0
    %1230 = vmatprep.subr.bf16.mxu0 0
    %1231 = vmatpush1.bf16.msra.mxu0 0
    %1232 = vmatprep.subr.bf16.mxu0 0
    %1233 = vmatpush1.bf16.msra.mxu0 0
    %1234 = vmatprep.subr.bf16.mxu0 0
    %1235 = vmatpush1.bf16.msra.mxu0 0
    %1236 = vmatprep.subr.bf16.mxu0 0
    %1237 = vmatpush1.bf16.msra.mxu0 0
    %1238 = vmatprep.subr.bf16.mxu0 0
    %1239 = vmatpush1.bf16.msra.mxu0 0
    %1240 = vmatprep.mubr.bf16.mxu0 0
    %1241 = vmatmul.mubr.bf16.gmra.mrb[0].mxu0 %v1206
    %v1242 = vpop.f32.mrb[0].mxu0
    %v1243 = vadd.f32 %v125, %v1242
    %v1244 = vpop.f32.mrb[0].mxu0
    %v1245 = vpop.f32.mrb[0].mxu0
    %v1246 = vpop.f32.mrb[0].mxu0
    %1247 = vdwg.mxu0
    %v1249 = vrot.slane %v1243, 1
    %v1252 = vadd.f32 %v1202, %v1243
    %v1253 = vadd.f32 %v1203, %v1249
    %v1254 = vxor.u32 %v1252, 2147483648
    %v1255 = vxor.u32 %v1253, 2147483648
    %v1256 = vmul.f32 %v1254, 1.442695
    %v1257 = vpow.pop %v1256
    %v1258 = vmul.f32 %v1255, 1.442695
    %v1259 = vpow.pop %v1258
    %v1260 = vadd.f32 %v1257, 1.0
    %v1261 = vadd.f32 %v1259, 1.0
    %v1262 = vrcp.pop %v1260
    %v1263 = vmul.f32 1.0, %v1262
    %v1264 = vrcp.pop %v1261
    %v1265 = vmul.f32 1.0, %v1264
    %1266 = vrot.lane.b32.xlu0 %v1243, 64
    %v1267 = vpop.permute.xlu0 %1266
    %1268 = vrot.lane.b32.xlu0 %v1249, 64
    %v1269 = vpop.permute.xlu0 %1268
    %v1272 = vmul.f32 %v1263, %v1267
    %v1273 = vmul.f32 %v1265, %v1269
    %1276 = vrot.lane.b32.xlu0 %v1272, 64
    %v1277 = vpop.permute.xlu0 %1276
    %1278 = vrot.lane.b32.xlu0 %v1273, 64
    %v1279 = vpop.permute.xlu0 %1278
    %v1282 = vadd.f32 %v1202, %v1277
    %v1283 = vadd.f32 %v1203, %v1279
    %v1284 = vtanh.pop %v1282
    %v1285 = vtanh.pop %v1283
    %v1286 = vsub.f32 1.0, %v1263
    %v1287 = vsub.f32 1.0, %v1265
    %1290 = vrot.lane.b32.xlu0 %v1284, 96
    %v1291 = vpop.permute.xlu0 %1290
    %1292 = vrot.lane.b32.xlu0 %v1285, 96
    %v1293 = vpop.permute.xlu0 %1292
    %v1296 = vmul.f32 %v1286, %v1291
    %v1297 = vmul.f32 %v1287, %v1293
    %v1299 = vrot.slane %v1173, 1
    %1300 = vrot.lane.b32.xlu0 %v1173, 32
    %v1301 = vpop.permute.xlu0 %1300
    %1302 = vrot.lane.b32.xlu0 %v1299, 32
    %v1303 = vpop.permute.xlu0 %1302
    %v1306 = vmul.f32 %v1263, %v1301
    %v1307 = vmul.f32 %v1265, %v1303
    %v1308 = vadd.f32 %v1296, %v1306
    %v1309 = vadd.f32 %v1297, %v1307
    %s1310 = sadd.s32 %s26, 7
    %v1311 = vstv %s1310
    %vm1312 = vcmp.lt.s32.totalorder %v1311, %v53
    %v1313 = vsel %vm1312, 1, 0
    %1314 = vset.pattern.permute.xlu0 0
    %1315 = vperm.xlu0 %1314, %v1313
    %v1316 = vpop.permute.xlu0 %1315
    %vm1317 = vcmp.eq.s32.totalorder %v1316, 1
    %v1320 = vrot.slane %v1309, 7
    %v1321 = vsel %vm255, %v1320, %v1308
    %1322 = vrot.lane.b32.xlu0 %v1321, 96
    %v1323 = vpop.permute.xlu0 %1322
    %v1325 = vsel %vm1317, %v1323, %v1173
    %v1326 = vsel %vm1317, %v1323, 0.0
    %v1329 = vunpack.c.l.s4 1966171168
    %v1330 = vunpack.c.0.s8 %v1329
    %v1331 = vlaneseq
    %v1332 = vshrl.u32 %v1331, 7
    %v1333 = vsub.s32 %v1330, %v1332
    %v1334 = vrot.slane %v1326, %v1333
    %v1335 = vcombine.high %v1334, %v1334
    %v1337 = vunpack.c.l.s4 1966171168
    %v1338 = vunpack.c.0.s8 %v1337
    %v1339 = vlaneseq
    %v1340 = vshrl.u32 %v1339, 7
    %v1341 = vsub.s32 %v1338, %v1340
    %v1342 = vrot.slane %v1334, %v1341
    %v1344 = vunpack.c.l.s4 1966171168
    %v1345 = vunpack.c.0.s8 %v1344
    %v1346 = vlaneseq
    %v1347 = vshrl.u32 %v1346, 7
    %v1348 = vsub.s32 %v1345, %v1347
    %v1349 = vrot.slane %v1335, %v1348
    %1352 = vst.msk [vmem:[%s7 + $0x7] sm:$0x1] %vm287, %v1342
    %1353 = vst.msk [vmem:[%s7 + $0xf] sm:$0x1] %vm287, %v1349
    %vm1354 = vcmask 254976
    %1355 = vst.msk [vmem:[#allocation3] sm:$0x3] %vm1354, %v1325
  $region37: #{rnn_apc_forward.4} parent=0 // pred_fallthru
    _
  // Predicated region
  $region38: #{rnn_apc_forward.4} parent=0 // pred_check
    _
  $region39: #{rnn_apc_forward.4} parent=0 // pred_check_branch
    %1357 = sbr.rel (0) target = $region41
  $region40: #{rnn_apc_forward.4} parent=0 // pred_region
    _
  $region41: #{rnn_apc_forward.4} parent=0 // pred_fallthru
    _
  // Predicated region
  $region42: #{rnn_apc_forward.4} parent=0 // pred_check
    _
  $region43: #{rnn_apc_forward.4} parent=0 // pred_check_branch
    %1359 = sbr.rel (0) target = $region45
  $region44: #{rnn_apc_forward.4} parent=0 // pred_region
    _
  $region45: #{rnn_apc_forward.4} parent=0 // pred_fallthru
    _

// kernel: rnn_apc_forward.5
$region0: #{rnn_apc_forward.5}
  #allocation0 [shape = 'u32[]', space=smem, size = 0x4, offset = 0x4, fixed_abs, tag = 'smem constant byte address 0x4 - core index']
  #allocation1 [shape = 'u32[144,128]{1,0:T(1,128)}', space=vmem, size = 0x12000, scoped, tag = 'internal scratch']
  #allocation2 [shape = 'f32[2,8,96]{2,1,0:T(8,128)}', space=vmem, size = 0x2000, scoped, tag = 'scratch operand']
  #allocation3 [shape = 'f32[2,32]{1,0:T(2,128)}', space=vmem, size = 0x400, scoped, tag = 'scratch operand']
  #allocation4 [shape = 's32[1]{0}', space=sflag, size = 0x4, scoped, tag = 'scoped memory for rnn_apc_forward.5']
  #allocation5 [shape = 's32[1]{0:T(128)S(6)}', space=smem, size = 0x200, scoped, tag = 'prefetched SMEM operand 0']
  %s0 = inlined_call_operand.<no memory space> [shape: s32[1], index: 0, kind: input, shape index: {}]
  %s1 = inlined_call_operand.vmem [shape: f32[2,8,32], index: 1, kind: input, shape index: {}]
  %s2 = inlined_call_operand.vmem [shape: bf16[32,96], index: 2, kind: input, shape index: {}]
  %s3 = inlined_call_operand.vmem [shape: f32[1,96], index: 3, kind: input, shape index: {}]
  %s4 = inlined_call_operand.vmem [shape: bf16[32,96], index: 4, kind: input, shape index: {}]
  %s5 = inlined_call_operand.vmem [shape: f32[1,96], index: 5, kind: input, shape index: {}]
  %s6 = inlined_call_operand.vmem [shape: s32[2,1], index: 6, kind: input, shape index: {}]
  %s7 = inlined_call_operand.vmem [shape: f32[2,8,32], index: 7, kind: output, shape index: {}]
  %s8 = sld [smem:[#allocation0]]
  $region46: #{rnn_apc_forward.5} parent=0
    _
  %s10 = ssub.s32 1, %s8
  %s11 = scalar_select 0, %s10, %s8
  %12 = sst [smem:[#allocation5]] %s0
  // Predicated region
  $region2: #{rnn_apc_forward.5} parent=0 // pred_check
    _
  $region3: #{rnn_apc_forward.5} parent=0 // pred_check_branch
    %14 = sbr.rel (0) target = $region5
  $region4: #{rnn_apc_forward.5} parent=0 // pred_region
    _
  $region5: #{rnn_apc_forward.5} parent=0 // pred_fallthru
    _
  // Predicated region
  $region6: #{rnn_apc_forward.5} parent=0 // pred_check
    _
  $region7: #{rnn_apc_forward.5} parent=0 // pred_check_branch
    %16 = sbr.rel (0) target = $region9
  $region8: #{rnn_apc_forward.5} parent=0 // pred_region
    _
  $region9: #{rnn_apc_forward.5} parent=0 // pred_fallthru
    _
  // Predicated region
  $region10: #{rnn_apc_forward.5} parent=0 // pred_check
    _
  $region11: #{rnn_apc_forward.5} parent=0 // pred_check_branch
    %18 = sbr.rel (0) target = $region13
  $region12: #{rnn_apc_forward.5} parent=0 // pred_region
    _
  $region13: #{rnn_apc_forward.5} parent=0 // pred_fallthru
    _
  // Predicated region
  $region14: #{rnn_apc_forward.5} parent=0 // pred_check
    _
  $region15: #{rnn_apc_forward.5} parent=0 // pred_check_branch
    %20 = sbr.rel (0) target = $region17
  $region16: #{rnn_apc_forward.5} parent=0 // pred_region
    _
  $region17: #{rnn_apc_forward.5} parent=0 // pred_fallthru
    _
  // Predicated region
  $region18: #{rnn_apc_forward.5} parent=0 // pred_check
    _
  $region19: #{rnn_apc_forward.5} parent=0 // pred_check_branch
    %22 = sbr.rel (0) target = $region21
  $region20: #{rnn_apc_forward.5} parent=0 // pred_region
    _
  $region21: #{rnn_apc_forward.5} parent=0 // pred_fallthru
    _
  // Predicated region
  $region22: #{rnn_apc_forward.5} parent=0 // pred_check
    _
  $region23: #{rnn_apc_forward.5} parent=0 // pred_check_branch
    %24 = sbr.rel (0) target = $region25
  $region24: #{rnn_apc_forward.5} parent=0 // pred_region
    _
  $region25: #{rnn_apc_forward.5} parent=0 // pred_fallthru
    _
  %s26 = smul.u32 0, 8
  %s27 = sld [smem:[#allocation5]]
  %p28 = scmp.eq.s32.totalorder 0, 0
  // Predicated region
  $region26: #{rnn_apc_forward.5} parent=0 // pred_check
    %p29 = pneg %p28
  $region27: #{rnn_apc_forward.5} parent=0 // pred_check_branch
    %31 = sbr.rel (%p29) target = $region29
  $region28: #{rnn_apc_forward.5} parent=0 // pred_region
    %vm32 = vcmask 254976
    %33 = vst.msk [vmem:[#allocation3] sm:$0x3] %vm32, 0.0
  $region29: #{rnn_apc_forward.5} parent=0 // pred_fallthru
    _
  %p34 = scmp.ge.s32.totalorder %s26, %s27
  // Predicated region
  $region30: #{rnn_apc_forward.5} parent=0 // pred_check
    %p35 = pneg %p34
  $region31: #{rnn_apc_forward.5} parent=0 // pred_check_branch
    %37 = sbr.rel (%p35) target = $region33
  $region32: #{rnn_apc_forward.5} parent=0 // pred_region
    %vm38 = vcmask 261120
    %39 = vst.msk [vmem:[%s7] sm:$0xff] %vm38, 0.0
    %40 = vst.msk [vmem:[%s7 + $0x8] sm:$0xff] %vm38, 0.0
  $region33: #{rnn_apc_forward.5} parent=0 // pred_fallthru
    _
  %p41 = scmp.lt.s32.totalorder %s26, %s27
  // Predicated region
  $region34: #{rnn_apc_forward.5} parent=0 // pred_check
    %p42 = pneg %p41
  $region35: #{rnn_apc_forward.5} parent=0 // pred_check_branch
    %44 = sbr.rel (%p42) target = $region37
  $region36: #{rnn_apc_forward.5} parent=0 // pred_region
    %v45 = vld [vmem:[%s2] sm:$0xf]
    %v46 = vld [vmem:[%s2 + $0x4] sm:$0xf]
    %v47 = vld [vmem:[%s2 + $0x8] sm:$0xf]
    %v48 = vld [vmem:[%s2 + $0xc] sm:$0xf]
    %v49 = vld [vmem:[%s3] sm:$0x1]
    %v50 = vld [vmem:[%s4] sm:$0xf]
    %v51 = vld [vmem:[%s4 + $0x4] sm:$0xf]
    %v52 = vld [vmem:[%s4 + $0x8] sm:$0xf]
    %v53 = vld [vmem:[%s4 + $0xc] sm:$0xf]
    %v54 = vld [vmem:[%s5] sm:$0x1]
    %v55 = vld [vmem:[%s6] sm:$0x3]
    %v56 = vld [vmem:[%s1] sm:$0xff]
    %v57 = vld [vmem:[%s1 + $0x8] sm:$0xff]
    %v58 = vpack.c.bf16 %v57, %v56
    %v60 = vlaneseq
    %v61 = vshrl.u32 %v60, 7
    %v62 = vsub.s32 0, %v61
    %v63 = vrot.slane %v49, %v62
    %v69 = vunpack.c.l.b16 %v45
    %v70 = vunpack.c.l.b16 %v46
    %v71 = vunpack.c.l.b16 %v47
    %v72 = vunpack.c.l.b16 %v48
    %v73 = vpack.c.b16 %v70, %v69
    %v74 = vpack.c.b16 %v72, %v71
    %vm77 = vcmask 261120
    %v79 = vsel %vm77, %v58, 0
    %81 = vmatprep.subr.bf16.mxu0 0
    %82 = vmatpush1.bf16.msra.mxu0 %v73
    %83 = vmatprep.subr.bf16.mxu0 0
    %84 = vmatpush1.bf16.msra.mxu0 %v74
    %85 = vmatprep.subr.bf16.mxu0 0
    %86 = vmatpush1.bf16.msra.mxu0 0
    %87 = vmatprep.subr.bf16.mxu0 0
    %88 = vmatpush1.bf16.msra.mxu0 0
    %89 = vmatprep.subr.bf16.mxu0 0
    %90 = vmatpush1.bf16.msra.mxu0 0
    %91 = vmatprep.subr.bf16.mxu0 0
    %92 = vmatpush1.bf16.msra.mxu0 0
    %93 = vmatprep.subr.bf16.mxu0 0
    %94 = vmatpush1.bf16.msra.mxu0 0
    %95 = vmatprep.subr.bf16.mxu0 0
    %96 = vmatpush1.bf16.msra.mxu0 0
    %97 = vmatprep.subr.bf16.mxu0 0
    %98 = vmatpush1.bf16.msra.mxu0 0
    %99 = vmatprep.subr.bf16.mxu0 0
    %100 = vmatpush1.bf16.msra.mxu0 0
    %101 = vmatprep.subr.bf16.mxu0 0
    %102 = vmatpush1.bf16.msra.mxu0 0
    %103 = vmatprep.subr.bf16.mxu0 0
    %104 = vmatpush1.bf16.msra.mxu0 0
    %105 = vmatprep.subr.bf16.mxu0 0
    %106 = vmatpush1.bf16.msra.mxu0 0
    %107 = vmatprep.subr.bf16.mxu0 0
    %108 = vmatpush1.bf16.msra.mxu0 0
    %109 = vmatprep.subr.bf16.mxu0 0
    %110 = vmatpush1.bf16.msra.mxu0 0
    %111 = vmatprep.subr.bf16.mxu0 0
    %112 = vmatpush1.bf16.msra.mxu0 0
    %113 = vmatprep.mubr.bf16.mxu0 0
    %114 = vmatmul.mubr.bf16.gmra.mrb[0].mxu0 %v79
    %v115 = vpop.f32.mrb[0].mxu0
    %v116 = vadd.f32 %v63, %v115
    %v117 = vpop.f32.mrb[0].mxu0
    %v118 = vpop.f32.mrb[0].mxu0
    %v119 = vadd.f32 %v63, %v118
    %v120 = vpop.f32.mrb[0].mxu0
    %121 = vdwg.mxu0
    %vm122 = vcmask 785408
    %123 = vst.msk [vmem:[#allocation2] sm:$0xff] %vm122, %v116
    %124 = vst.msk [vmem:[#allocation2 + $0x8] sm:$0xff] %vm122, %v119
    %v125 = vld [vmem:[#allocation3] sm:$0x3]
    %v126 = vld [vmem:[#allocation2] sm:$0x1]
    %v127 = vld [vmem:[#allocation2 + $0x8] sm:$0x1]
    %v128 = vpack.c.bf16 %v125, %v125
    %v130 = vlaneseq
    %v131 = vshrl.u32 %v130, 7
    %v132 = vsub.s32 0, %v131
    %v133 = vrot.slane %v54, %v132
    %v139 = vunpack.c.l.b16 %v50
    %v140 = vunpack.c.l.b16 %v51
    %v141 = vunpack.c.l.b16 %v52
    %v142 = vunpack.c.l.b16 %v53
    %v143 = vpack.c.b16 %v140, %v139
    %v144 = vpack.c.b16 %v142, %v141
    %v148 = vsel %vm77, %v128, 0
    %150 = vmatprep.subr.bf16.mxu0 0
    %151 = vmatpush1.bf16.msra.mxu0 %v143
    %152 = vmatprep.subr.bf16.mxu0 0
    %153 = vmatpush1.bf16.msra.mxu0 %v144
    %154 = vmatprep.subr.bf16.mxu0 0
    %155 = vmatpush1.bf16.msra.mxu0 0
    %156 = vmatprep.subr.bf16.mxu0 0
    %157 = vmatpush1.bf16.msra.mxu0 0
    %158 = vmatprep.subr.bf16.mxu0 0
    %159 = vmatpush1.bf16.msra.mxu0 0
    %160 = vmatprep.subr.bf16.mxu0 0
    %161 = vmatpush1.bf16.msra.mxu0 0
    %162 = vmatprep.subr.bf16.mxu0 0
    %163 = vmatpush1.bf16.msra.mxu0 0
    %164 = vmatprep.subr.bf16.mxu0 0
    %165 = vmatpush1.bf16.msra.mxu0 0
    %166 = vmatprep.subr.bf16.mxu0 0
    %167 = vmatpush1.bf16.msra.mxu0 0
    %168 = vmatprep.subr.bf16.mxu0 0
    %169 = vmatpush1.bf16.msra.mxu0 0
    %170 = vmatprep.subr.bf16.mxu0 0
    %171 = vmatpush1.bf16.msra.mxu0 0
    %172 = vmatprep.subr.bf16.mxu0 0
    %173 = vmatpush1.bf16.msra.mxu0 0
    %174 = vmatprep.subr.bf16.mxu0 0
    %175 = vmatpush1.bf16.msra.mxu0 0
    %176 = vmatprep.subr.bf16.mxu0 0
    %177 = vmatpush1.bf16.msra.mxu0 0
    %178 = vmatprep.subr.bf16.mxu0 0
    %179 = vmatpush1.bf16.msra.mxu0 0
    %180 = vmatprep.subr.bf16.mxu0 0
    %181 = vmatpush1.bf16.msra.mxu0 0
    %182 = vmatprep.mubr.bf16.mxu0 0
    %183 = vmatmul.mubr.bf16.gmra.mrb[0].mxu0 %v148
    %v184 = vpop.f32.mrb[0].mxu0
    %v185 = vadd.f32 %v133, %v184
    %v186 = vpop.f32.mrb[0].mxu0
    %v187 = vpop.f32.mrb[0].mxu0
    %v188 = vpop.f32.mrb[0].mxu0
    %189 = vdwg.mxu0
    %v191 = vrot.slane %v185, 1
    %v194 = vadd.f32 %v126, %v185
    %v195 = vadd.f32 %v127, %v191
    %v196 = vxor.u32 %v194, 2147483648
    %v197 = vxor.u32 %v195, 2147483648
    %v198 = vmul.f32 %v196, 1.442695
    %v199 = vpow.pop %v198
    %v200 = vmul.f32 %v197, 1.442695
    %v201 = vpow.pop %v200
    %v202 = vadd.f32 %v199, 1.0
    %v203 = vadd.f32 %v201, 1.0
    %v204 = vrcp.pop %v202
    %v205 = vmul.f32 1.0, %v204
    %v206 = vrcp.pop %v203
    %v207 = vmul.f32 1.0, %v206
    %208 = vrot.lane.b32.xlu0 %v185, 64
    %v209 = vpop.permute.xlu0 %208
    %210 = vrot.lane.b32.xlu0 %v191, 64
    %v211 = vpop.permute.xlu0 %210
    %v214 = vmul.f32 %v205, %v209
    %v215 = vmul.f32 %v207, %v211
    %218 = vrot.lane.b32.xlu0 %v214, 64
    %v219 = vpop.permute.xlu0 %218
    %220 = vrot.lane.b32.xlu0 %v215, 64
    %v221 = vpop.permute.xlu0 %220
    %v224 = vadd.f32 %v126, %v219
    %v225 = vadd.f32 %v127, %v221
    %v226 = vtanh.pop %v224
    %v227 = vtanh.pop %v225
    %v228 = vsub.f32 1.0, %v205
    %v229 = vsub.f32 1.0, %v207
    %232 = vrot.lane.b32.xlu0 %v226, 96
    %v233 = vpop.permute.xlu0 %232
    %234 = vrot.lane.b32.xlu0 %v227, 96
    %v235 = vpop.permute.xlu0 %234
    %v238 = vmul.f32 %v228, %v233
    %v239 = vmul.f32 %v229, %v235
    %v241 = vrot.slane %v125, 1
    %242 = vrot.lane.b32.xlu0 %v125, 32
    %v243 = vpop.permute.xlu0 %242
    %244 = vrot.lane.b32.xlu0 %v241, 32
    %v245 = vpop.permute.xlu0 %244
    %v248 = vmul.f32 %v205, %v243
    %v249 = vmul.f32 %v207, %v245
    %v250 = vadd.f32 %v238, %v248
    %v251 = vadd.f32 %v239, %v249
    %v252 = vstv %s26
    %vm253 = vcmp.lt.s32.totalorder %v252, %v55
    %v254 = vsel %vm253, 1, 0
    %255 = vset.pattern.permute.xlu0 0
    %256 = vperm.xlu0 %255, %v254
    %v257 = vpop.permute.xlu0 %256
    %vm258 = vcmp.eq.s32.totalorder %v257, 1
    %v261 = vrot.slane %v251, 7
    %vm262 = vcmask 1041409
    %v263 = vsel %vm262, %v261, %v250
    %264 = vrot.lane.b32.xlu0 %v263, 96
    %v265 = vpop.permute.xlu0 %264
    %v267 = vsel %vm258, %v265, %v125
    %v268 = vld [vmem:[%s1] sm:$0x1]
    %v269 = vld [vmem:[%s1 + $0x8] sm:$0x1]
    %v272 = vrot.slane %v269, 7
    %v273 = vsel %vm262, %v272, %v268
    %v275 = vadd.f32 %v267, %v273
    %v276 = vsel %vm258, %v275, 0.0
    %v279 = vunpack.c.l.s4 1966171168
    %v280 = vunpack.c.0.s8 %v279
    %v281 = vlaneseq
    %v282 = vshrl.u32 %v281, 7
    %v283 = vsub.s32 %v280, %v282
    %v284 = vrot.slane %v276, %v283
    %v285 = vcombine.high %v284, %v284
    %v287 = vunpack.c.l.s4 1966171168
    %v288 = vunpack.c.0.s8 %v287
    %v289 = vlaneseq
    %v290 = vshrl.u32 %v289, 7
    %v291 = vsub.s32 %v288, %v290
    %v292 = vrot.slane %v284, %v291
    %v294 = vunpack.c.l.s4 1966171168
    %v295 = vunpack.c.0.s8 %v294
    %v296 = vlaneseq
    %v297 = vshrl.u32 %v296, 7
    %v298 = vsub.s32 %v295, %v297
    %v299 = vrot.slane %v285, %v298
    %vm302 = vcmask 253952
    %303 = vst.msk [vmem:[%s7] sm:$0x1] %vm302, %v292
    %304 = vst.msk [vmem:[%s7 + $0x8] sm:$0x1] %vm302, %v299
    %v305 = vld [vmem:[#allocation2 + $0x1] sm:$0x1]
    %v306 = vld [vmem:[#allocation2 + $0x9] sm:$0x1]
    %v307 = vpack.c.bf16 %v267, %v267
    %v309 = vsel %vm77, %v307, 0
    %311 = vmatprep.subr.bf16.mxu0 0
    %312 = vmatpush1.bf16.msra.mxu0 %v143
    %313 = vmatprep.subr.bf16.mxu0 0
    %314 = vmatpush1.bf16.msra.mxu0 %v144
    %315 = vmatprep.subr.bf16.mxu0 0
    %316 = vmatpush1.bf16.msra.mxu0 0
    %317 = vmatprep.subr.bf16.mxu0 0
    %318 = vmatpush1.bf16.msra.mxu0 0
    %319 = vmatprep.subr.bf16.mxu0 0
    %320 = vmatpush1.bf16.msra.mxu0 0
    %321 = vmatprep.subr.bf16.mxu0 0
    %322 = vmatpush1.bf16.msra.mxu0 0
    %323 = vmatprep.subr.bf16.mxu0 0
    %324 = vmatpush1.bf16.msra.mxu0 0
    %325 = vmatprep.subr.bf16.mxu0 0
    %326 = vmatpush1.bf16.msra.mxu0 0
    %327 = vmatprep.subr.bf16.mxu0 0
    %328 = vmatpush1.bf16.msra.mxu0 0
    %329 = vmatprep.subr.bf16.mxu0 0
    %330 = vmatpush1.bf16.msra.mxu0 0
    %331 = vmatprep.subr.bf16.mxu0 0
    %332 = vmatpush1.bf16.msra.mxu0 0
    %333 = vmatprep.subr.bf16.mxu0 0
    %334 = vmatpush1.bf16.msra.mxu0 0
    %335 = vmatprep.subr.bf16.mxu0 0
    %336 = vmatpush1.bf16.msra.mxu0 0
    %337 = vmatprep.subr.bf16.mxu0 0
    %338 = vmatpush1.bf16.msra.mxu0 0
    %339 = vmatprep.subr.bf16.mxu0 0
    %340 = vmatpush1.bf16.msra.mxu0 0
    %341 = vmatprep.subr.bf16.mxu0 0
    %342 = vmatpush1.bf16.msra.mxu0 0
    %343 = vmatprep.mubr.bf16.mxu0 0
    %344 = vmatmul.mubr.bf16.gmra.mrb[0].mxu0 %v309
    %v345 = vpop.f32.mrb[0].mxu0
    %v346 = vadd.f32 %v133, %v345
    %v347 = vpop.f32.mrb[0].mxu0
    %v348 = vpop.f32.mrb[0].mxu0
    %v349 = vpop.f32.mrb[0].mxu0
    %350 = vdwg.mxu0
    %v352 = vrot.slane %v346, 1
    %v355 = vadd.f32 %v305, %v346
    %v356 = vadd.f32 %v306, %v352
    %v357 = vxor.u32 %v355, 2147483648
    %v358 = vxor.u32 %v356, 2147483648
    %v359 = vmul.f32 %v357, 1.442695
    %v360 = vpow.pop %v359
    %v361 = vmul.f32 %v358, 1.442695
    %v362 = vpow.pop %v361
    %v363 = vadd.f32 %v360, 1.0
    %v364 = vadd.f32 %v362, 1.0
    %v365 = vrcp.pop %v363
    %v366 = vmul.f32 1.0, %v365
    %v367 = vrcp.pop %v364
    %v368 = vmul.f32 1.0, %v367
    %369 = vrot.lane.b32.xlu0 %v346, 64
    %v370 = vpop.permute.xlu0 %369
    %371 = vrot.lane.b32.xlu0 %v352, 64
    %v372 = vpop.permute.xlu0 %371
    %v375 = vmul.f32 %v366, %v370
    %v376 = vmul.f32 %v368, %v372
    %379 = vrot.lane.b32.xlu0 %v375, 64
    %v380 = vpop.permute.xlu0 %379
    %381 = vrot.lane.b32.xlu0 %v376, 64
    %v382 = vpop.permute.xlu0 %381
    %v385 = vadd.f32 %v305, %v380
    %v386 = vadd.f32 %v306, %v382
    %v387 = vtanh.pop %v385
    %v388 = vtanh.pop %v386
    %v389 = vsub.f32 1.0, %v366
    %v390 = vsub.f32 1.0, %v368
    %393 = vrot.lane.b32.xlu0 %v387, 96
    %v394 = vpop.permute.xlu0 %393
    %395 = vrot.lane.b32.xlu0 %v388, 96
    %v396 = vpop.permute.xlu0 %395
    %v399 = vmul.f32 %v389, %v394
    %v400 = vmul.f32 %v390, %v396
    %v402 = vrot.slane %v267, 1
    %403 = vrot.lane.b32.xlu0 %v267, 32
    %v404 = vpop.permute.xlu0 %403
    %405 = vrot.lane.b32.xlu0 %v402, 32
    %v406 = vpop.permute.xlu0 %405
    %v409 = vmul.f32 %v366, %v404
    %v410 = vmul.f32 %v368, %v406
    %v411 = vadd.f32 %v399, %v409
    %v412 = vadd.f32 %v400, %v410
    %s413 = sadd.s32 %s26, 1
    %v414 = vstv %s413
    %vm415 = vcmp.lt.s32.totalorder %v414, %v55
    %v416 = vsel %vm415, 1, 0
    %417 = vset.pattern.permute.xlu0 0
    %418 = vperm.xlu0 %417, %v416
    %v419 = vpop.permute.xlu0 %418
    %vm420 = vcmp.eq.s32.totalorder %v419, 1
    %v423 = vrot.slane %v412, 7
    %v424 = vsel %vm262, %v423, %v411
    %425 = vrot.lane.b32.xlu0 %v424, 96
    %v426 = vpop.permute.xlu0 %425
    %v428 = vsel %vm420, %v426, %v267
    %v429 = vld [vmem:[%s1 + $0x1] sm:$0x1]
    %v430 = vld [vmem:[%s1 + $0x9] sm:$0x1]
    %v433 = vrot.slane %v430, 7
    %v434 = vsel %vm262, %v433, %v429
    %v436 = vadd.f32 %v428, %v434
    %v437 = vsel %vm420, %v436, 0.0
    %v440 = vunpack.c.l.s4 1966171168
    %v441 = vunpack.c.0.s8 %v440
    %v442 = vlaneseq
    %v443 = vshrl.u32 %v442, 7
    %v444 = vsub.s32 %v441, %v443
    %v445 = vrot.slane %v437, %v444
    %v446 = vcombine.high %v445, %v445
    %v448 = vunpack.c.l.s4 1966171168
    %v449 = vunpack.c.0.s8 %v448
    %v450 = vlaneseq
    %v451 = vshrl.u32 %v450, 7
    %v452 = vsub.s32 %v449, %v451
    %v453 = vrot.slane %v445, %v452
    %v455 = vunpack.c.l.s4 1966171168
    %v456 = vunpack.c.0.s8 %v455
    %v457 = vlaneseq
    %v458 = vshrl.u32 %v457, 7
    %v459 = vsub.s32 %v456, %v458
    %v460 = vrot.slane %v446, %v459
    %463 = vst.msk [vmem:[%s7 + $0x1] sm:$0x1] %vm302, %v453
    %464 = vst.msk [vmem:[%s7 + $0x9] sm:$0x1] %vm302, %v460
    %v465 = vld [vmem:[#allocation2 + $0x2] sm:$0x1]
    %v466 = vld [vmem:[#allocation2 + $0xa] sm:$0x1]
    %v467 = vpack.c.bf16 %v428, %v428
    %v469 = vsel %vm77, %v467, 0
    %471 = vmatprep.subr.bf16.mxu0 0
    %472 = vmatpush1.bf16.msra.mxu0 %v143
    %473 = vmatprep.subr.bf16.mxu0 0
    %474 = vmatpush1.bf16.msra.mxu0 %v144
    %475 = vmatprep.subr.bf16.mxu0 0
    %476 = vmatpush1.bf16.msra.mxu0 0
    %477 = vmatprep.subr.bf16.mxu0 0
    %478 = vmatpush1.bf16.msra.mxu0 0
    %479 = vmatprep.subr.bf16.mxu0 0
    %480 = vmatpush1.bf16.msra.mxu0 0
    %481 = vmatprep.subr.bf16.mxu0 0
    %482 = vmatpush1.bf16.msra.mxu0 0
    %483 = vmatprep.subr.bf16.mxu0 0
    %484 = vmatpush1.bf16.msra.mxu0 0
    %485 = vmatprep.subr.bf16.mxu0 0
    %486 = vmatpush1.bf16.msra.mxu0 0
    %487 = vmatprep.subr.bf16.mxu0 0
    %488 = vmatpush1.bf16.msra.mxu0 0
    %489 = vmatprep.subr.bf16.mxu0 0
    %490 = vmatpush1.bf16.msra.mxu0 0
    %491 = vmatprep.subr.bf16.mxu0 0
    %492 = vmatpush1.bf16.msra.mxu0 0
    %493 = vmatprep.subr.bf16.mxu0 0
    %494 = vmatpush1.bf16.msra.mxu0 0
    %495 = vmatprep.subr.bf16.mxu0 0
    %496 = vmatpush1.bf16.msra.mxu0 0
    %497 = vmatprep.subr.bf16.mxu0 0
    %498 = vmatpush1.bf16.msra.mxu0 0
    %499 = vmatprep.subr.bf16.mxu0 0
    %500 = vmatpush1.bf16.msra.mxu0 0
    %501 = vmatprep.subr.bf16.mxu0 0
    %502 = vmatpush1.bf16.msra.mxu0 0
    %503 = vmatprep.mubr.bf16.mxu0 0
    %504 = vmatmul.mubr.bf16.gmra.mrb[0].mxu0 %v469
    %v505 = vpop.f32.mrb[0].mxu0
    %v506 = vadd.f32 %v133, %v505
    %v507 = vpop.f32.mrb[0].mxu0
    %v508 = vpop.f32.mrb[0].mxu0
    %v509 = vpop.f32.mrb[0].mxu0
    %510 = vdwg.mxu0
    %v512 = vrot.slane %v506, 1
    %v515 = vadd.f32 %v465, %v506
    %v516 = vadd.f32 %v466, %v512
    %v517 = vxor.u32 %v515, 2147483648
    %v518 = vxor.u32 %v516, 2147483648
    %v519 = vmul.f32 %v517, 1.442695
    %v520 = vpow.pop %v519
    %v521 = vmul.f32 %v518, 1.442695
    %v522 = vpow.pop %v521
    %v523 = vadd.f32 %v520, 1.0
    %v524 = vadd.f32 %v522, 1.0
    %v525 = vrcp.pop %v523
    %v526 = vmul.f32 1.0, %v525
    %v527 = vrcp.pop %v524
    %v528 = vmul.f32 1.0, %v527
    %529 = vrot.lane.b32.xlu0 %v506, 64
    %v530 = vpop.permute.xlu0 %529
    %531 = vrot.lane.b32.xlu0 %v512, 64
    %v532 = vpop.permute.xlu0 %531
    %v535 = vmul.f32 %v526, %v530
    %v536 = vmul.f32 %v528, %v532
    %539 = vrot.lane.b32.xlu0 %v535, 64
    %v540 = vpop.permute.xlu0 %539
    %541 = vrot.lane.b32.xlu0 %v536, 64
    %v542 = vpop.permute.xlu0 %541
    %v545 = vadd.f32 %v465, %v540
    %v546 = vadd.f32 %v466, %v542
    %v547 = vtanh.pop %v545
    %v548 = vtanh.pop %v546
    %v549 = vsub.f32 1.0, %v526
    %v550 = vsub.f32 1.0, %v528
    %553 = vrot.lane.b32.xlu0 %v547, 96
    %v554 = vpop.permute.xlu0 %553
    %555 = vrot.lane.b32.xlu0 %v548, 96
    %v556 = vpop.permute.xlu0 %555
    %v559 = vmul.f32 %v549, %v554
    %v560 = vmul.f32 %v550, %v556
    %v562 = vrot.slane %v428, 1
    %563 = vrot.lane.b32.xlu0 %v428, 32
    %v564 = vpop.permute.xlu0 %563
    %565 = vrot.lane.b32.xlu0 %v562, 32
    %v566 = vpop.permute.xlu0 %565
    %v569 = vmul.f32 %v526, %v564
    %v570 = vmul.f32 %v528, %v566
    %v571 = vadd.f32 %v559, %v569
    %v572 = vadd.f32 %v560, %v570
    %s573 = sadd.s32 %s26, 2
    %v574 = vstv %s573
    %vm575 = vcmp.lt.s32.totalorder %v574, %v55
    %v576 = vsel %vm575, 1, 0
    %577 = vset.pattern.permute.xlu0 0
    %578 = vperm.xlu0 %577, %v576
    %v579 = vpop.permute.xlu0 %578
    %vm580 = vcmp.eq.s32.totalorder %v579, 1
    %v583 = vrot.slane %v572, 7
    %v584 = vsel %vm262, %v583, %v571
    %585 = vrot.lane.b32.xlu0 %v584, 96
    %v586 = vpop.permute.xlu0 %585
    %v588 = vsel %vm580, %v586, %v428
    %v589 = vld [vmem:[%s1 + $0x2] sm:$0x1]
    %v590 = vld [vmem:[%s1 + $0xa] sm:$0x1]
    %v593 = vrot.slane %v590, 7
    %v594 = vsel %vm262, %v593, %v589
    %v596 = vadd.f32 %v588, %v594
    %v597 = vsel %vm580, %v596, 0.0
    %v600 = vunpack.c.l.s4 1966171168
    %v601 = vunpack.c.0.s8 %v600
    %v602 = vlaneseq
    %v603 = vshrl.u32 %v602, 7
    %v604 = vsub.s32 %v601, %v603
    %v605 = vrot.slane %v597, %v604
    %v606 = vcombine.high %v605, %v605
    %v608 = vunpack.c.l.s4 1966171168
    %v609 = vunpack.c.0.s8 %v608
    %v610 = vlaneseq
    %v611 = vshrl.u32 %v610, 7
    %v612 = vsub.s32 %v609, %v611
    %v613 = vrot.slane %v605, %v612
    %v615 = vunpack.c.l.s4 1966171168
    %v616 = vunpack.c.0.s8 %v615
    %v617 = vlaneseq
    %v618 = vshrl.u32 %v617, 7
    %v619 = vsub.s32 %v616, %v618
    %v620 = vrot.slane %v606, %v619
    %623 = vst.msk [vmem:[%s7 + $0x2] sm:$0x1] %vm302, %v613
    %624 = vst.msk [vmem:[%s7 + $0xa] sm:$0x1] %vm302, %v620
    %v625 = vld [vmem:[#allocation2 + $0x3] sm:$0x1]
    %v626 = vld [vmem:[#allocation2 + $0xb] sm:$0x1]
    %v627 = vpack.c.bf16 %v588, %v588
    %v629 = vsel %vm77, %v627, 0
    %631 = vmatprep.subr.bf16.mxu0 0
    %632 = vmatpush1.bf16.msra.mxu0 %v143
    %633 = vmatprep.subr.bf16.mxu0 0
    %634 = vmatpush1.bf16.msra.mxu0 %v144
    %635 = vmatprep.subr.bf16.mxu0 0
    %636 = vmatpush1.bf16.msra.mxu0 0
    %637 = vmatprep.subr.bf16.mxu0 0
    %638 = vmatpush1.bf16.msra.mxu0 0
    %639 = vmatprep.subr.bf16.mxu0 0
    %640 = vmatpush1.bf16.msra.mxu0 0
    %641 = vmatprep.subr.bf16.mxu0 0
    %642 = vmatpush1.bf16.msra.mxu0 0
    %643 = vmatprep.subr.bf16.mxu0 0
    %644 = vmatpush1.bf16.msra.mxu0 0
    %645 = vmatprep.subr.bf16.mxu0 0
    %646 = vmatpush1.bf16.msra.mxu0 0
    %647 = vmatprep.subr.bf16.mxu0 0
    %648 = vmatpush1.bf16.msra.mxu0 0
    %649 = vmatprep.subr.bf16.mxu0 0
    %650 = vmatpush1.bf16.msra.mxu0 0
    %651 = vmatprep.subr.bf16.mxu0 0
    %652 = vmatpush1.bf16.msra.mxu0 0
    %653 = vmatprep.subr.bf16.mxu0 0
    %654 = vmatpush1.bf16.msra.mxu0 0
    %655 = vmatprep.subr.bf16.mxu0 0
    %656 = vmatpush1.bf16.msra.mxu0 0
    %657 = vmatprep.subr.bf16.mxu0 0
    %658 = vmatpush1.bf16.msra.mxu0 0
    %659 = vmatprep.subr.bf16.mxu0 0
    %660 = vmatpush1.bf16.msra.mxu0 0
    %661 = vmatprep.subr.bf16.mxu0 0
    %662 = vmatpush1.bf16.msra.mxu0 0
    %663 = vmatprep.mubr.bf16.mxu0 0
    %664 = vmatmul.mubr.bf16.gmra.mrb[0].mxu0 %v629
    %v665 = vpop.f32.mrb[0].mxu0
    %v666 = vadd.f32 %v133, %v665
    %v667 = vpop.f32.mrb[0].mxu0
    %v668 = vpop.f32.mrb[0].mxu0
    %v669 = vpop.f32.mrb[0].mxu0
    %670 = vdwg.mxu0
    %v672 = vrot.slane %v666, 1
    %v675 = vadd.f32 %v625, %v666
    %v676 = vadd.f32 %v626, %v672
    %v677 = vxor.u32 %v675, 2147483648
    %v678 = vxor.u32 %v676, 2147483648
    %v679 = vmul.f32 %v677, 1.442695
    %v680 = vpow.pop %v679
    %v681 = vmul.f32 %v678, 1.442695
    %v682 = vpow.pop %v681
    %v683 = vadd.f32 %v680, 1.0
    %v684 = vadd.f32 %v682, 1.0
    %v685 = vrcp.pop %v683
    %v686 = vmul.f32 1.0, %v685
    %v687 = vrcp.pop %v684
    %v688 = vmul.f32 1.0, %v687
    %689 = vrot.lane.b32.xlu0 %v666, 64
    %v690 = vpop.permute.xlu0 %689
    %691 = vrot.lane.b32.xlu0 %v672, 64
    %v692 = vpop.permute.xlu0 %691
    %v695 = vmul.f32 %v686, %v690
    %v696 = vmul.f32 %v688, %v692
    %699 = vrot.lane.b32.xlu0 %v695, 64
    %v700 = vpop.permute.xlu0 %699
    %701 = vrot.lane.b32.xlu0 %v696, 64
    %v702 = vpop.permute.xlu0 %701
    %v705 = vadd.f32 %v625, %v700
    %v706 = vadd.f32 %v626, %v702
    %v707 = vtanh.pop %v705
    %v708 = vtanh.pop %v706
    %v709 = vsub.f32 1.0, %v686
    %v710 = vsub.f32 1.0, %v688
    %713 = vrot.lane.b32.xlu0 %v707, 96
    %v714 = vpop.permute.xlu0 %713
    %715 = vrot.lane.b32.xlu0 %v708, 96
    %v716 = vpop.permute.xlu0 %715
    %v719 = vmul.f32 %v709, %v714
    %v720 = vmul.f32 %v710, %v716
    %v722 = vrot.slane %v588, 1
    %723 = vrot.lane.b32.xlu0 %v588, 32
    %v724 = vpop.permute.xlu0 %723
    %725 = vrot.lane.b32.xlu0 %v722, 32
    %v726 = vpop.permute.xlu0 %725
    %v729 = vmul.f32 %v686, %v724
    %v730 = vmul.f32 %v688, %v726
    %v731 = vadd.f32 %v719, %v729
    %v732 = vadd.f32 %v720, %v730
    %s733 = sadd.s32 %s26, 3
    %v734 = vstv %s733
    %vm735 = vcmp.lt.s32.totalorder %v734, %v55
    %v736 = vsel %vm735, 1, 0
    %737 = vset.pattern.permute.xlu0 0
    %738 = vperm.xlu0 %737, %v736
    %v739 = vpop.permute.xlu0 %738
    %vm740 = vcmp.eq.s32.totalorder %v739, 1
    %v743 = vrot.slane %v732, 7
    %v744 = vsel %vm262, %v743, %v731
    %745 = vrot.lane.b32.xlu0 %v744, 96
    %v746 = vpop.permute.xlu0 %745
    %v748 = vsel %vm740, %v746, %v588
    %v749 = vld [vmem:[%s1 + $0x3] sm:$0x1]
    %v750 = vld [vmem:[%s1 + $0xb] sm:$0x1]
    %v753 = vrot.slane %v750, 7
    %v754 = vsel %vm262, %v753, %v749
    %v756 = vadd.f32 %v748, %v754
    %v757 = vsel %vm740, %v756, 0.0
    %v760 = vunpack.c.l.s4 1966171168
    %v761 = vunpack.c.0.s8 %v760
    %v762 = vlaneseq
    %v763 = vshrl.u32 %v762, 7
    %v764 = vsub.s32 %v761, %v763
    %v765 = vrot.slane %v757, %v764
    %v766 = vcombine.high %v765, %v765
    %v768 = vunpack.c.l.s4 1966171168
    %v769 = vunpack.c.0.s8 %v768
    %v770 = vlaneseq
    %v771 = vshrl.u32 %v770, 7
    %v772 = vsub.s32 %v769, %v771
    %v773 = vrot.slane %v765, %v772
    %v775 = vunpack.c.l.s4 1966171168
    %v776 = vunpack.c.0.s8 %v775
    %v777 = vlaneseq
    %v778 = vshrl.u32 %v777, 7
    %v779 = vsub.s32 %v776, %v778
    %v780 = vrot.slane %v766, %v779
    %783 = vst.msk [vmem:[%s7 + $0x3] sm:$0x1] %vm302, %v773
    %784 = vst.msk [vmem:[%s7 + $0xb] sm:$0x1] %vm302, %v780
    %v785 = vld [vmem:[#allocation2 + $0x4] sm:$0x1]
    %v786 = vld [vmem:[#allocation2 + $0xc] sm:$0x1]
    %v787 = vpack.c.bf16 %v748, %v748
    %v789 = vsel %vm77, %v787, 0
    %791 = vmatprep.subr.bf16.mxu0 0
    %792 = vmatpush1.bf16.msra.mxu0 %v143
    %793 = vmatprep.subr.bf16.mxu0 0
    %794 = vmatpush1.bf16.msra.mxu0 %v144
    %795 = vmatprep.subr.bf16.mxu0 0
    %796 = vmatpush1.bf16.msra.mxu0 0
    %797 = vmatprep.subr.bf16.mxu0 0
    %798 = vmatpush1.bf16.msra.mxu0 0
    %799 = vmatprep.subr.bf16.mxu0 0
    %800 = vmatpush1.bf16.msra.mxu0 0
    %801 = vmatprep.subr.bf16.mxu0 0
    %802 = vmatpush1.bf16.msra.mxu0 0
    %803 = vmatprep.subr.bf16.mxu0 0
    %804 = vmatpush1.bf16.msra.mxu0 0
    %805 = vmatprep.subr.bf16.mxu0 0
    %806 = vmatpush1.bf16.msra.mxu0 0
    %807 = vmatprep.subr.bf16.mxu0 0
    %808 = vmatpush1.bf16.msra.mxu0 0
    %809 = vmatprep.subr.bf16.mxu0 0
    %810 = vmatpush1.bf16.msra.mxu0 0
    %811 = vmatprep.subr.bf16.mxu0 0
    %812 = vmatpush1.bf16.msra.mxu0 0
    %813 = vmatprep.subr.bf16.mxu0 0
    %814 = vmatpush1.bf16.msra.mxu0 0
    %815 = vmatprep.subr.bf16.mxu0 0
    %816 = vmatpush1.bf16.msra.mxu0 0
    %817 = vmatprep.subr.bf16.mxu0 0
    %818 = vmatpush1.bf16.msra.mxu0 0
    %819 = vmatprep.subr.bf16.mxu0 0
    %820 = vmatpush1.bf16.msra.mxu0 0
    %821 = vmatprep.subr.bf16.mxu0 0
    %822 = vmatpush1.bf16.msra.mxu0 0
    %823 = vmatprep.mubr.bf16.mxu0 0
    %824 = vmatmul.mubr.bf16.gmra.mrb[0].mxu0 %v789
    %v825 = vpop.f32.mrb[0].mxu0
    %v826 = vadd.f32 %v133, %v825
    %v827 = vpop.f32.mrb[0].mxu0
    %v828 = vpop.f32.mrb[0].mxu0
    %v829 = vpop.f32.mrb[0].mxu0
    %830 = vdwg.mxu0
    %v832 = vrot.slane %v826, 1
    %v835 = vadd.f32 %v785, %v826
    %v836 = vadd.f32 %v786, %v832
    %v837 = vxor.u32 %v835, 2147483648
    %v838 = vxor.u32 %v836, 2147483648
    %v839 = vmul.f32 %v837, 1.442695
    %v840 = vpow.pop %v839
    %v841 = vmul.f32 %v838, 1.442695
    %v842 = vpow.pop %v841
    %v843 = vadd.f32 %v840, 1.0
    %v844 = vadd.f32 %v842, 1.0
    %v845 = vrcp.pop %v843
    %v846 = vmul.f32 1.0, %v845
    %v847 = vrcp.pop %v844
    %v848 = vmul.f32 1.0, %v847
    %849 = vrot.lane.b32.xlu0 %v826, 64
    %v850 = vpop.permute.xlu0 %849
    %851 = vrot.lane.b32.xlu0 %v832, 64
    %v852 = vpop.permute.xlu0 %851
    %v855 = vmul.f32 %v846, %v850
    %v856 = vmul.f32 %v848, %v852
    %859 = vrot.lane.b32.xlu0 %v855, 64
    %v860 = vpop.permute.xlu0 %859
    %861 = vrot.lane.b32.xlu0 %v856, 64
    %v862 = vpop.permute.xlu0 %861
    %v865 = vadd.f32 %v785, %v860
    %v866 = vadd.f32 %v786, %v862
    %v867 = vtanh.pop %v865
    %v868 = vtanh.pop %v866
    %v869 = vsub.f32 1.0, %v846
    %v870 = vsub.f32 1.0, %v848
    %873 = vrot.lane.b32.xlu0 %v867, 96
    %v874 = vpop.permute.xlu0 %873
    %875 = vrot.lane.b32.xlu0 %v868, 96
    %v876 = vpop.permute.xlu0 %875
    %v879 = vmul.f32 %v869, %v874
    %v880 = vmul.f32 %v870, %v876
    %v882 = vrot.slane %v748, 1
    %883 = vrot.lane.b32.xlu0 %v748, 32
    %v884 = vpop.permute.xlu0 %883
    %885 = vrot.lane.b32.xlu0 %v882, 32
    %v886 = vpop.permute.xlu0 %885
    %v889 = vmul.f32 %v846, %v884
    %v890 = vmul.f32 %v848, %v886
    %v891 = vadd.f32 %v879, %v889
    %v892 = vadd.f32 %v880, %v890
    %s893 = sadd.s32 %s26, 4
    %v894 = vstv %s893
    %vm895 = vcmp.lt.s32.totalorder %v894, %v55
    %v896 = vsel %vm895, 1, 0
    %897 = vset.pattern.permute.xlu0 0
    %898 = vperm.xlu0 %897, %v896
    %v899 = vpop.permute.xlu0 %898
    %vm900 = vcmp.eq.s32.totalorder %v899, 1
    %v903 = vrot.slane %v892, 7
    %v904 = vsel %vm262, %v903, %v891
    %905 = vrot.lane.b32.xlu0 %v904, 96
    %v906 = vpop.permute.xlu0 %905
    %v908 = vsel %vm900, %v906, %v748
    %v909 = vld [vmem:[%s1 + $0x4] sm:$0x1]
    %v910 = vld [vmem:[%s1 + $0xc] sm:$0x1]
    %v913 = vrot.slane %v910, 7
    %v914 = vsel %vm262, %v913, %v909
    %v916 = vadd.f32 %v908, %v914
    %v917 = vsel %vm900, %v916, 0.0
    %v920 = vunpack.c.l.s4 1966171168
    %v921 = vunpack.c.0.s8 %v920
    %v922 = vlaneseq
    %v923 = vshrl.u32 %v922, 7
    %v924 = vsub.s32 %v921, %v923
    %v925 = vrot.slane %v917, %v924
    %v926 = vcombine.high %v925, %v925
    %v928 = vunpack.c.l.s4 1966171168
    %v929 = vunpack.c.0.s8 %v928
    %v930 = vlaneseq
    %v931 = vshrl.u32 %v930, 7
    %v932 = vsub.s32 %v929, %v931
    %v933 = vrot.slane %v925, %v932
    %v935 = vunpack.c.l.s4 1966171168
    %v936 = vunpack.c.0.s8 %v935
    %v937 = vlaneseq
    %v938 = vshrl.u32 %v937, 7
    %v939 = vsub.s32 %v936, %v938
    %v940 = vrot.slane %v926, %v939
    %943 = vst.msk [vmem:[%s7 + $0x4] sm:$0x1] %vm302, %v933
    %944 = vst.msk [vmem:[%s7 + $0xc] sm:$0x1] %vm302, %v940
    %v945 = vld [vmem:[#allocation2 + $0x5] sm:$0x1]
    %v946 = vld [vmem:[#allocation2 + $0xd] sm:$0x1]
    %v947 = vpack.c.bf16 %v908, %v908
    %v949 = vsel %vm77, %v947, 0
    %951 = vmatprep.subr.bf16.mxu0 0
    %952 = vmatpush1.bf16.msra.mxu0 %v143
    %953 = vmatprep.subr.bf16.mxu0 0
    %954 = vmatpush1.bf16.msra.mxu0 %v144
    %955 = vmatprep.subr.bf16.mxu0 0
    %956 = vmatpush1.bf16.msra.mxu0 0
    %957 = vmatprep.subr.bf16.mxu0 0
    %958 = vmatpush1.bf16.msra.mxu0 0
    %959 = vmatprep.subr.bf16.mxu0 0
    %960 = vmatpush1.bf16.msra.mxu0 0
    %961 = vmatprep.subr.bf16.mxu0 0
    %962 = vmatpush1.bf16.msra.mxu0 0
    %963 = vmatprep.subr.bf16.mxu0 0
    %964 = vmatpush1.bf16.msra.mxu0 0
    %965 = vmatprep.subr.bf16.mxu0 0
    %966 = vmatpush1.bf16.msra.mxu0 0
    %967 = vmatprep.subr.bf16.mxu0 0
    %968 = vmatpush1.bf16.msra.mxu0 0
    %969 = vmatprep.subr.bf16.mxu0 0
    %970 = vmatpush1.bf16.msra.mxu0 0
    %971 = vmatprep.subr.bf16.mxu0 0
    %972 = vmatpush1.bf16.msra.mxu0 0
    %973 = vmatprep.subr.bf16.mxu0 0
    %974 = vmatpush1.bf16.msra.mxu0 0
    %975 = vmatprep.subr.bf16.mxu0 0
    %976 = vmatpush1.bf16.msra.mxu0 0
    %977 = vmatprep.subr.bf16.mxu0 0
    %978 = vmatpush1.bf16.msra.mxu0 0
    %979 = vmatprep.subr.bf16.mxu0 0
    %980 = vmatpush1.bf16.msra.mxu0 0
    %981 = vmatprep.subr.bf16.mxu0 0
    %982 = vmatpush1.bf16.msra.mxu0 0
    %983 = vmatprep.mubr.bf16.mxu0 0
    %984 = vmatmul.mubr.bf16.gmra.mrb[0].mxu0 %v949
    %v985 = vpop.f32.mrb[0].mxu0
    %v986 = vadd.f32 %v133, %v985
    %v987 = vpop.f32.mrb[0].mxu0
    %v988 = vpop.f32.mrb[0].mxu0
    %v989 = vpop.f32.mrb[0].mxu0
    %990 = vdwg.mxu0
    %v992 = vrot.slane %v986, 1
    %v995 = vadd.f32 %v945, %v986
    %v996 = vadd.f32 %v946, %v992
    %v997 = vxor.u32 %v995, 2147483648
    %v998 = vxor.u32 %v996, 2147483648
    %v999 = vmul.f32 %v997, 1.442695
    %v1000 = vpow.pop %v999
    %v1001 = vmul.f32 %v998, 1.442695
    %v1002 = vpow.pop %v1001
    %v1003 = vadd.f32 %v1000, 1.0
    %v1004 = vadd.f32 %v1002, 1.0
    %v1005 = vrcp.pop %v1003
    %v1006 = vmul.f32 1.0, %v1005
    %v1007 = vrcp.pop %v1004
    %v1008 = vmul.f32 1.0, %v1007
    %1009 = vrot.lane.b32.xlu0 %v986, 64
    %v1010 = vpop.permute.xlu0 %1009
    %1011 = vrot.lane.b32.xlu0 %v992, 64
    %v1012 = vpop.permute.xlu0 %1011
    %v1015 = vmul.f32 %v1006, %v1010
    %v1016 = vmul.f32 %v1008, %v1012
    %1019 = vrot.lane.b32.xlu0 %v1015, 64
    %v1020 = vpop.permute.xlu0 %1019
    %1021 = vrot.lane.b32.xlu0 %v1016, 64
    %v1022 = vpop.permute.xlu0 %1021
    %v1025 = vadd.f32 %v945, %v1020
    %v1026 = vadd.f32 %v946, %v1022
    %v1027 = vtanh.pop %v1025
    %v1028 = vtanh.pop %v1026
    %v1029 = vsub.f32 1.0, %v1006
    %v1030 = vsub.f32 1.0, %v1008
    %1033 = vrot.lane.b32.xlu0 %v1027, 96
    %v1034 = vpop.permute.xlu0 %1033
    %1035 = vrot.lane.b32.xlu0 %v1028, 96
    %v1036 = vpop.permute.xlu0 %1035
    %v1039 = vmul.f32 %v1029, %v1034
    %v1040 = vmul.f32 %v1030, %v1036
    %v1042 = vrot.slane %v908, 1
    %1043 = vrot.lane.b32.xlu0 %v908, 32
    %v1044 = vpop.permute.xlu0 %1043
    %1045 = vrot.lane.b32.xlu0 %v1042, 32
    %v1046 = vpop.permute.xlu0 %1045
    %v1049 = vmul.f32 %v1006, %v1044
    %v1050 = vmul.f32 %v1008, %v1046
    %v1051 = vadd.f32 %v1039, %v1049
    %v1052 = vadd.f32 %v1040, %v1050
    %s1053 = sadd.s32 %s26, 5
    %v1054 = vstv %s1053
    %vm1055 = vcmp.lt.s32.totalorder %v1054, %v55
    %v1056 = vsel %vm1055, 1, 0
    %1057 = vset.pattern.permute.xlu0 0
    %1058 = vperm.xlu0 %1057, %v1056
    %v1059 = vpop.permute.xlu0 %1058
    %vm1060 = vcmp.eq.s32.totalorder %v1059, 1
    %v1063 = vrot.slane %v1052, 7
    %v1064 = vsel %vm262, %v1063, %v1051
    %1065 = vrot.lane.b32.xlu0 %v1064, 96
    %v1066 = vpop.permute.xlu0 %1065
    %v1068 = vsel %vm1060, %v1066, %v908
    %v1069 = vld [vmem:[%s1 + $0x5] sm:$0x1]
    %v1070 = vld [vmem:[%s1 + $0xd] sm:$0x1]
    %v1073 = vrot.slane %v1070, 7
    %v1074 = vsel %vm262, %v1073, %v1069
    %v1076 = vadd.f32 %v1068, %v1074
    %v1077 = vsel %vm1060, %v1076, 0.0
    %v1080 = vunpack.c.l.s4 1966171168
    %v1081 = vunpack.c.0.s8 %v1080
    %v1082 = vlaneseq
    %v1083 = vshrl.u32 %v1082, 7
    %v1084 = vsub.s32 %v1081, %v1083
    %v1085 = vrot.slane %v1077, %v1084
    %v1086 = vcombine.high %v1085, %v1085
    %v1088 = vunpack.c.l.s4 1966171168
    %v1089 = vunpack.c.0.s8 %v1088
    %v1090 = vlaneseq
    %v1091 = vshrl.u32 %v1090, 7
    %v1092 = vsub.s32 %v1089, %v1091
    %v1093 = vrot.slane %v1085, %v1092
    %v1095 = vunpack.c.l.s4 1966171168
    %v1096 = vunpack.c.0.s8 %v1095
    %v1097 = vlaneseq
    %v1098 = vshrl.u32 %v1097, 7
    %v1099 = vsub.s32 %v1096, %v1098
    %v1100 = vrot.slane %v1086, %v1099
    %1103 = vst.msk [vmem:[%s7 + $0x5] sm:$0x1] %vm302, %v1093
    %1104 = vst.msk [vmem:[%s7 + $0xd] sm:$0x1] %vm302, %v1100
    %v1105 = vld [vmem:[#allocation2 + $0x6] sm:$0x1]
    %v1106 = vld [vmem:[#allocation2 + $0xe] sm:$0x1]
    %v1107 = vpack.c.bf16 %v1068, %v1068
    %v1109 = vsel %vm77, %v1107, 0
    %1111 = vmatprep.subr.bf16.mxu0 0
    %1112 = vmatpush1.bf16.msra.mxu0 %v143
    %1113 = vmatprep.subr.bf16.mxu0 0
    %1114 = vmatpush1.bf16.msra.mxu0 %v144
    %1115 = vmatprep.subr.bf16.mxu0 0
    %1116 = vmatpush1.bf16.msra.mxu0 0
    %1117 = vmatprep.subr.bf16.mxu0 0
    %1118 = vmatpush1.bf16.msra.mxu0 0
    %1119 = vmatprep.subr.bf16.mxu0 0
    %1120 = vmatpush1.bf16.msra.mxu0 0
    %1121 = vmatprep.subr.bf16.mxu0 0
    %1122 = vmatpush1.bf16.msra.mxu0 0
    %1123 = vmatprep.subr.bf16.mxu0 0
    %1124 = vmatpush1.bf16.msra.mxu0 0
    %1125 = vmatprep.subr.bf16.mxu0 0
    %1126 = vmatpush1.bf16.msra.mxu0 0
    %1127 = vmatprep.subr.bf16.mxu0 0
    %1128 = vmatpush1.bf16.msra.mxu0 0
    %1129 = vmatprep.subr.bf16.mxu0 0
    %1130 = vmatpush1.bf16.msra.mxu0 0
    %1131 = vmatprep.subr.bf16.mxu0 0
    %1132 = vmatpush1.bf16.msra.mxu0 0
    %1133 = vmatprep.subr.bf16.mxu0 0
    %1134 = vmatpush1.bf16.msra.mxu0 0
    %1135 = vmatprep.subr.bf16.mxu0 0
    %1136 = vmatpush1.bf16.msra.mxu0 0
    %1137 = vmatprep.subr.bf16.mxu0 0
    %1138 = vmatpush1.bf16.msra.mxu0 0
    %1139 = vmatprep.subr.bf16.mxu0 0
    %1140 = vmatpush1.bf16.msra.mxu0 0
    %1141 = vmatprep.subr.bf16.mxu0 0
    %1142 = vmatpush1.bf16.msra.mxu0 0
    %1143 = vmatprep.mubr.bf16.mxu0 0
    %1144 = vmatmul.mubr.bf16.gmra.mrb[0].mxu0 %v1109
    %v1145 = vpop.f32.mrb[0].mxu0
    %v1146 = vadd.f32 %v133, %v1145
    %v1147 = vpop.f32.mrb[0].mxu0
    %v1148 = vpop.f32.mrb[0].mxu0
    %v1149 = vpop.f32.mrb[0].mxu0
    %1150 = vdwg.mxu0
    %v1152 = vrot.slane %v1146, 1
    %v1155 = vadd.f32 %v1105, %v1146
    %v1156 = vadd.f32 %v1106, %v1152
    %v1157 = vxor.u32 %v1155, 2147483648
    %v1158 = vxor.u32 %v1156, 2147483648
    %v1159 = vmul.f32 %v1157, 1.442695
    %v1160 = vpow.pop %v1159
    %v1161 = vmul.f32 %v1158, 1.442695
    %v1162 = vpow.pop %v1161
    %v1163 = vadd.f32 %v1160, 1.0
    %v1164 = vadd.f32 %v1162, 1.0
    %v1165 = vrcp.pop %v1163
    %v1166 = vmul.f32 1.0, %v1165
    %v1167 = vrcp.pop %v1164
    %v1168 = vmul.f32 1.0, %v1167
    %1169 = vrot.lane.b32.xlu0 %v1146, 64
    %v1170 = vpop.permute.xlu0 %1169
    %1171 = vrot.lane.b32.xlu0 %v1152, 64
    %v1172 = vpop.permute.xlu0 %1171
    %v1175 = vmul.f32 %v1166, %v1170
    %v1176 = vmul.f32 %v1168, %v1172
    %1179 = vrot.lane.b32.xlu0 %v1175, 64
    %v1180 = vpop.permute.xlu0 %1179
    %1181 = vrot.lane.b32.xlu0 %v1176, 64
    %v1182 = vpop.permute.xlu0 %1181
    %v1185 = vadd.f32 %v1105, %v1180
    %v1186 = vadd.f32 %v1106, %v1182
    %v1187 = vtanh.pop %v1185
    %v1188 = vtanh.pop %v1186
    %v1189 = vsub.f32 1.0, %v1166
    %v1190 = vsub.f32 1.0, %v1168
    %1193 = vrot.lane.b32.xlu0 %v1187, 96
    %v1194 = vpop.permute.xlu0 %1193
    %1195 = vrot.lane.b32.xlu0 %v1188, 96
    %v1196 = vpop.permute.xlu0 %1195
    %v1199 = vmul.f32 %v1189, %v1194
    %v1200 = vmul.f32 %v1190, %v1196
    %v1202 = vrot.slane %v1068, 1
    %1203 = vrot.lane.b32.xlu0 %v1068, 32
    %v1204 = vpop.permute.xlu0 %1203
    %1205 = vrot.lane.b32.xlu0 %v1202, 32
    %v1206 = vpop.permute.xlu0 %1205
    %v1209 = vmul.f32 %v1166, %v1204
    %v1210 = vmul.f32 %v1168, %v1206
    %v1211 = vadd.f32 %v1199, %v1209
    %v1212 = vadd.f32 %v1200, %v1210
    %s1213 = sadd.s32 %s26, 6
    %v1214 = vstv %s1213
    %vm1215 = vcmp.lt.s32.totalorder %v1214, %v55
    %v1216 = vsel %vm1215, 1, 0
    %1217 = vset.pattern.permute.xlu0 0
    %1218 = vperm.xlu0 %1217, %v1216
    %v1219 = vpop.permute.xlu0 %1218
    %vm1220 = vcmp.eq.s32.totalorder %v1219, 1
    %v1223 = vrot.slane %v1212, 7
    %v1224 = vsel %vm262, %v1223, %v1211
    %1225 = vrot.lane.b32.xlu0 %v1224, 96
    %v1226 = vpop.permute.xlu0 %1225
    %v1228 = vsel %vm1220, %v1226, %v1068
    %v1229 = vld [vmem:[%s1 + $0x6] sm:$0x1]
    %v1230 = vld [vmem:[%s1 + $0xe] sm:$0x1]
    %v1233 = vrot.slane %v1230, 7
    %v1234 = vsel %vm262, %v1233, %v1229
    %v1236 = vadd.f32 %v1228, %v1234
    %v1237 = vsel %vm1220, %v1236, 0.0
    %v1240 = vunpack.c.l.s4 1966171168
    %v1241 = vunpack.c.0.s8 %v1240
    %v1242 = vlaneseq
    %v1243 = vshrl.u32 %v1242, 7
    %v1244 = vsub.s32 %v1241, %v1243
    %v1245 = vrot.slane %v1237, %v1244
    %v1246 = vcombine.high %v1245, %v1245
    %v1248 = vunpack.c.l.s4 1966171168
    %v1249 = vunpack.c.0.s8 %v1248
    %v1250 = vlaneseq
    %v1251 = vshrl.u32 %v1250, 7
    %v1252 = vsub.s32 %v1249, %v1251
    %v1253 = vrot.slane %v1245, %v1252
    %v1255 = vunpack.c.l.s4 1966171168
    %v1256 = vunpack.c.0.s8 %v1255
    %v1257 = vlaneseq
    %v1258 = vshrl.u32 %v1257, 7
    %v1259 = vsub.s32 %v1256, %v1258
    %v1260 = vrot.slane %v1246, %v1259
    %1263 = vst.msk [vmem:[%s7 + $0x6] sm:$0x1] %vm302, %v1253
    %1264 = vst.msk [vmem:[%s7 + $0xe] sm:$0x1] %vm302, %v1260
    %v1265 = vld [vmem:[#allocation2 + $0x7] sm:$0x1]
    %v1266 = vld [vmem:[#allocation2 + $0xf] sm:$0x1]
    %v1267 = vpack.c.bf16 %v1228, %v1228
    %v1269 = vsel %vm77, %v1267, 0
    %1271 = vmatprep.subr.bf16.mxu0 0
    %1272 = vmatpush1.bf16.msra.mxu0 %v143
    %1273 = vmatprep.subr.bf16.mxu0 0
    %1274 = vmatpush1.bf16.msra.mxu0 %v144
    %1275 = vmatprep.subr.bf16.mxu0 0
    %1276 = vmatpush1.bf16.msra.mxu0 0
    %1277 = vmatprep.subr.bf16.mxu0 0
    %1278 = vmatpush1.bf16.msra.mxu0 0
    %1279 = vmatprep.subr.bf16.mxu0 0
    %1280 = vmatpush1.bf16.msra.mxu0 0
    %1281 = vmatprep.subr.bf16.mxu0 0
    %1282 = vmatpush1.bf16.msra.mxu0 0
    %1283 = vmatprep.subr.bf16.mxu0 0
    %1284 = vmatpush1.bf16.msra.mxu0 0
    %1285 = vmatprep.subr.bf16.mxu0 0
    %1286 = vmatpush1.bf16.msra.mxu0 0
    %1287 = vmatprep.subr.bf16.mxu0 0
    %1288 = vmatpush1.bf16.msra.mxu0 0
    %1289 = vmatprep.subr.bf16.mxu0 0
    %1290 = vmatpush1.bf16.msra.mxu0 0
    %1291 = vmatprep.subr.bf16.mxu0 0
    %1292 = vmatpush1.bf16.msra.mxu0 0
    %1293 = vmatprep.subr.bf16.mxu0 0
    %1294 = vmatpush1.bf16.msra.mxu0 0
    %1295 = vmatprep.subr.bf16.mxu0 0
    %1296 = vmatpush1.bf16.msra.mxu0 0
    %1297 = vmatprep.subr.bf16.mxu0 0
    %1298 = vmatpush1.bf16.msra.mxu0 0
    %1299 = vmatprep.subr.bf16.mxu0 0
    %1300 = vmatpush1.bf16.msra.mxu0 0
    %1301 = vmatprep.subr.bf16.mxu0 0
    %1302 = vmatpush1.bf16.msra.mxu0 0
    %1303 = vmatprep.mubr.bf16.mxu0 0
    %1304 = vmatmul.mubr.bf16.gmra.mrb[0].mxu0 %v1269
    %v1305 = vpop.f32.mrb[0].mxu0
    %v1306 = vadd.f32 %v133, %v1305
    %v1307 = vpop.f32.mrb[0].mxu0
    %v1308 = vpop.f32.mrb[0].mxu0
    %v1309 = vpop.f32.mrb[0].mxu0
    %1310 = vdwg.mxu0
    %v1312 = vrot.slane %v1306, 1
    %v1315 = vadd.f32 %v1265, %v1306
    %v1316 = vadd.f32 %v1266, %v1312
    %v1317 = vxor.u32 %v1315, 2147483648
    %v1318 = vxor.u32 %v1316, 2147483648
    %v1319 = vmul.f32 %v1317, 1.442695
    %v1320 = vpow.pop %v1319
    %v1321 = vmul.f32 %v1318, 1.442695
    %v1322 = vpow.pop %v1321
    %v1323 = vadd.f32 %v1320, 1.0
    %v1324 = vadd.f32 %v1322, 1.0
    %v1325 = vrcp.pop %v1323
    %v1326 = vmul.f32 1.0, %v1325
    %v1327 = vrcp.pop %v1324
    %v1328 = vmul.f32 1.0, %v1327
    %1329 = vrot.lane.b32.xlu0 %v1306, 64
    %v1330 = vpop.permute.xlu0 %1329
    %1331 = vrot.lane.b32.xlu0 %v1312, 64
    %v1332 = vpop.permute.xlu0 %1331
    %v1335 = vmul.f32 %v1326, %v1330
    %v1336 = vmul.f32 %v1328, %v1332
    %1339 = vrot.lane.b32.xlu0 %v1335, 64
    %v1340 = vpop.permute.xlu0 %1339
    %1341 = vrot.lane.b32.xlu0 %v1336, 64
    %v1342 = vpop.permute.xlu0 %1341
    %v1345 = vadd.f32 %v1265, %v1340
    %v1346 = vadd.f32 %v1266, %v1342
    %v1347 = vtanh.pop %v1345
    %v1348 = vtanh.pop %v1346
    %v1349 = vsub.f32 1.0, %v1326
    %v1350 = vsub.f32 1.0, %v1328
    %1353 = vrot.lane.b32.xlu0 %v1347, 96
    %v1354 = vpop.permute.xlu0 %1353
    %1355 = vrot.lane.b32.xlu0 %v1348, 96
    %v1356 = vpop.permute.xlu0 %1355
    %v1359 = vmul.f32 %v1349, %v1354
    %v1360 = vmul.f32 %v1350, %v1356
    %v1362 = vrot.slane %v1228, 1
    %1363 = vrot.lane.b32.xlu0 %v1228, 32
    %v1364 = vpop.permute.xlu0 %1363
    %1365 = vrot.lane.b32.xlu0 %v1362, 32
    %v1366 = vpop.permute.xlu0 %1365
    %v1369 = vmul.f32 %v1326, %v1364
    %v1370 = vmul.f32 %v1328, %v1366
    %v1371 = vadd.f32 %v1359, %v1369
    %v1372 = vadd.f32 %v1360, %v1370
    %s1373 = sadd.s32 %s26, 7
    %v1374 = vstv %s1373
    %vm1375 = vcmp.lt.s32.totalorder %v1374, %v55
    %v1376 = vsel %vm1375, 1, 0
    %1377 = vset.pattern.permute.xlu0 0
    %1378 = vperm.xlu0 %1377, %v1376
    %v1379 = vpop.permute.xlu0 %1378
    %vm1380 = vcmp.eq.s32.totalorder %v1379, 1
    %v1383 = vrot.slane %v1372, 7
    %v1384 = vsel %vm262, %v1383, %v1371
    %1385 = vrot.lane.b32.xlu0 %v1384, 96
    %v1386 = vpop.permute.xlu0 %1385
    %v1388 = vsel %vm1380, %v1386, %v1228
    %v1389 = vld [vmem:[%s1 + $0x7] sm:$0x1]
    %v1390 = vld [vmem:[%s1 + $0xf] sm:$0x1]
    %v1393 = vrot.slane %v1390, 7
    %v1394 = vsel %vm262, %v1393, %v1389
    %v1396 = vadd.f32 %v1388, %v1394
    %v1397 = vsel %vm1380, %v1396, 0.0
    %v1400 = vunpack.c.l.s4 1966171168
    %v1401 = vunpack.c.0.s8 %v1400
    %v1402 = vlaneseq
    %v1403 = vshrl.u32 %v1402, 7
    %v1404 = vsub.s32 %v1401, %v1403
    %v1405 = vrot.slane %v1397, %v1404
    %v1406 = vcombine.high %v1405, %v1405
    %v1408 = vunpack.c.l.s4 1966171168
    %v1409 = vunpack.c.0.s8 %v1408
    %v1410 = vlaneseq
    %v1411 = vshrl.u32 %v1410, 7
    %v1412 = vsub.s32 %v1409, %v1411
    %v1413 = vrot.slane %v1405, %v1412
    %v1415 = vunpack.c.l.s4 1966171168
    %v1416 = vunpack.c.0.s8 %v1415
    %v1417 = vlaneseq
    %v1418 = vshrl.u32 %v1417, 7
    %v1419 = vsub.s32 %v1416, %v1418
    %v1420 = vrot.slane %v1406, %v1419
    %1423 = vst.msk [vmem:[%s7 + $0x7] sm:$0x1] %vm302, %v1413
    %1424 = vst.msk [vmem:[%s7 + $0xf] sm:$0x1] %vm302, %v1420
    %vm1425 = vcmask 254976
    %1426 = vst.msk [vmem:[#allocation3] sm:$0x3] %vm1425, %v1388
  $region37: #{rnn_apc_forward.5} parent=0 // pred_fallthru
    _
  // Predicated region
  $region38: #{rnn_apc_forward.5} parent=0 // pred_check
    _
  $region39: #{rnn_apc_forward.5} parent=0 // pred_check_branch
    %1428 = sbr.rel (0) target = $region41
  $region40: #{rnn_apc_forward.5} parent=0 // pred_region
    _
  $region41: #{rnn_apc_forward.5} parent=0 // pred_fallthru
    _
  // Predicated region
  $region42: #{rnn_apc_forward.5} parent=0 // pred_check
    _
  $region43: #{rnn_apc_forward.5} parent=0 // pred_check_branch
    %1430 = sbr.rel (0) target = $region45
  $region44: #{rnn_apc_forward.5} parent=0 // pred_region
    _
  $region45: #{rnn_apc_forward.5} parent=0 // pred_fallthru
    _

</llo_original>
